<compile_context>
chip_gen: v5e
topology: v5e:2x2
jax: 0.10.0
libtpu: 0.0.40
codegen_flags: <defaults>
</compile_context>

<pallas_src>
import functools

import jax
import jax.numpy as jnp
from jax import lax
from jax.experimental import pallas as pl
from jax.experimental.pallas import tpu as pltpu


def _make_dwconv_kernel(Ws, T, C, n_strips, has_buf):
    """Kernel for one strip of one pyramid level.

    x block   : (1, T, C)   T = strip_rows*Ws tokens, row-major over (h, w); lanes = channels
    halo blocks (only if n_strips > 1): (1, Ws, C) map row just above / below the strip
    w block   : (10, C)     rows 0..8 = 3x3 taps (row-major di,dj), row 9 = bias
    wcol      : (T, 1) int32  w coordinate of each token (for W-border masks)
    o block   : (1, T, C)
    """
    has_halo = n_strips > 1

    def kernel(*refs):
        i = 0
        x_ref = refs[i]; i += 1
        if has_halo:
            top_ref = refs[i]
            bot_ref = refs[i + 1]
            i += 2
        w_ref = refs[i]; i += 1
        wcol_ref = refs[i]; i += 1
        if has_buf:
            i += 1                      # aliased (B, N, C) HBM ref, never touched here
        o_ref = refs[i]

        x = x_ref[0]                    # (T, C), compute stays in the activation dtype
        w = w_ref[...]                  # (10, C)
        dt = x.dtype

        wcol = wcol_ref[...]                            # (T, 1) int32
        mask_l = (wcol > 0).astype(dt)                  # left neighbour exists
        mask_r = (wcol < Ws - 1).astype(dt)             # right neighbour exists
        tok = lax.broadcasted_iota(jnp.int32, (T, 1), 0)
        not_first_row = (tok >= Ws).astype(dt)          # row above exists inside this strip
        not_last_row = (tok < T - Ws).astype(dt)        # row below exists inside this strip

        # +-1 pixel in W == +-1 token: sublane rolls (XLU); the wrap at each row boundary is
        # zeroed by mask_l / mask_r.
        xl = pltpu.roll(x, 1, axis=0) * mask_l          # x[h, w-1]
        xr = pltpu.roll(x, T - 1, axis=0) * mask_r      # x[h, w+1]

        # centre weight row + bias
        acc = xl * w[3:4] + x * w[4:5] + xr * w[5:6] + w[9:10]
        # row-above taps, evaluated at the source row, shifted down by one map row (Ws tokens)
        up = xl * w[0:1] + x * w[1:2] + xr * w[2:3]
        acc = acc + pltpu.roll(up, Ws, axis=0) * not_first_row
        # row-below taps, shifted up by one map row
        dn = xl * w[6:7] + x * w[7:8] + xr * w[8:9]
        acc = acc + pltpu.roll(dn, T - Ws, axis=0) * not_last_row

        o_ref[0] = acc.astype(o_ref.dtype)

        if has_halo:
            s = pl.program_id(1)
            hml = mask_l[0:Ws, :]
            hmr = mask_r[0:Ws, :]
            # map row just above the strip -> contributes to the strip's first map row
            ht = top_ref[0]                             # (Ws, C)
            top = (pltpu.roll(ht, 1, axis=0) * hml * w[0:1]
                   + ht * w[1:2]
                   + pltpu.roll(ht, Ws - 1, axis=0) * hmr * w[2:3])
            top = top * (s > 0).astype(dt)
            o_ref[0, 0:Ws, :] = o_ref[0, 0:Ws, :] + top.astype(o_ref.dtype)
            # map row just below the strip -> contributes to the strip's last map row
            hb = bot_ref[0]
            bot = (pltpu.roll(hb, 1, axis=0) * hml * w[6:7]
                   + hb * w[7:8]
                   + pltpu.roll(hb, Ws - 1, axis=0) * hmr * w[8:9])
            bot = bot * (s < n_strips - 1).astype(dt)
            o_ref[0, T - Ws:T, :] = o_ref[0, T - Ws:T, :] + bot.astype(o_ref.dtype)

    return kernel


def _pick_strip_rows(Hs, Ws, max_tokens):
    """Largest divisor of Hs whose strip (rows*Ws tokens) fits the token budget,
    preferring strips whose token count is a multiple of 8 (sublane-aligned blocks)."""
    cands = [d for d in range(1, Hs + 1) if Hs % d == 0 and d * Ws <= max_tokens]
    if not cands:
        return 1
    aligned = [d for d in cands if (d * Ws) % 8 == 0]
    return max(aligned) if aligned else max(cands)


def _dwconv_level(x, buf, w10, start, Hs, Ws, max_strip_tokens):
    """Depthwise-3x3 on the level whose Hs*Ws tokens begin at `start`, written in place into
    token range [start, start+Hs*Ws) of a (B, N, C) buffer (chained via aliasing)."""
    B, N, C = x.shape
    strip_rows = _pick_strip_rows(Hs, Ws, max_strip_tokens)
    n_strips = Hs // strip_rows
    T = strip_rows * Ws
    assert start % T == 0 and start % Ws == 0
    blk0 = start // T            # level offset in strip blocks
    row0 = start // Ws           # level offset in map rows
    has_buf = buf is not None
    has_halo = n_strips > 1

    wcol = (jnp.arange(T, dtype=jnp.int32) % Ws).reshape(T, 1)

    in_specs = [pl.BlockSpec((1, T, C), lambda b, s: (b, blk0 + s, 0))]
    operands = [x]
    if has_halo:
        in_specs.append(pl.BlockSpec(
            (1, Ws, C),
            lambda b, s: (b, row0 + jnp.maximum(s * strip_rows - 1, 0), 0)))
        in_specs.append(pl.BlockSpec(
            (1, Ws, C),
            lambda b, s: (b, row0 + jnp.minimum((s + 1) * strip_rows, Hs - 1), 0)))
        operands += [x, x]
    in_specs.append(pl.BlockSpec((10, C), lambda b, s: (0, 0)))
    operands.append(w10)
    in_specs.append(pl.BlockSpec((T, 1), lambda b, s: (0, 0)))
    operands.append(wcol)
    io_alias = {}
    if has_buf:
        in_specs.append(pl.BlockSpec(memory_space=pl.ANY))
        operands.append(buf)
        io_alias = {len(operands) - 1: 0}

    itemsize = jnp.dtype(x.dtype).itemsize
    elems = B * Hs * Ws * C
    cost = pl.CostEstimate(flops=20 * elems, transcendentals=0,
                           bytes_accessed=2 * elems * itemsize)

    return pl.pallas_call(
        _make_dwconv_kernel(Ws, T, C, n_strips, has_buf),
        out_shape=jax.ShapeDtypeStruct((B, N, C), x.dtype),
        grid_spec=pltpu.PrefetchScalarGridSpec(
            num_scalar_prefetch=0,
            grid=(B, n_strips),
            in_specs=in_specs,
            out_specs=pl.BlockSpec((1, T, C), lambda b, s: (b, blk0 + s, 0)),
        ),
        input_output_aliases=io_alias,
        compiler_params=pltpu.CompilerParams(
            dimension_semantics=("parallel", "parallel"),
            vmem_limit_bytes=32 * 1024 * 1024),
        cost_estimate=cost,
    )(*operands)


def dwconv_forward(x, weight, bias, *, H, W, max_strip_tokens=2048):
    """Mirror of DWConv.forward.  x: (B, N, C) with N = 21*(H*W//4);
    weight: (3, 3, C) (PyTorch's (C,1,3,3) Conv2d weight transposed); bias: (C,)."""
    B, N, C = x.shape
    assert N % 21 == 0 and H % 2 == 0 and W % 2 == 0, "DWConv expects N=21n, even H, W"
    n = N // 21
    assert n == (H * W) // 4, "token count must match the (2H,2W)/(H,W)/(H/2,W/2) pyramid"

    w10 = jnp.concatenate([weight.reshape(9, C), bias.reshape(1, C)], axis=0).astype(x.dtype)

    # (token offset, Hs, Ws) for the three pyramid levels; all write into one buffer.
    levels = ((0, 2 * H, 2 * W), (16 * n, H, W), (20 * n, H // 2, W // 2))
    out = None
    for start, Hs, Ws in levels:
        out = _dwconv_level(x, out, w10, start, Hs, Ws, max_strip_tokens)
    return out


def _dwconv2d_ref(x_nhwc, weight, bias):
    """Pure-JAX depthwise-conv reference for correctness checking."""
    B, Hh, Ww, C = x_nhwc.shape
    k = weight.reshape(3, 3, 1, C)                   # HWIO, groups = C
    y = lax.conv_general_dilated(
        x_nhwc, k, window_strides=(1, 1), padding=((1, 1), (1, 1)),
        dimension_numbers=("NHWC", "HWIO", "NHWC"), feature_group_count=C)
    return y + bias.reshape(1, 1, 1, C)


if __name__ == "__main__":
    key = jax.random.PRNGKey(0)
    k_x, k_w, k_b = jax.random.split(key, 3)

    B, C = 2, 128
    H = W = 8
    n = (H * W) // 4          # 16
    N = 21 * n                # 336

    x = jax.random.normal(k_x, (B, N, C), dtype=jnp.float32)
    # nn.Conv2d(dim, dim, 3, groups=dim) weight is (C, 1, 3, 3); stored here as (3, 3, C).
    weight = jax.random.normal(k_w, (3, 3, C), dtype=jnp.float32) * 0.1
    bias = jax.random.normal(k_b, (C,), dtype=jnp.float32) * 0.1

    ref = jnp.concatenate(
        [_dwconv2d_ref(x[:, :16 * n].reshape(B, 2 * H, 2 * W, C), weight, bias).reshape(B, 16 * n, C),
         _dwconv2d_ref(x[:, 16 * n:20 * n].reshape(B, H, W, C), weight, bias).reshape(B, 4 * n, C),
         _dwconv2d_ref(x[:, 20 * n:].reshape(B, H // 2, W // 2, C), weight, bias).reshape(B, n, C)],
        axis=1)

    # default strips (single strip per small map)
    fwd = jax.jit(functools.partial(dwconv_forward, H=H, W=W))
    out = jax.block_until_ready(fwd(x, weight, bias))
    assert out.shape == (B, N, C), out.shape
    assert jnp.allclose(out, ref, atol=2e-5, rtol=2e-5), float(jnp.max(jnp.abs(out - ref)))

    # tiny strips to exercise the multi-strip + halo-row path
    fwd_small = jax.jit(functools.partial(dwconv_forward, H=H, W=W, max_strip_tokens=32))
    out2 = jax.block_until_ready(fwd_small(x, weight, bias))
    assert jnp.allclose(out2, ref, atol=2e-5, rtol=2e-5), float(jnp.max(jnp.abs(out2 - ref)))

    print("KERNEL_OK")
</pallas_src>

<mosaic_0001>
module attributes {stable_mosaic.version = 11 : i64} {
  func.func @kernel(%arg0: i32, %arg1: i32, %arg2: memref<1x256x128xf32, #tpu.memory_space<vmem>>, %arg3: memref<10x128xf32, #tpu.memory_space<vmem>>, %arg4: memref<256x1xi32, #tpu.memory_space<vmem>>, %arg5: memref<1x256x128xf32, #tpu.memory_space<vmem>>) attributes {dimension_semantics = [#tpu.dimension_semantics<parallel>, #tpu.dimension_semantics<parallel>], iteration_bounds = array<i64: 2, 1>, scalar_prefetch = 0 : i64, scratch_operands = 0 : i64, tpu.core_type = #tpu.core_type<tc>, window_params = [{transform_indices = @transform_0, window_bounds = array<i64: 1, 256, 128>}, {pipeline_mode = #tpu.pipeline_mode<synchronous>, transform_indices = @transform_1, window_bounds = array<i64: 10, 128>}, {pipeline_mode = #tpu.pipeline_mode<synchronous>, transform_indices = @transform_2, window_bounds = array<i64: 256, 1>}, {transform_indices = @transform_3, window_bounds = array<i64: 1, 256, 128>}]} {
    %c0 = arith.constant 0 : index
    %c0_0 = arith.constant 0 : index
    %c0_1 = arith.constant 0 : index
    %0 = vector.load %arg2[%c0, %c0_0, %c0_1] : memref<1x256x128xf32, #tpu.memory_space<vmem>>, vector<1x256x128xf32>
    %1 = vector.shape_cast %0 : vector<1x256x128xf32> to vector<256x128xf32>
    %c0_2 = arith.constant 0 : index
    %c0_3 = arith.constant 0 : index
    %2 = vector.load %arg3[%c0_2, %c0_3] : memref<10x128xf32, #tpu.memory_space<vmem>>, vector<10x128xf32>
    %c0_4 = arith.constant 0 : index
    %c0_5 = arith.constant 0 : index
    %3 = vector.load %arg4[%c0_4, %c0_5] : memref<256x1xi32, #tpu.memory_space<vmem>>, vector<256x1xi32>
    %c0_i32 = arith.constant 0 : i32
    %4 = vector.broadcast %c0_i32 : i32 to vector<256x1xi32>
    %5 = arith.cmpi sgt, %3, %4 : vector<256x1xi32>
    %6 = arith.extui %5 : vector<256x1xi1> to vector<256x1xi32>
    %7 = arith.sitofp %6 : vector<256x1xi32> to vector<256x1xf32>
    %c15_i32 = arith.constant 15 : i32
    %8 = vector.broadcast %c15_i32 : i32 to vector<256x1xi32>
    %9 = arith.cmpi slt, %3, %8 : vector<256x1xi32>
    %10 = arith.extui %9 : vector<256x1xi1> to vector<256x1xi32>
    %11 = arith.sitofp %10 : vector<256x1xi32> to vector<256x1xf32>
    %12 = tpu.iota {dimensions = array<i32: 0>} : vector<256x1xi32>
    %c16_i32 = arith.constant 16 : i32
    %13 = vector.broadcast %c16_i32 : i32 to vector<256x1xi32>
    %14 = arith.cmpi sge, %12, %13 : vector<256x1xi32>
    %15 = arith.extui %14 : vector<256x1xi1> to vector<256x1xi32>
    %16 = arith.sitofp %15 : vector<256x1xi32> to vector<256x1xf32>
    %c240_i32 = arith.constant 240 : i32
    %17 = vector.broadcast %c240_i32 : i32 to vector<256x1xi32>
    %18 = arith.cmpi slt, %12, %17 : vector<256x1xi32>
    %19 = arith.extui %18 : vector<256x1xi1> to vector<256x1xi32>
    %20 = arith.sitofp %19 : vector<256x1xi32> to vector<256x1xf32>
    %c1_i32 = arith.constant 1 : i32
    %21 = tpu.dynamic_rotate %1 by %c1_i32 dim 0 : vector<256x128xf32>, i32 -> vector<256x128xf32>
    %22 = vector.broadcast %7 : vector<256x1xf32> to vector<256x128xf32>
    %23 = arith.mulf %21, %22 : vector<256x128xf32>
    %c255_i32 = arith.constant 255 : i32
    %24 = tpu.dynamic_rotate %1 by %c255_i32 dim 0 : vector<256x128xf32>, i32 -> vector<256x128xf32>
    %25 = vector.broadcast %11 : vector<256x1xf32> to vector<256x128xf32>
    %26 = arith.mulf %24, %25 : vector<256x128xf32>
    %27 = vector.extract_strided_slice %2 {offsets = [3, 0], sizes = [1, 128], strides = [1, 1]} : vector<10x128xf32> to vector<1x128xf32>
    %28 = vector.broadcast %27 : vector<1x128xf32> to vector<256x128xf32>
    %29 = arith.mulf %23, %28 : vector<256x128xf32>
    %30 = vector.extract_strided_slice %2 {offsets = [4, 0], sizes = [1, 128], strides = [1, 1]} : vector<10x128xf32> to vector<1x128xf32>
    %31 = vector.broadcast %30 : vector<1x128xf32> to vector<256x128xf32>
    %32 = arith.mulf %1, %31 : vector<256x128xf32>
    %33 = arith.addf %29, %32 : vector<256x128xf32>
    %34 = vector.extract_strided_slice %2 {offsets = [5, 0], sizes = [1, 128], strides = [1, 1]} : vector<10x128xf32> to vector<1x128xf32>
    %35 = vector.broadcast %34 : vector<1x128xf32> to vector<256x128xf32>
    %36 = arith.mulf %26, %35 : vector<256x128xf32>
    %37 = arith.addf %33, %36 : vector<256x128xf32>
    %38 = vector.extract_strided_slice %2 {offsets = [9, 0], sizes = [1, 128], strides = [1, 1]} : vector<10x128xf32> to vector<1x128xf32>
    %39 = vector.broadcast %38 : vector<1x128xf32> to vector<256x128xf32>
    %40 = arith.addf %37, %39 : vector<256x128xf32>
    %41 = vector.extract_strided_slice %2 {offsets = [0, 0], sizes = [1, 128], strides = [1, 1]} : vector<10x128xf32> to vector<1x128xf32>
    %42 = vector.broadcast %41 : vector<1x128xf32> to vector<256x128xf32>
    %43 = arith.mulf %23, %42 : vector<256x128xf32>
    %44 = vector.extract_strided_slice %2 {offsets = [1, 0], sizes = [1, 128], strides = [1, 1]} : vector<10x128xf32> to vector<1x128xf32>
    %45 = vector.broadcast %44 : vector<1x128xf32> to vector<256x128xf32>
    %46 = arith.mulf %1, %45 : vector<256x128xf32>
    %47 = arith.addf %43, %46 : vector<256x128xf32>
    %48 = vector.extract_strided_slice %2 {offsets = [2, 0], sizes = [1, 128], strides = [1, 1]} : vector<10x128xf32> to vector<1x128xf32>
    %49 = vector.broadcast %48 : vector<1x128xf32> to vector<256x128xf32>
    %50 = arith.mulf %26, %49 : vector<256x128xf32>
    %51 = arith.addf %47, %50 : vector<256x128xf32>
    %c16_i32_6 = arith.constant 16 : i32
    %52 = tpu.dynamic_rotate %51 by %c16_i32_6 dim 0 : vector<256x128xf32>, i32 -> vector<256x128xf32>
    %53 = vector.broadcast %16 : vector<256x1xf32> to vector<256x128xf32>
    %54 = arith.mulf %52, %53 : vector<256x128xf32>
    %55 = arith.addf %40, %54 : vector<256x128xf32>
    %56 = vector.extract_strided_slice %2 {offsets = [6, 0], sizes = [1, 128], strides = [1, 1]} : vector<10x128xf32> to vector<1x128xf32>
    %57 = vector.broadcast %56 : vector<1x128xf32> to vector<256x128xf32>
    %58 = arith.mulf %23, %57 : vector<256x128xf32>
    %59 = vector.extract_strided_slice %2 {offsets = [7, 0], sizes = [1, 128], strides = [1, 1]} : vector<10x128xf32> to vector<1x128xf32>
    %60 = vector.broadcast %59 : vector<1x128xf32> to vector<256x128xf32>
    %61 = arith.mulf %1, %60 : vector<256x128xf32>
    %62 = arith.addf %58, %61 : vector<256x128xf32>
    %63 = vector.extract_strided_slice %2 {offsets = [8, 0], sizes = [1, 128], strides = [1, 1]} : vector<10x128xf32> to vector<1x128xf32>
    %64 = vector.broadcast %63 : vector<1x128xf32> to vector<256x128xf32>
    %65 = arith.mulf %26, %64 : vector<256x128xf32>
    %66 = arith.addf %62, %65 : vector<256x128xf32>
    %c240_i32_7 = arith.constant 240 : i32
    %67 = tpu.dynamic_rotate %66 by %c240_i32_7 dim 0 : vector<256x128xf32>, i32 -> vector<256x128xf32>
    %68 = vector.broadcast %20 : vector<256x1xf32> to vector<256x128xf32>
    %69 = arith.mulf %67, %68 : vector<256x128xf32>
    %70 = arith.addf %55, %69 : vector<256x128xf32>
    %c0_8 = arith.constant 0 : index
    %c0_9 = arith.constant 0 : index
    %c0_10 = arith.constant 0 : index
    %71 = vector.load %arg5[%c0_8, %c0_9, %c0_10] : memref<1x256x128xf32, #tpu.memory_space<vmem>>, vector<1x256x128xf32>
    %72 = vector.shape_cast %71 : vector<1x256x128xf32> to vector<256x128xf32>
    %73 = vector.shape_cast %70 : vector<256x128xf32> to vector<1x256x128xf32>
    tpu.vector_store %arg5[%c0_8, %c0_9, %c0_10], %73 {strides = array<i32>} : memref<1x256x128xf32, #tpu.memory_space<vmem>>, vector<1x256x128xf32>,
    return
  }
  func.func @transform_0(%arg0: i32, %arg1: i32) -> (i32, i32, i32) {
    %c0_i32 = arith.constant 0 : i32
    %0 = arith.addi %c0_i32, %arg1 : i32
    %c0_i32_0 = arith.constant 0 : i32
    %c0_i32_1 = arith.constant 0 : i32
    return %arg0, %0, %c0_i32_0 : i32, i32, i32
  }
  func.func @transform_1(%arg0: i32, %arg1: i32) -> (i32, i32) {
    %c0_i32 = arith.constant 0 : i32
    %c0_i32_0 = arith.constant 0 : i32
    %c0_i32_1 = arith.constant 0 : i32
    return %c0_i32, %c0_i32_0 : i32, i32
  }
  func.func @transform_2(%arg0: i32, %arg1: i32) -> (i32, i32) {
    %c0_i32 = arith.constant 0 : i32
    %c0_i32_0 = arith.constant 0 : i32
    %c0_i32_1 = arith.constant 0 : i32
    return %c0_i32, %c0_i32_0 : i32, i32
  }
  func.func @transform_3(%arg0: i32, %arg1: i32) -> (i32, i32, i32) {
    %c0_i32 = arith.constant 0 : i32
    %0 = arith.addi %c0_i32, %arg1 : i32
    %c0_i32_0 = arith.constant 0 : i32
    %c0_i32_1 = arith.constant 0 : i32
    return %arg0, %0, %c0_i32_0 : i32, i32, i32
  }
}

module attributes {stable_mosaic.version = 11 : i64} {
  func.func @kernel(%arg0: i32, %arg1: i32, %arg2: memref<1x16x128xf32, #tpu.memory_space<vmem>>, %arg3: memref<10x128xf32, #tpu.memory_space<vmem>>, %arg4: memref<16x1xi32, #tpu.memory_space<vmem>>, %arg5: memref<2x336x128xf32, #tpu.memory_space<any>>, %arg6: memref<1x16x128xf32, #tpu.memory_space<vmem>>) attributes {dimension_semantics = [#tpu.dimension_semantics<parallel>, #tpu.dimension_semantics<parallel>], iteration_bounds = array<i64: 2, 1>, scalar_prefetch = 0 : i64, scratch_operands = 0 : i64, tpu.core_type = #tpu.core_type<tc>, window_params = [{transform_indices = @transform_0, window_bounds = array<i64: 1, 16, 128>}, {pipeline_mode = #tpu.pipeline_mode<synchronous>, transform_indices = @transform_1, window_bounds = array<i64: 10, 128>}, {pipeline_mode = #tpu.pipeline_mode<synchronous>, transform_indices = @transform_2, window_bounds = array<i64: 16, 1>}, {}, {transform_indices = @transform_4, window_bounds = array<i64: 1, 16, 128>}]} {
    %c0 = arith.constant 0 : index
    %c0_0 = arith.constant 0 : index
    %c0_1 = arith.constant 0 : index
    %0 = vector.load %arg2[%c0, %c0_0, %c0_1] : memref<1x16x128xf32, #tpu.memory_space<vmem>>, vector<1x16x128xf32>
    %1 = vector.shape_cast %0 : vector<1x16x128xf32> to vector<16x128xf32>
    %c0_2 = arith.constant 0 : index
    %c0_3 = arith.constant 0 : index
    %2 = vector.load %arg3[%c0_2, %c0_3] : memref<10x128xf32, #tpu.memory_space<vmem>>, vector<10x128xf32>
    %c0_4 = arith.constant 0 : index
    %c0_5 = arith.constant 0 : index
    %3 = vector.load %arg4[%c0_4, %c0_5] : memref<16x1xi32, #tpu.memory_space<vmem>>, vector<16x1xi32>
    %c0_i32 = arith.constant 0 : i32
    %4 = vector.broadcast %c0_i32 : i32 to vector<16x1xi32>
    %5 = arith.cmpi sgt, %3, %4 : vector<16x1xi32>
    %6 = arith.extui %5 : vector<16x1xi1> to vector<16x1xi32>
    %7 = arith.sitofp %6 : vector<16x1xi32> to vector<16x1xf32>
    %c3_i32 = arith.constant 3 : i32
    %8 = vector.broadcast %c3_i32 : i32 to vector<16x1xi32>
    %9 = arith.cmpi slt, %3, %8 : vector<16x1xi32>
    %10 = arith.extui %9 : vector<16x1xi1> to vector<16x1xi32>
    %11 = arith.sitofp %10 : vector<16x1xi32> to vector<16x1xf32>
    %12 = tpu.iota {dimensions = array<i32: 0>} : vector<16x1xi32>
    %c4_i32 = arith.constant 4 : i32
    %13 = vector.broadcast %c4_i32 : i32 to vector<16x1xi32>
    %14 = arith.cmpi sge, %12, %13 : vector<16x1xi32>
    %15 = arith.extui %14 : vector<16x1xi1> to vector<16x1xi32>
    %16 = arith.sitofp %15 : vector<16x1xi32> to vector<16x1xf32>
    %c12_i32 = arith.constant 12 : i32
    %17 = vector.broadcast %c12_i32 : i32 to vector<16x1xi32>
    %18 = arith.cmpi slt, %12, %17 : vector<16x1xi32>
    %19 = arith.extui %18 : vector<16x1xi1> to vector<16x1xi32>
    %20 = arith.sitofp %19 : vector<16x1xi32> to vector<16x1xf32>
    %c1_i32 = arith.constant 1 : i32
    %21 = tpu.dynamic_rotate %1 by %c1_i32 dim 0 : vector<16x128xf32>, i32 -> vector<16x128xf32>
    %22 = vector.broadcast %7 : vector<16x1xf32> to vector<16x128xf32>
    %23 = arith.mulf %21, %22 : vector<16x128xf32>
    %c15_i32 = arith.constant 15 : i32
    %24 = tpu.dynamic_rotate %1 by %c15_i32 dim 0 : vector<16x128xf32>, i32 -> vector<16x128xf32>
    %25 = vector.broadcast %11 : vector<16x1xf32> to vector<16x128xf32>
    %26 = arith.mulf %24, %25 : vector<16x128xf32>
    %27 = vector.extract_strided_slice %2 {offsets = [3, 0], sizes = [1, 128], strides = [1, 1]} : vector<10x128xf32> to vector<1x128xf32>
    %28 = vector.broadcast %27 : vector<1x128xf32> to vector<16x128xf32>
    %29 = arith.mulf %23, %28 : vector<16x128xf32>
    %30 = vector.extract_strided_slice %2 {offsets = [4, 0], sizes = [1, 128], strides = [1, 1]} : vector<10x128xf32> to vector<1x128xf32>
    %31 = vector.broadcast %30 : vector<1x128xf32> to vector<16x128xf32>
    %32 = arith.mulf %1, %31 : vector<16x128xf32>
    %33 = arith.addf %29, %32 : vector<16x128xf32>
    %34 = vector.extract_strided_slice %2 {offsets = [5, 0], sizes = [1, 128], strides = [1, 1]} : vector<10x128xf32> to vector<1x128xf32>
    %35 = vector.broadcast %34 : vector<1x128xf32> to vector<16x128xf32>
    %36 = arith.mulf %26, %35 : vector<16x128xf32>
    %37 = arith.addf %33, %36 : vector<16x128xf32>
    %38 = vector.extract_strided_slice %2 {offsets = [9, 0], sizes = [1, 128], strides = [1, 1]} : vector<10x128xf32> to vector<1x128xf32>
    %39 = vector.broadcast %38 : vector<1x128xf32> to vector<16x128xf32>
    %40 = arith.addf %37, %39 : vector<16x128xf32>
    %41 = vector.extract_strided_slice %2 {offsets = [0, 0], sizes = [1, 128], strides = [1, 1]} : vector<10x128xf32> to vector<1x128xf32>
    %42 = vector.broadcast %41 : vector<1x128xf32> to vector<16x128xf32>
    %43 = arith.mulf %23, %42 : vector<16x128xf32>
    %44 = vector.extract_strided_slice %2 {offsets = [1, 0], sizes = [1, 128], strides = [1, 1]} : vector<10x128xf32> to vector<1x128xf32>
    %45 = vector.broadcast %44 : vector<1x128xf32> to vector<16x128xf32>
    %46 = arith.mulf %1, %45 : vector<16x128xf32>
    %47 = arith.addf %43, %46 : vector<16x128xf32>
    %48 = vector.extract_strided_slice %2 {offsets = [2, 0], sizes = [1, 128], strides = [1, 1]} : vector<10x128xf32> to vector<1x128xf32>
    %49 = vector.broadcast %48 : vector<1x128xf32> to vector<16x128xf32>
    %50 = arith.mulf %26, %49 : vector<16x128xf32>
    %51 = arith.addf %47, %50 : vector<16x128xf32>
    %c4_i32_6 = arith.constant 4 : i32
    %52 = tpu.dynamic_rotate %51 by %c4_i32_6 dim 0 : vector<16x128xf32>, i32 -> vector<16x128xf32>
    %53 = vector.broadcast %16 : vector<16x1xf32> to vector<16x128xf32>
    %54 = arith.mulf %52, %53 : vector<16x128xf32>
    %55 = arith.addf %40, %54 : vector<16x128xf32>
    %56 = vector.extract_strided_slice %2 {offsets = [6, 0], sizes = [1, 128], strides = [1, 1]} : vector<10x128xf32> to vector<1x128xf32>
    %57 = vector.broadcast %56 : vector<1x128xf32> to vector<16x128xf32>
    %58 = arith.mulf %23, %57 : vector<16x128xf32>
    %59 = vector.extract_strided_slice %2 {offsets = [7, 0], sizes = [1, 128], strides = [1, 1]} : vector<10x128xf32> to vector<1x128xf32>
    %60 = vector.broadcast %59 : vector<1x128xf32> to vector<16x128xf32>
    %61 = arith.mulf %1, %60 : vector<16x128xf32>
    %62 = arith.addf %58, %61 : vector<16x128xf32>
    %63 = vector.extract_strided_slice %2 {offsets = [8, 0], sizes = [1, 128], strides = [1, 1]} : vector<10x128xf32> to vector<1x128xf32>
    %64 = vector.broadcast %63 : vector<1x128xf32> to vector<16x128xf32>
    %65 = arith.mulf %26, %64 : vector<16x128xf32>
    %66 = arith.addf %62, %65 : vector<16x128xf32>
    %c12_i32_7 = arith.constant 12 : i32
    %67 = tpu.dynamic_rotate %66 by %c12_i32_7 dim 0 : vector<16x128xf32>, i32 -> vector<16x128xf32>
    %68 = vector.broadcast %20 : vector<16x1xf32> to vector<16x128xf32>
    %69 = arith.mulf %67, %68 : vector<16x128xf32>
    %70 = arith.addf %55, %69 : vector<16x128xf32>
    %c0_8 = arith.constant 0 : index
    %c0_9 = arith.constant 0 : index
    %c0_10 = arith.constant 0 : index
    %71 = vector.load %arg6[%c0_8, %c0_9, %c0_10] : memref<1x16x128xf32, #tpu.memory_space<vmem>>, vector<1x16x128xf32>
    %72 = vector.shape_cast %71 : vector<1x16x128xf32> to vector<16x128xf32>
    %73 = vector.shape_cast %70 : vector<16x128xf32> to vector<1x16x128xf32>
    tpu.vector_store %arg6[%c0_8, %c0_9, %c0_10], %73 {strides = array<i32>} : memref<1x16x128xf32, #tpu.memory_space<vmem>>, vector<1x16x128xf32>,
    return
  }
  func.func @transform_0(%arg0: i32, %arg1: i32) -> (i32, i32, i32) {
    %c20_i32 = arith.constant 20 : i32
    %0 = arith.addi %c20_i32, %arg1 : i32
    %c0_i32 = arith.constant 0 : i32
    %c0_i32_0 = arith.constant 0 : i32
    return %arg0, %0, %c0_i32 : i32, i32, i32
  }
  func.func @transform_1(%arg0: i32, %arg1: i32) -> (i32, i32) {
    %c0_i32 = arith.constant 0 : i32
    %c0_i32_0 = arith.constant 0 : i32
    %c0_i32_1 = arith.constant 0 : i32
    return %c0_i32, %c0_i32_0 : i32, i32
  }
  func.func @transform_2(%arg0: i32, %arg1: i32) -> (i32, i32) {
    %c0_i32 = arith.constant 0 : i32
    %c0_i32_0 = arith.constant 0 : i32
    %c0_i32_1 = arith.constant 0 : i32
    return %c0_i32, %c0_i32_0 : i32, i32
  }
  func.func @transform_4(%arg0: i32, %arg1: i32) -> (i32, i32, i32) {
    %c20_i32 = arith.constant 20 : i32
    %0 = arith.addi %c20_i32, %arg1 : i32
    %c0_i32 = arith.constant 0 : i32
    %c0_i32_0 = arith.constant 0 : i32
    return %arg0, %0, %c0_i32 : i32, i32, i32
  }
}

module attributes {stable_mosaic.version = 11 : i64} {
  func.func @kernel(%arg0: i32, %arg1: i32, %arg2: memref<1x64x128xf32, #tpu.memory_space<vmem>>, %arg3: memref<10x128xf32, #tpu.memory_space<vmem>>, %arg4: memref<64x1xi32, #tpu.memory_space<vmem>>, %arg5: memref<2x336x128xf32, #tpu.memory_space<any>>, %arg6: memref<1x64x128xf32, #tpu.memory_space<vmem>>) attributes {dimension_semantics = [#tpu.dimension_semantics<parallel>, #tpu.dimension_semantics<parallel>], iteration_bounds = array<i64: 2, 1>, scalar_prefetch = 0 : i64, scratch_operands = 0 : i64, tpu.core_type = #tpu.core_type<tc>, window_params = [{transform_indices = @transform_0, window_bounds = array<i64: 1, 64, 128>}, {pipeline_mode = #tpu.pipeline_mode<synchronous>, transform_indices = @transform_1, window_bounds = array<i64: 10, 128>}, {pipeline_mode = #tpu.pipeline_mode<synchronous>, transform_indices = @transform_2, window_bounds = array<i64: 64, 1>}, {}, {transform_indices = @transform_4, window_bounds = array<i64: 1, 64, 128>}]} {
    %c0 = arith.constant 0 : index
    %c0_0 = arith.constant 0 : index
    %c0_1 = arith.constant 0 : index
    %0 = vector.load %arg2[%c0, %c0_0, %c0_1] : memref<1x64x128xf32, #tpu.memory_space<vmem>>, vector<1x64x128xf32>
    %1 = vector.shape_cast %0 : vector<1x64x128xf32> to vector<64x128xf32>
    %c0_2 = arith.constant 0 : index
    %c0_3 = arith.constant 0 : index
    %2 = vector.load %arg3[%c0_2, %c0_3] : memref<10x128xf32, #tpu.memory_space<vmem>>, vector<10x128xf32>
    %c0_4 = arith.constant 0 : index
    %c0_5 = arith.constant 0 : index
    %3 = vector.load %arg4[%c0_4, %c0_5] : memref<64x1xi32, #tpu.memory_space<vmem>>, vector<64x1xi32>
    %c0_i32 = arith.constant 0 : i32
    %4 = vector.broadcast %c0_i32 : i32 to vector<64x1xi32>
    %5 = arith.cmpi sgt, %3, %4 : vector<64x1xi32>
    %6 = arith.extui %5 : vector<64x1xi1> to vector<64x1xi32>
    %7 = arith.sitofp %6 : vector<64x1xi32> to vector<64x1xf32>
    %c7_i32 = arith.constant 7 : i32
    %8 = vector.broadcast %c7_i32 : i32 to vector<64x1xi32>
    %9 = arith.cmpi slt, %3, %8 : vector<64x1xi32>
    %10 = arith.extui %9 : vector<64x1xi1> to vector<64x1xi32>
    %11 = arith.sitofp %10 : vector<64x1xi32> to vector<64x1xf32>
    %12 = tpu.iota {dimensions = array<i32: 0>} : vector<64x1xi32>
    %c8_i32 = arith.constant 8 : i32
    %13 = vector.broadcast %c8_i32 : i32 to vector<64x1xi32>
    %14 = arith.cmpi sge, %12, %13 : vector<64x1xi32>
    %15 = arith.extui %14 : vector<64x1xi1> to vector<64x1xi32>
    %16 = arith.sitofp %15 : vector<64x1xi32> to vector<64x1xf32>
    %c56_i32 = arith.constant 56 : i32
    %17 = vector.broadcast %c56_i32 : i32 to vector<64x1xi32>
    %18 = arith.cmpi slt, %12, %17 : vector<64x1xi32>
    %19 = arith.extui %18 : vector<64x1xi1> to vector<64x1xi32>
    %20 = arith.sitofp %19 : vector<64x1xi32> to vector<64x1xf32>
    %c1_i32 = arith.constant 1 : i32
    %21 = tpu.dynamic_rotate %1 by %c1_i32 dim 0 : vector<64x128xf32>, i32 -> vector<64x128xf32>
    %22 = vector.broadcast %7 : vector<64x1xf32> to vector<64x128xf32>
    %23 = arith.mulf %21, %22 : vector<64x128xf32>
    %c63_i32 = arith.constant 63 : i32
    %24 = tpu.dynamic_rotate %1 by %c63_i32 dim 0 : vector<64x128xf32>, i32 -> vector<64x128xf32>
    %25 = vector.broadcast %11 : vector<64x1xf32> to vector<64x128xf32>
    %26 = arith.mulf %24, %25 : vector<64x128xf32>
    %27 = vector.extract_strided_slice %2 {offsets = [3, 0], sizes = [1, 128], strides = [1, 1]} : vector<10x128xf32> to vector<1x128xf32>
    %28 = vector.broadcast %27 : vector<1x128xf32> to vector<64x128xf32>
    %29 = arith.mulf %23, %28 : vector<64x128xf32>
    %30 = vector.extract_strided_slice %2 {offsets = [4, 0], sizes = [1, 128], strides = [1, 1]} : vector<10x128xf32> to vector<1x128xf32>
    %31 = vector.broadcast %30 : vector<1x128xf32> to vector<64x128xf32>
    %32 = arith.mulf %1, %31 : vector<64x128xf32>
    %33 = arith.addf %29, %32 : vector<64x128xf32>
    %34 = vector.extract_strided_slice %2 {offsets = [5, 0], sizes = [1, 128], strides = [1, 1]} : vector<10x128xf32> to vector<1x128xf32>
    %35 = vector.broadcast %34 : vector<1x128xf32> to vector<64x128xf32>
    %36 = arith.mulf %26, %35 : vector<64x128xf32>
    %37 = arith.addf %33, %36 : vector<64x128xf32>
    %38 = vector.extract_strided_slice %2 {offsets = [9, 0], sizes = [1, 128], strides = [1, 1]} : vector<10x128xf32> to vector<1x128xf32>
    %39 = vector.broadcast %38 : vector<1x128xf32> to vector<64x128xf32>
    %40 = arith.addf %37, %39 : vector<64x128xf32>
    %41 = vector.extract_strided_slice %2 {offsets = [0, 0], sizes = [1, 128], strides = [1, 1]} : vector<10x128xf32> to vector<1x128xf32>
    %42 = vector.broadcast %41 : vector<1x128xf32> to vector<64x128xf32>
    %43 = arith.mulf %23, %42 : vector<64x128xf32>
    %44 = vector.extract_strided_slice %2 {offsets = [1, 0], sizes = [1, 128], strides = [1, 1]} : vector<10x128xf32> to vector<1x128xf32>
    %45 = vector.broadcast %44 : vector<1x128xf32> to vector<64x128xf32>
    %46 = arith.mulf %1, %45 : vector<64x128xf32>
    %47 = arith.addf %43, %46 : vector<64x128xf32>
    %48 = vector.extract_strided_slice %2 {offsets = [2, 0], sizes = [1, 128], strides = [1, 1]} : vector<10x128xf32> to vector<1x128xf32>
    %49 = vector.broadcast %48 : vector<1x128xf32> to vector<64x128xf32>
    %50 = arith.mulf %26, %49 : vector<64x128xf32>
    %51 = arith.addf %47, %50 : vector<64x128xf32>
    %c8_i32_6 = arith.constant 8 : i32
    %52 = tpu.dynamic_rotate %51 by %c8_i32_6 dim 0 : vector<64x128xf32>, i32 -> vector<64x128xf32>
    %53 = vector.broadcast %16 : vector<64x1xf32> to vector<64x128xf32>
    %54 = arith.mulf %52, %53 : vector<64x128xf32>
    %55 = arith.addf %40, %54 : vector<64x128xf32>
    %56 = vector.extract_strided_slice %2 {offsets = [6, 0], sizes = [1, 128], strides = [1, 1]} : vector<10x128xf32> to vector<1x128xf32>
    %57 = vector.broadcast %56 : vector<1x128xf32> to vector<64x128xf32>
    %58 = arith.mulf %23, %57 : vector<64x128xf32>
    %59 = vector.extract_strided_slice %2 {offsets = [7, 0], sizes = [1, 128], strides = [1, 1]} : vector<10x128xf32> to vector<1x128xf32>
    %60 = vector.broadcast %59 : vector<1x128xf32> to vector<64x128xf32>
    %61 = arith.mulf %1, %60 : vector<64x128xf32>
    %62 = arith.addf %58, %61 : vector<64x128xf32>
    %63 = vector.extract_strided_slice %2 {offsets = [8, 0], sizes = [1, 128], strides = [1, 1]} : vector<10x128xf32> to vector<1x128xf32>
    %64 = vector.broadcast %63 : vector<1x128xf32> to vector<64x128xf32>
    %65 = arith.mulf %26, %64 : vector<64x128xf32>
    %66 = arith.addf %62, %65 : vector<64x128xf32>
    %c56_i32_7 = arith.constant 56 : i32
    %67 = tpu.dynamic_rotate %66 by %c56_i32_7 dim 0 : vector<64x128xf32>, i32 -> vector<64x128xf32>
    %68 = vector.broadcast %20 : vector<64x1xf32> to vector<64x128xf32>
    %69 = arith.mulf %67, %68 : vector<64x128xf32>
    %70 = arith.addf %55, %69 : vector<64x128xf32>
    %c0_8 = arith.constant 0 : index
    %c0_9 = arith.constant 0 : index
    %c0_10 = arith.constant 0 : index
    %71 = vector.load %arg6[%c0_8, %c0_9, %c0_10] : memref<1x64x128xf32, #tpu.memory_space<vmem>>, vector<1x64x128xf32>
    %72 = vector.shape_cast %71 : vector<1x64x128xf32> to vector<64x128xf32>
    %73 = vector.shape_cast %70 : vector<64x128xf32> to vector<1x64x128xf32>
    tpu.vector_store %arg6[%c0_8, %c0_9, %c0_10], %73 {strides = array<i32>} : memref<1x64x128xf32, #tpu.memory_space<vmem>>, vector<1x64x128xf32>,
    return
  }
  func.func @transform_0(%arg0: i32, %arg1: i32) -> (i32, i32, i32) {
    %c4_i32 = arith.constant 4 : i32
    %0 = arith.addi %c4_i32, %arg1 : i32
    %c0_i32 = arith.constant 0 : i32
    %c0_i32_0 = arith.constant 0 : i32
    return %arg0, %0, %c0_i32 : i32, i32, i32
  }
  func.func @transform_1(%arg0: i32, %arg1: i32) -> (i32, i32) {
    %c0_i32 = arith.constant 0 : i32
    %c0_i32_0 = arith.constant 0 : i32
    %c0_i32_1 = arith.constant 0 : i32
    return %c0_i32, %c0_i32_0 : i32, i32
  }
  func.func @transform_2(%arg0: i32, %arg1: i32) -> (i32, i32) {
    %c0_i32 = arith.constant 0 : i32
    %c0_i32_0 = arith.constant 0 : i32
    %c0_i32_1 = arith.constant 0 : i32
    return %c0_i32, %c0_i32_0 : i32, i32
  }
  func.func @transform_4(%arg0: i32, %arg1: i32) -> (i32, i32, i32) {
    %c4_i32 = arith.constant 4 : i32
    %0 = arith.addi %c4_i32, %arg1 : i32
    %c0_i32 = arith.constant 0 : i32
    %c0_i32_0 = arith.constant 0 : i32
    return %arg0, %0, %c0_i32 : i32, i32, i32
  }
}

</mosaic_0001>

<llo_original>
// kernel: dwconv_forward.5
$region0: #{dwconv_forward.5}
  #allocation0 [shape = 'u32[]', space=smem, size = 0x4, offset = 0x4, fixed_abs, tag = 'smem constant byte address 0x4 - core index']
  #allocation1 [shape = 'u32[72,128]{1,0:T(1,128)}', space=vmem, size = 0x9000, scoped, tag = 'internal scratch']
  %s0 = inlined_call_operand.vmem [shape: f32[2,336,128], index: 0, kind: input, shape index: {}]
  %s1 = inlined_call_operand.vmem [shape: f32[10,128], index: 1, kind: input, shape index: {}]
  %s2 = inlined_call_operand.vmem [shape: s32[16,1], index: 2, kind: input, shape index: {}]
  %s3 = inlined_call_operand.hbm [shape: f32[2,336,128], index: 3, kind: input, shape index: {}, may-alias: {3,4}]
  %s4 = inlined_call_operand.hbm [shape: f32[2,336,128], index: 4, kind: output, shape index: {}, may-alias: {3,4}]
  %s5 = sld [smem:[#allocation0]]
  $region45: #{dwconv_forward.5} parent=0
    _
  %s7 = ssub.s32 1, %s5
  %s8 = scalar_select 0, %s7, %s5
  $region1: #{dwconv_forward.5} parent=0
    #allocation2 [shape = 'u8[16384]{0}', space=vmem, size = 0x4000, scoped, tag = 'output window, operand 0']
    #allocation3 [shape = 's32[2]{0}', space=sflag, size = 0x8, scoped, tag = 'scoped memory for dwconv_forward.5']
    %9 = vsyncpa [#allocation3], 0
    %s10 = scalar_lea.sflag [#allocation3], 1
    %11 = vsyncpa %s10, 0
    loop: start=0, step=1, limit=4
    $region2: #{dwconv_forward.5} parent=1 // loop_pre_header
      _
    $region3: #{dwconv_forward.5} parent=1 // loop_header
      %s13 = sphi 0, %s17
      %p14 = scmp.ge.s32.totalorder %s13, 4
      %s20 = sphi 0, %s32
      %s21 = sphi 0, %s28
      %s22 = sphi 0, %s20
      %s23 = sphi 0, %s21
      %s24 = sphi 0, %s22
      %s25 = sphi 0, %s23
      %s39 = sphi 0, %s41
      %s42 = sphi 0, %s39
      %s43 = sphi 0, %s42
      %s59 = sphi 0, %s43
      %s63 = sphi 0, %s63
      %s65 = sphi 0, %s63
      %s66 = sphi 0, %s65
      %s80 = sphi 0, %s66
      %s84 = sphi 0, %s84
      %s86 = sphi 0, %s84
      %s87 = sphi 0, %s86
      %s101 = sphi 0, %s87
      %s111 = sphi 0, %s113
      %s114 = sphi 0, %s111
      %s115 = sphi 0, %s114
      %s131 = sphi 0, %s115
    $region4: #{dwconv_forward.5} parent=1 // loop_header_branch
      %16 = sbr.rel (%p14) target = $region8
    $region5: #{dwconv_forward.5} parent=1 // loop_body
      %s18 = ssub.s32 %s13, 1
      %s19 = ssub.s32 %s13, 2
      %s26 = sadd.s32 1, %s21
      %p27 = scmp.ge.s32.totalorder %s26, 1
      %s28 = scalar_select %p27, 0, %s26
      %s29 = sadd.s32 1, %s20
      %s30 = scalar_select %p27, %s29, %s20
      %p31 = scmp.ge.s32.totalorder %s30, 2
      %s32 = scalar_select %p31, 0, %s30
      %s33 = sadd.s32 %s21, 20
      %s34 = sadd.s32 %s28, 20
      %s35 = ssub.s32 %s20, %s32
      %s36 = ssub.s32 %s33, %s34
      %s37 = sor.u32 %s35, %s36
      %p38 = scmp.eq.s32.totalorder %s37, 0
      %s40 = sadd.s32 %s39, 1
      %s41 = scalar_select %p38, %s39, %s40
      %p44 = pneg %p38
      %p45 = scmp.eq.s32.totalorder %s13, 1
      %p46 = por %p44, %p45
      %p47 = scmp.ne.s32.totalorder %s39, %s42
      %p48 = scmp.eq.s32.totalorder %s13, 0
      %p49 = por %p47, %p48
      %p50 = scmp.ne.s32.totalorder %s39, %s42
      %p51 = scmp.eq.s32.totalorder %s18, 1
      %p52 = por %p50, %p51
      %p53 = scmp.ne.s32.totalorder %s42, %s43
      %p54 = scmp.eq.s32.totalorder %s18, 0
      %p55 = por %p53, %p54
      %p56 = scmp.ne.s32.totalorder %s42, %s43
      %p57 = scmp.eq.s32.totalorder %s19, 1
      %p58 = por %p56, %p57
      %p60 = scmp.ne.s32.totalorder %s43, %s59
      %p61 = scmp.eq.s32.totalorder %s19, 0
      %p62 = por %p60, %p61
      %s64 = sadd.s32 %s63, 1
      %p67 = scmp.eq.s32.totalorder %s13, 1
      %p68 = scmp.ne.s32.totalorder %s63, %s65
      %p69 = scmp.eq.s32.totalorder %s13, 0
      %p70 = por %p68, %p69
      %p71 = scmp.ne.s32.totalorder %s63, %s65
      %p72 = scmp.eq.s32.totalorder %s18, 1
      %p73 = por %p71, %p72
      %p74 = scmp.ne.s32.totalorder %s65, %s66
      %p75 = scmp.eq.s32.totalorder %s18, 0
      %p76 = por %p74, %p75
      %p77 = scmp.ne.s32.totalorder %s65, %s66
      %p78 = scmp.eq.s32.totalorder %s19, 1
      %p79 = por %p77, %p78
      %p81 = scmp.ne.s32.totalorder %s66, %s80
      %p82 = scmp.eq.s32.totalorder %s19, 0
      %p83 = por %p81, %p82
      %s85 = sadd.s32 %s84, 1
      %p88 = scmp.eq.s32.totalorder %s13, 1
      %p89 = scmp.ne.s32.totalorder %s84, %s86
      %p90 = scmp.eq.s32.totalorder %s13, 0
      %p91 = por %p89, %p90
      %p92 = scmp.ne.s32.totalorder %s84, %s86
      %p93 = scmp.eq.s32.totalorder %s18, 1
      %p94 = por %p92, %p93
      %p95 = scmp.ne.s32.totalorder %s86, %s87
      %p96 = scmp.eq.s32.totalorder %s18, 0
      %p97 = por %p95, %p96
      %p98 = scmp.ne.s32.totalorder %s86, %s87
      %p99 = scmp.eq.s32.totalorder %s19, 1
      %p100 = por %p98, %p99
      %p102 = scmp.ne.s32.totalorder %s87, %s101
      %p103 = scmp.eq.s32.totalorder %s19, 0
      %p104 = por %p102, %p103
      %s105 = sadd.s32 %s21, 20
      %s106 = sadd.s32 %s28, 20
      %s107 = ssub.s32 %s20, %s32
      %s108 = ssub.s32 %s105, %s106
      %s109 = sor.u32 %s107, %s108
      %p110 = scmp.eq.s32.totalorder %s109, 0
      %s112 = sadd.s32 %s111, 1
      %s113 = scalar_select %p110, %s111, %s112
      %p116 = pneg %p110
      %p117 = scmp.eq.s32.totalorder %s13, 1
      %p118 = por %p116, %p117
      %p119 = scmp.ne.s32.totalorder %s111, %s114
      %p120 = scmp.eq.s32.totalorder %s13, 0
      %p121 = por %p119, %p120
      %p122 = scmp.ne.s32.totalorder %s111, %s114
      %p123 = scmp.eq.s32.totalorder %s18, 1
      %p124 = por %p122, %p123
      %p125 = scmp.ne.s32.totalorder %s114, %s115
      %p126 = scmp.eq.s32.totalorder %s18, 0
      %p127 = por %p125, %p126
      %p128 = scmp.ne.s32.totalorder %s114, %s115
      %p129 = scmp.eq.s32.totalorder %s19, 1
      %p130 = por %p128, %p129
      %p132 = scmp.ne.s32.totalorder %s115, %s131
      %p133 = scmp.eq.s32.totalorder %s19, 0
      %p134 = por %p132, %p133
      %p135 = scmp.le.s32.totalorder 1, %s13
      %p136 = scmp.lt.s32.totalorder %s13, 3
      %p137 = pnand %p135, %p136
      %p138 = pneg %p137
      // Predicated region
      $region9: #{dwconv_forward.5} parent=5 // pred_check
        _
      $region10: #{dwconv_forward.5} parent=5 // pred_check_branch
        %140 = sbr.rel (%p137) target = $region12
      $region11: #{dwconv_forward.5} parent=5 // pred_region
        %s141 = ssub.s32 %s13, 1
        // Predicated region
        $region13: #{dwconv_forward.5} parent=11 // pred_check
          %p142 = pneg %p76
        $region14: #{dwconv_forward.5} parent=11 // pred_check_branch
          %144 = sbr.rel (%p142) target = $region16
        $region15: #{dwconv_forward.5} parent=11 // pred_region
          _
        $region16: #{dwconv_forward.5} parent=11 // pred_fallthru
          _
        // Predicated region
        $region17: #{dwconv_forward.5} parent=11 // pred_check
          %p145 = pneg %p97
        $region18: #{dwconv_forward.5} parent=11 // pred_check_branch
          %147 = sbr.rel (%p145) target = $region20
        $region19: #{dwconv_forward.5} parent=11 // pred_region
          _
        $region20: #{dwconv_forward.5} parent=11 // pred_fallthru
          _
      $region12: #{dwconv_forward.5} parent=5 // pred_fallthru
        _
      %p148 = scmp.lt.s32.totalorder %s13, 2
      // Predicated region
      $region21: #{dwconv_forward.5} parent=5 // pred_check
        %p149 = pneg %p148
      $region22: #{dwconv_forward.5} parent=5 // pred_check_branch
        %151 = sbr.rel (%p149) target = $region24
      $region23: #{dwconv_forward.5} parent=5 // pred_region
        // Predicated region
        $region25: #{dwconv_forward.5} parent=23 // pred_check
          %p152 = pneg %p49
        $region26: #{dwconv_forward.5} parent=23 // pred_check_branch
          %154 = sbr.rel (%p152) target = $region28
        $region27: #{dwconv_forward.5} parent=23 // pred_region
          %s155 = sadd.s32 %s21, 20
          %s156 = smul.u32 2, %s155
          %p157 = scmp.lt.s32.totalorder %s20, 1
          %s158 = scalar_select %p157, %s20, 1
          %p159 = scmp.lt.s32.totalorder %s156, 41
          %s160 = scalar_select %p159, %s156, 41
          %s161 = smul.addr %s158, 42
          %s162 = sadd.s32 %s160, %s161
          %s163 = smul.addr %s162, 8
          %s164 = scalar_lea.vmem %s0, %s163
          %s165 = sadd.s32 %s21, 20
          %s166 = smul.u32 2, %s165
        $region28: #{dwconv_forward.5} parent=23 // pred_fallthru
          _
      $region24: #{dwconv_forward.5} parent=5 // pred_fallthru
        _
      %p167 = scmp.le.s32.totalorder 1, %s13
      %p168 = scmp.lt.s32.totalorder %s13, 3
      %p169 = pnand %p167, %p168
      %p170 = pneg %p169
      // Predicated region
      $region29: #{dwconv_forward.5} parent=5 // pred_check
        _
      $region30: #{dwconv_forward.5} parent=5 // pred_check_branch
        %172 = sbr.rel (%p169) target = $region32
      $region31: #{dwconv_forward.5} parent=5 // pred_region
        %s173 = ssub.s32 %s13, 1
        %s174 = sadd.s32 %s23, 20
        %s175 = smul.u32 2, %s174
        %p176 = scmp.lt.s32.totalorder %s22, 1
        %s177 = scalar_select %p176, %s22, 1
        %p178 = scmp.lt.s32.totalorder %s175, 41
        %s179 = scalar_select %p178, %s175, 41
        %s180 = smul.addr %s177, 42
        %s181 = sadd.s32 %s179, %s180
        %s182 = smul.addr %s181, 8
        %s183 = scalar_lea.vmem %s0, %s182
        %p184 = pneg %p55
        %p185 = pneg %p52
        %p186 = pneg %p76
        %p187 = pneg %p73
        %p188 = pneg %p97
        %p189 = pneg %p94
        %p190 = pneg %p127
        %p191 = pneg %p124
        %s192 = sand.u32 %s114, 1
        %s193 = scalar_lea.sflag [#allocation3], %s192
        %s194 = sand.u32 %s114, 1
        %s195 = smul.addr %s194, 16
        %s196 = scalar_lea.vmem [#allocation2], %s195
        %s197 = sadd.s32 %s23, 20
        %s198 = smul.u32 2, %s197
        %p199 = scmp.lt.s32.totalorder %s22, 1
        %s200 = scalar_select %p199, %s22, 1
        %p201 = scmp.lt.s32.totalorder %s198, 41
        %s202 = scalar_select %p201, %s198, 41
        %s203 = smul.addr %s200, 42
        %s204 = sadd.s32 %s202, %s203
        %s205 = smul.addr %s204, 8
        %s206 = scalar_lea.vmem %s0, %s205
        %s207 = sadd.s32 %s23, 20
        %s208 = smul.u32 2, %s207
        %s209 = sadd.s32 %s23, 20
        %s210 = smul.u32 2, %s209
        %v211 = vld [vmem:[%s206] sm:$0xff]
        %v212 = vld [vmem:[%s206 + $0x8] sm:$0xff]
        %v213 = vld [vmem:[%s1] sm:$0xff]
        %v214 = vld [vmem:[%s1 + $0x8] sm:$0x3]
        %v215 = vld [vmem:[%s2] sm:$0xff]
        %v216 = vld [vmem:[%s2 + $0x8] sm:$0xff]
        %vm217 = vcmp.gt.s32.totalorder %v215, 0
        %vm218 = vcmp.gt.s32.totalorder %v216, 0
        %v219 = vsel %vm217, 1, 0
        %v220 = vsel %vm218, 1, 0
        %v221 = vcvt.s32.f32 %v219
        %v222 = vcvt.s32.f32 %v220
        %vm223 = vcmp.lt.s32.totalorder %v215, 3
        %vm224 = vcmp.lt.s32.totalorder %v216, 3
        %v225 = vsel %vm223, 1, 0
        %v226 = vsel %vm224, 1, 0
        %v227 = vcvt.s32.f32 %v225
        %v228 = vcvt.s32.f32 %v226
        %v229 = vlaneseq
        %v230 = vshrl.u32 %v229, 7
        %v231 = vadd.s32 %v230, 8
        %vm232 = vcmp.ge.s32.totalorder %v230, 4
        %vm233 = vcmp.ge.s32.totalorder %v231, 4
        %v234 = vsel %vm232, 1, 0
        %v235 = vsel %vm233, 1, 0
        %v236 = vcvt.s32.f32 %v234
        %v237 = vcvt.s32.f32 %v235
        %vm238 = vcmp.lt.s32.totalorder %v230, 12
        %vm239 = vcmp.lt.s32.totalorder %v231, 12
        %v240 = vsel %vm238, 1, 0
        %v241 = vsel %vm239, 1, 0
        %v242 = vcvt.s32.f32 %v240
        %v243 = vcvt.s32.f32 %v241
        %v244 = vrot.slane %v211, 7
        %v245 = vrot.slane %v212, 7
        %vm246 = vcmp.lt.s32.totalorder %v230, 1
        %v247 = vsel %vm246, %v244, %v245
        %v248 = vsel %vm246, %v245, %v244
        %250 = vset.pattern.permute.xlu0 0
        %251 = vperm.xlu0 %250, %v221
        %v252 = vpop.permute.xlu0 %251
        %255 = vset.pattern.permute.xlu0 0
        %256 = vperm.xlu0 %255, %v222
        %v257 = vpop.permute.xlu0 %256
        %v259 = vmul.f32 %v248, %v252
        %v260 = vmul.f32 %v247, %v257
        %v261 = vrot.slane %v211, 1
        %v262 = vrot.slane %v212, 1
        %vm263 = vcmp.lt.s32.totalorder %v230, 7
        %v264 = vsel %vm263, %v261, %v262
        %v265 = vsel %vm263, %v262, %v261
        %267 = vset.pattern.permute.xlu0 0
        %268 = vperm.xlu0 %267, %v227
        %v269 = vpop.permute.xlu0 %268
        %272 = vset.pattern.permute.xlu0 0
        %273 = vperm.xlu0 %272, %v228
        %v274 = vpop.permute.xlu0 %273
        %v276 = vmul.f32 %v264, %v269
        %v277 = vmul.f32 %v265, %v274
        %v278 = vperm.slane %v213, 3
        %v279 = vmul.f32 %v259, %v278
        %v280 = vmul.f32 %v260, %v278
        %v281 = vperm.slane %v213, 4
        %v282 = vmul.f32 %v211, %v281
        %v283 = vmul.f32 %v212, %v281
        %v284 = vadd.f32 %v279, %v282
        %v285 = vadd.f32 %v280, %v283
        %v286 = vperm.slane %v213, 5
        %v287 = vmul.f32 %v276, %v286
        %v288 = vmul.f32 %v277, %v286
        %v289 = vadd.f32 %v284, %v287
        %v290 = vadd.f32 %v285, %v288
        %v291 = vperm.slane %v214, 1
        %v292 = vadd.f32 %v289, %v291
        %v293 = vadd.f32 %v290, %v291
        %v294 = vperm.slane %v213, 0
        %v295 = vmul.f32 %v259, %v294
        %v296 = vmul.f32 %v260, %v294
        %v297 = vperm.slane %v213, 1
        %v298 = vmul.f32 %v211, %v297
        %v299 = vmul.f32 %v212, %v297
        %v300 = vadd.f32 %v295, %v298
        %v301 = vadd.f32 %v296, %v299
        %v302 = vperm.slane %v213, 2
        %v303 = vmul.f32 %v276, %v302
        %v304 = vmul.f32 %v277, %v302
        %v305 = vadd.f32 %v300, %v303
        %v306 = vadd.f32 %v301, %v304
        %v307 = vrot.slane %v305, 4
        %v308 = vrot.slane %v306, 4
        %vm309 = vcmp.lt.s32.totalorder %v230, 4
        %v310 = vsel %vm309, %v307, %v308
        %v311 = vsel %vm309, %v308, %v307
        %v312 = vmul.f32 %v311, %v236
        %v313 = vmul.f32 %v310, %v237
        %v314 = vadd.f32 %v292, %v312
        %v315 = vadd.f32 %v293, %v313
        %v316 = vperm.slane %v213, 6
        %v317 = vmul.f32 %v259, %v316
        %v318 = vmul.f32 %v260, %v316
        %v319 = vperm.slane %v213, 7
        %v320 = vmul.f32 %v211, %v319
        %v321 = vmul.f32 %v212, %v319
        %v322 = vadd.f32 %v317, %v320
        %v323 = vadd.f32 %v318, %v321
        %v324 = vperm.slane %v214, 0
        %v325 = vmul.f32 %v276, %v324
        %v326 = vmul.f32 %v277, %v324
        %v327 = vadd.f32 %v322, %v325
        %v328 = vadd.f32 %v323, %v326
        %v329 = vrot.slane %v327, 4
        %v330 = vrot.slane %v328, 4
        %v331 = vsel %vm309, %v329, %v330
        %v332 = vsel %vm309, %v330, %v329
        %v333 = vmul.f32 %v331, %v242
        %v334 = vmul.f32 %v332, %v243
        %v335 = vadd.f32 %v314, %v333
        %v336 = vadd.f32 %v315, %v334
        %337 = vst [vmem:[%s196] sm:$0xff] %v335
        %338 = vst [vmem:[%s196 + $0x8] sm:$0xff] %v336
        %s339 = sand.u32 %s114, 1
        %s340 = scalar_lea.sflag [#allocation3], %s339
        %s341 = sand.u32 %s114, 1
        %s342 = smul.addr %s341, 16
        %s343 = scalar_lea.vmem [#allocation2], %s342
        // Predicated region
        $region33: #{dwconv_forward.5} parent=31 // pred_check
          %p344 = pneg %p124
        $region34: #{dwconv_forward.5} parent=31 // pred_check_branch
          %346 = sbr.rel (%p344) target = $region36
        $region35: #{dwconv_forward.5} parent=31 // pred_region
          %s347 = sadd.s32 %s23, 20
          %s348 = smul.u32 2, %s347
          %350 = vsyncadd %s340, 0
          %s351 = smul.addr %s22, 42
          %s352 = sadd.s32 %s348, %s351
          %s353 = smul.addr %s352, 8
          %s354 = scalar_lea.hbm %s4, %s353
          %s355 = sshll.u32 %s343, 4
          %s356 = int_to_ptr.vmem [resolvable:$true] %s355
          %s357 = sshll.u32 %s354, 4
          %s358 = int_to_ptr.hbm [resolvable:$true] %s357
          %363 = dma.vmem_to_hbm [thread:$0]  %s356, 256, %s358, %s340, 128, 128, 8
        $region36: #{dwconv_forward.5} parent=31 // pred_fallthru
          _
      $region32: #{dwconv_forward.5} parent=5 // pred_fallthru
        _
      %p364 = scmp.le.s32.totalorder 2, %s13
      // Predicated region
      $region37: #{dwconv_forward.5} parent=5 // pred_check
        %p365 = pneg %p364
      $region38: #{dwconv_forward.5} parent=5 // pred_check_branch
        %367 = sbr.rel (%p365) target = $region40
      $region39: #{dwconv_forward.5} parent=5 // pred_region
        %s368 = ssub.s32 %s13, 2
        // Predicated region
        $region41: #{dwconv_forward.5} parent=39 // pred_check
          %p369 = pneg %p130
        $region42: #{dwconv_forward.5} parent=39 // pred_check_branch
          %371 = sbr.rel (%p369) target = $region44
        $region43: #{dwconv_forward.5} parent=39 // pred_region
          %s372 = sand.u32 %s115, 1
          %s373 = scalar_lea.sflag [#allocation3], %s372
          %s374 = sand.u32 %s115, 1
          %s375 = smul.addr %s374, 16
          %s376 = scalar_lea.vmem [#allocation2], %s375
          %378 = dma.done %s373, 256
        $region44: #{dwconv_forward.5} parent=39 // pred_fallthru
          _
      $region40: #{dwconv_forward.5} parent=5 // pred_fallthru
        _
    $region6: #{dwconv_forward.5} parent=1 // loop_footer
      %s17 = sadd.s32 1, %s13
    $region7: #{dwconv_forward.5} parent=1 // loop_footer_branch
      %12 = sbr.rel target = $region3
    $region8: #{dwconv_forward.5} parent=1 // loop_exit
      _
    %379 = vsyncpa [#allocation3], 1
    %s380 = scalar_lea.sflag [#allocation3], 1
    %381 = vsyncpa %s380, 1

// kernel: dwconv_forward.4
$region0: #{dwconv_forward.4}
  #allocation0 [shape = 'u32[]', space=smem, size = 0x4, offset = 0x4, fixed_abs, tag = 'smem constant byte address 0x4 - core index']
  #allocation1 [shape = 'u32[72,128]{1,0:T(1,128)}', space=vmem, size = 0x9000, scoped, tag = 'internal scratch']
  %s0 = inlined_call_operand.vmem [shape: f32[2,336,128], index: 0, kind: input, shape index: {}]
  %s1 = inlined_call_operand.vmem [shape: f32[10,128], index: 1, kind: input, shape index: {}]
  %s2 = inlined_call_operand.vmem [shape: s32[64,1], index: 2, kind: input, shape index: {}]
  %s3 = inlined_call_operand.vmem [shape: f32[2,336,128], index: 3, kind: input, shape index: {}, may-alias: {3,4}]
  %s4 = inlined_call_operand.vmem [shape: f32[2,336,128], index: 4, kind: output, shape index: {}, may-alias: {3,4}]
  %s5 = sld [smem:[#allocation0]]
  $region93: #{dwconv_forward.4} parent=0
    _
  %s7 = ssub.s32 1, %s5
  %s8 = scalar_select 0, %s7, %s5
  $region1: #{dwconv_forward.4} parent=0
    #allocation2 [shape = 'u8[65536]{0}', space=vmem, size = 0x10000, scoped, tag = 'output window, operand 0']
    loop: start=0, step=1, limit=4
    $region2: #{dwconv_forward.4} parent=1 // loop_pre_header
      _
    $region3: #{dwconv_forward.4} parent=1 // loop_header
      %s10 = sphi 0, %s14
      %p11 = scmp.ge.s32.totalorder %s10, 4
      %s17 = sphi 0, %s29
      %s18 = sphi 0, %s25
      %s19 = sphi 0, %s17
      %s20 = sphi 0, %s18
      %s21 = sphi 0, %s19
      %s22 = sphi 0, %s20
      %s36 = sphi 0, %s38
      %s39 = sphi 0, %s36
      %s40 = sphi 0, %s39
      %s56 = sphi 0, %s40
      %s60 = sphi 0, %s60
      %s62 = sphi 0, %s60
      %s63 = sphi 0, %s62
      %s77 = sphi 0, %s63
      %s81 = sphi 0, %s81
      %s83 = sphi 0, %s81
      %s84 = sphi 0, %s83
      %s98 = sphi 0, %s84
      %s108 = sphi 0, %s110
      %s111 = sphi 0, %s108
      %s112 = sphi 0, %s111
      %s128 = sphi 0, %s112
    $region4: #{dwconv_forward.4} parent=1 // loop_header_branch
      %13 = sbr.rel (%p11) target = $region8
    $region5: #{dwconv_forward.4} parent=1 // loop_body
      %s15 = ssub.s32 %s10, 1
      %s16 = ssub.s32 %s10, 2
      %s23 = sadd.s32 1, %s18
      %p24 = scmp.ge.s32.totalorder %s23, 1
      %s25 = scalar_select %p24, 0, %s23
      %s26 = sadd.s32 1, %s17
      %s27 = scalar_select %p24, %s26, %s17
      %p28 = scmp.ge.s32.totalorder %s27, 2
      %s29 = scalar_select %p28, 0, %s27
      %s30 = sadd.s32 %s18, 4
      %s31 = sadd.s32 %s25, 4
      %s32 = ssub.s32 %s17, %s29
      %s33 = ssub.s32 %s30, %s31
      %s34 = sor.u32 %s32, %s33
      %p35 = scmp.eq.s32.totalorder %s34, 0
      %s37 = sadd.s32 %s36, 1
      %s38 = scalar_select %p35, %s36, %s37
      %p41 = pneg %p35
      %p42 = scmp.eq.s32.totalorder %s10, 1
      %p43 = por %p41, %p42
      %p44 = scmp.ne.s32.totalorder %s36, %s39
      %p45 = scmp.eq.s32.totalorder %s10, 0
      %p46 = por %p44, %p45
      %p47 = scmp.ne.s32.totalorder %s36, %s39
      %p48 = scmp.eq.s32.totalorder %s15, 1
      %p49 = por %p47, %p48
      %p50 = scmp.ne.s32.totalorder %s39, %s40
      %p51 = scmp.eq.s32.totalorder %s15, 0
      %p52 = por %p50, %p51
      %p53 = scmp.ne.s32.totalorder %s39, %s40
      %p54 = scmp.eq.s32.totalorder %s16, 1
      %p55 = por %p53, %p54
      %p57 = scmp.ne.s32.totalorder %s40, %s56
      %p58 = scmp.eq.s32.totalorder %s16, 0
      %p59 = por %p57, %p58
      %s61 = sadd.s32 %s60, 1
      %p64 = scmp.eq.s32.totalorder %s10, 1
      %p65 = scmp.ne.s32.totalorder %s60, %s62
      %p66 = scmp.eq.s32.totalorder %s10, 0
      %p67 = por %p65, %p66
      %p68 = scmp.ne.s32.totalorder %s60, %s62
      %p69 = scmp.eq.s32.totalorder %s15, 1
      %p70 = por %p68, %p69
      %p71 = scmp.ne.s32.totalorder %s62, %s63
      %p72 = scmp.eq.s32.totalorder %s15, 0
      %p73 = por %p71, %p72
      %p74 = scmp.ne.s32.totalorder %s62, %s63
      %p75 = scmp.eq.s32.totalorder %s16, 1
      %p76 = por %p74, %p75
      %p78 = scmp.ne.s32.totalorder %s63, %s77
      %p79 = scmp.eq.s32.totalorder %s16, 0
      %p80 = por %p78, %p79
      %s82 = sadd.s32 %s81, 1
      %p85 = scmp.eq.s32.totalorder %s10, 1
      %p86 = scmp.ne.s32.totalorder %s81, %s83
      %p87 = scmp.eq.s32.totalorder %s10, 0
      %p88 = por %p86, %p87
      %p89 = scmp.ne.s32.totalorder %s81, %s83
      %p90 = scmp.eq.s32.totalorder %s15, 1
      %p91 = por %p89, %p90
      %p92 = scmp.ne.s32.totalorder %s83, %s84
      %p93 = scmp.eq.s32.totalorder %s15, 0
      %p94 = por %p92, %p93
      %p95 = scmp.ne.s32.totalorder %s83, %s84
      %p96 = scmp.eq.s32.totalorder %s16, 1
      %p97 = por %p95, %p96
      %p99 = scmp.ne.s32.totalorder %s84, %s98
      %p100 = scmp.eq.s32.totalorder %s16, 0
      %p101 = por %p99, %p100
      %s102 = sadd.s32 %s18, 4
      %s103 = sadd.s32 %s25, 4
      %s104 = ssub.s32 %s17, %s29
      %s105 = ssub.s32 %s102, %s103
      %s106 = sor.u32 %s104, %s105
      %p107 = scmp.eq.s32.totalorder %s106, 0
      %s109 = sadd.s32 %s108, 1
      %s110 = scalar_select %p107, %s108, %s109
      %p113 = pneg %p107
      %p114 = scmp.eq.s32.totalorder %s10, 1
      %p115 = por %p113, %p114
      %p116 = scmp.ne.s32.totalorder %s108, %s111
      %p117 = scmp.eq.s32.totalorder %s10, 0
      %p118 = por %p116, %p117
      %p119 = scmp.ne.s32.totalorder %s108, %s111
      %p120 = scmp.eq.s32.totalorder %s15, 1
      %p121 = por %p119, %p120
      %p122 = scmp.ne.s32.totalorder %s111, %s112
      %p123 = scmp.eq.s32.totalorder %s15, 0
      %p124 = por %p122, %p123
      %p125 = scmp.ne.s32.totalorder %s111, %s112
      %p126 = scmp.eq.s32.totalorder %s16, 1
      %p127 = por %p125, %p126
      %p129 = scmp.ne.s32.totalorder %s112, %s128
      %p130 = scmp.eq.s32.totalorder %s16, 0
      %p131 = por %p129, %p130
      %p132 = scmp.le.s32.totalorder 1, %s10
      %p133 = scmp.lt.s32.totalorder %s10, 3
      %p134 = pnand %p132, %p133
      %p135 = pneg %p134
      // Predicated region
      $region9: #{dwconv_forward.4} parent=5 // pred_check
        _
      $region10: #{dwconv_forward.4} parent=5 // pred_check_branch
        %137 = sbr.rel (%p134) target = $region12
      $region11: #{dwconv_forward.4} parent=5 // pred_region
        %s138 = ssub.s32 %s10, 1
        // Predicated region
        $region13: #{dwconv_forward.4} parent=11 // pred_check
          %p139 = pneg %p73
        $region14: #{dwconv_forward.4} parent=11 // pred_check_branch
          %141 = sbr.rel (%p139) target = $region16
        $region15: #{dwconv_forward.4} parent=11 // pred_region
          _
        $region16: #{dwconv_forward.4} parent=11 // pred_fallthru
          _
        // Predicated region
        $region17: #{dwconv_forward.4} parent=11 // pred_check
          %p142 = pneg %p94
        $region18: #{dwconv_forward.4} parent=11 // pred_check_branch
          %144 = sbr.rel (%p142) target = $region20
        $region19: #{dwconv_forward.4} parent=11 // pred_region
          _
        $region20: #{dwconv_forward.4} parent=11 // pred_fallthru
          _
      $region12: #{dwconv_forward.4} parent=5 // pred_fallthru
        _
      %p145 = scmp.lt.s32.totalorder %s10, 2
      // Predicated region
      $region21: #{dwconv_forward.4} parent=5 // pred_check
        %p146 = pneg %p145
      $region22: #{dwconv_forward.4} parent=5 // pred_check_branch
        %148 = sbr.rel (%p146) target = $region24
      $region23: #{dwconv_forward.4} parent=5 // pred_region
        // Predicated region
        $region25: #{dwconv_forward.4} parent=23 // pred_check
          %p149 = pneg %p46
        $region26: #{dwconv_forward.4} parent=23 // pred_check_branch
          %151 = sbr.rel (%p149) target = $region28
        $region27: #{dwconv_forward.4} parent=23 // pred_region
          %s152 = sadd.s32 %s18, 4
          %s153 = smul.u32 8, %s152
          %s154 = ssub.s32 42, %s153
          %p155 = scmp.lt.s32.totalorder %s154, 8
          %s156 = scalar_select %p155, %s154, 8
          %s157 = smul.u32 8, %s156
          %p158 = scmp.lt.s32.totalorder %s17, 1
          %s159 = scalar_select %p158, %s17, 1
          %p160 = scmp.lt.s32.totalorder %s153, 41
          %s161 = scalar_select %p160, %s153, 41
          %s162 = smul.addr %s159, 42
          %s163 = sadd.s32 %s161, %s162
          %s164 = smul.addr %s163, 8
          %s165 = scalar_lea.vmem %s0, %s164
          %s166 = sadd.s32 %s18, 4
          %s167 = smul.u32 8, %s166
          %s168 = ssub.s32 42, %s167
          %p169 = scmp.lt.s32.totalorder %s168, 8
          %s170 = scalar_select %p169, %s168, 8
          %s171 = smul.u32 8, %s170
        $region28: #{dwconv_forward.4} parent=23 // pred_fallthru
          _
      $region24: #{dwconv_forward.4} parent=5 // pred_fallthru
        _
      %p172 = scmp.le.s32.totalorder 1, %s10
      %p173 = scmp.lt.s32.totalorder %s10, 3
      %p174 = pnand %p172, %p173
      %p175 = pneg %p174
      // Predicated region
      $region29: #{dwconv_forward.4} parent=5 // pred_check
        _
      $region30: #{dwconv_forward.4} parent=5 // pred_check_branch
        %177 = sbr.rel (%p174) target = $region32
      $region31: #{dwconv_forward.4} parent=5 // pred_region
        %s178 = ssub.s32 %s10, 1
        %s179 = sadd.s32 %s20, 4
        %s180 = smul.u32 8, %s179
        %s181 = ssub.s32 42, %s180
        %p182 = scmp.lt.s32.totalorder %s181, 8
        %s183 = scalar_select %p182, %s181, 8
        %s184 = smul.u32 8, %s183
        %p185 = scmp.lt.s32.totalorder %s19, 1
        %s186 = scalar_select %p185, %s19, 1
        %p187 = scmp.lt.s32.totalorder %s180, 41
        %s188 = scalar_select %p187, %s180, 41
        %s189 = smul.addr %s186, 42
        %s190 = sadd.s32 %s188, %s189
        %s191 = smul.addr %s190, 8
        %s192 = scalar_lea.vmem %s0, %s191
        %p193 = pneg %p52
        %p194 = pneg %p49
        %p195 = pneg %p73
        %p196 = pneg %p70
        %p197 = pneg %p94
        %p198 = pneg %p91
        %p199 = pneg %p124
        %p200 = pneg %p121
        %s201 = sand.u32 %s111, 1
        %s202 = sand.u32 %s111, 1
        %s203 = smul.addr %s202, 64
        %s204 = scalar_lea.vmem [#allocation2], %s203
        %s205 = sadd.s32 %s20, 4
        %s206 = smul.u32 8, %s205
        %s207 = ssub.s32 42, %s206
        %p208 = scmp.lt.s32.totalorder %s207, 8
        %s209 = scalar_select %p208, %s207, 8
        %s210 = smul.u32 8, %s209
        %p211 = scmp.lt.s32.totalorder %s19, 1
        %s212 = scalar_select %p211, %s19, 1
        %p213 = scmp.lt.s32.totalorder %s206, 41
        %s214 = scalar_select %p213, %s206, 41
        %s215 = smul.addr %s212, 42
        %s216 = sadd.s32 %s214, %s215
        %s217 = smul.addr %s216, 8
        %s218 = scalar_lea.vmem %s0, %s217
        %s219 = sadd.s32 %s20, 4
        %s220 = smul.u32 8, %s219
        %s221 = ssub.s32 42, %s220
        %p222 = scmp.lt.s32.totalorder %s221, 8
        %s223 = scalar_select %p222, %s221, 8
        %s224 = smul.u32 8, %s223
        %s225 = sadd.s32 %s20, 4
        %s226 = smul.u32 8, %s225
        %s227 = ssub.s32 42, %s226
        %p228 = scmp.lt.s32.totalorder %s227, 8
        %s229 = scalar_select %p228, %s227, 8
        %s230 = smul.u32 8, %s229
        %v231 = vld [vmem:[%s218] sm:$0xff]
        %v232 = vld [vmem:[%s218 + $0x8] sm:$0xff]
        %v233 = vld [vmem:[%s218 + $0x10] sm:$0xff]
        %v234 = vld [vmem:[%s218 + $0x18] sm:$0xff]
        %v235 = vld [vmem:[%s218 + $0x20] sm:$0xff]
        %v236 = vld [vmem:[%s218 + $0x28] sm:$0xff]
        %v237 = vld [vmem:[%s218 + $0x30] sm:$0xff]
        %v238 = vld [vmem:[%s218 + $0x38] sm:$0xff]
        %v239 = vld [vmem:[%s1] sm:$0xff]
        %v240 = vld [vmem:[%s1 + $0x8] sm:$0x3]
        %v241 = vld [vmem:[%s2] sm:$0xff]
        %v242 = vld [vmem:[%s2 + $0x8] sm:$0xff]
        %v243 = vld [vmem:[%s2 + $0x10] sm:$0xff]
        %v244 = vld [vmem:[%s2 + $0x18] sm:$0xff]
        %v245 = vld [vmem:[%s2 + $0x20] sm:$0xff]
        %v246 = vld [vmem:[%s2 + $0x28] sm:$0xff]
        %v247 = vld [vmem:[%s2 + $0x30] sm:$0xff]
        %v248 = vld [vmem:[%s2 + $0x38] sm:$0xff]
        %vm249 = vcmp.gt.s32.totalorder %v241, 0
        %vm250 = vcmp.gt.s32.totalorder %v242, 0
        %vm251 = vcmp.gt.s32.totalorder %v243, 0
        %vm252 = vcmp.gt.s32.totalorder %v244, 0
        %vm253 = vcmp.gt.s32.totalorder %v245, 0
        %vm254 = vcmp.gt.s32.totalorder %v246, 0
        %vm255 = vcmp.gt.s32.totalorder %v247, 0
        %vm256 = vcmp.gt.s32.totalorder %v248, 0
        %v257 = vsel %vm249, 1, 0
        %v258 = vsel %vm250, 1, 0
        %v259 = vsel %vm251, 1, 0
        %v260 = vsel %vm252, 1, 0
        %v261 = vsel %vm253, 1, 0
        %v262 = vsel %vm254, 1, 0
        %v263 = vsel %vm255, 1, 0
        %v264 = vsel %vm256, 1, 0
        %v265 = vcvt.s32.f32 %v257
        %v266 = vcvt.s32.f32 %v258
        %v267 = vcvt.s32.f32 %v259
        %v268 = vcvt.s32.f32 %v260
        %v269 = vcvt.s32.f32 %v261
        %v270 = vcvt.s32.f32 %v262
        %v271 = vcvt.s32.f32 %v263
        %v272 = vcvt.s32.f32 %v264
        %vm273 = vcmp.lt.s32.totalorder %v241, 7
        %vm274 = vcmp.lt.s32.totalorder %v242, 7
        %vm275 = vcmp.lt.s32.totalorder %v243, 7
        %vm276 = vcmp.lt.s32.totalorder %v244, 7
        %vm277 = vcmp.lt.s32.totalorder %v245, 7
        %vm278 = vcmp.lt.s32.totalorder %v246, 7
        %vm279 = vcmp.lt.s32.totalorder %v247, 7
        %vm280 = vcmp.lt.s32.totalorder %v248, 7
        %v281 = vsel %vm273, 1, 0
        %v282 = vsel %vm274, 1, 0
        %v283 = vsel %vm275, 1, 0
        %v284 = vsel %vm276, 1, 0
        %v285 = vsel %vm277, 1, 0
        %v286 = vsel %vm278, 1, 0
        %v287 = vsel %vm279, 1, 0
        %v288 = vsel %vm280, 1, 0
        %v289 = vcvt.s32.f32 %v281
        %v290 = vcvt.s32.f32 %v282
        %v291 = vcvt.s32.f32 %v283
        %v292 = vcvt.s32.f32 %v284
        %v293 = vcvt.s32.f32 %v285
        %v294 = vcvt.s32.f32 %v286
        %v295 = vcvt.s32.f32 %v287
        %v296 = vcvt.s32.f32 %v288
        %v297 = vlaneseq
        %v298 = vshrl.u32 %v297, 7
        %v299 = vadd.s32 %v298, 8
        %v300 = vadd.s32 %v298, 16
        %v301 = vadd.s32 %v298, 24
        %v302 = vadd.s32 %v298, 32
        %v303 = vadd.s32 %v298, 40
        %v304 = vadd.s32 %v298, 48
        %v305 = vadd.s32 %v298, 56
        %vm306 = vcmp.ge.s32.totalorder %v298, 8
        %vm307 = vcmp.ge.s32.totalorder %v299, 8
        %vm308 = vcmp.ge.s32.totalorder %v300, 8
        %vm309 = vcmp.ge.s32.totalorder %v301, 8
        %vm310 = vcmp.ge.s32.totalorder %v302, 8
        %vm311 = vcmp.ge.s32.totalorder %v303, 8
        %vm312 = vcmp.ge.s32.totalorder %v304, 8
        %vm313 = vcmp.ge.s32.totalorder %v305, 8
        %v314 = vsel %vm306, 1, 0
        %v315 = vsel %vm307, 1, 0
        %v316 = vsel %vm308, 1, 0
        %v317 = vsel %vm309, 1, 0
        %v318 = vsel %vm310, 1, 0
        %v319 = vsel %vm311, 1, 0
        %v320 = vsel %vm312, 1, 0
        %v321 = vsel %vm313, 1, 0
        %v322 = vcvt.s32.f32 %v314
        %v323 = vcvt.s32.f32 %v315
        %v324 = vcvt.s32.f32 %v316
        %v325 = vcvt.s32.f32 %v317
        %v326 = vcvt.s32.f32 %v318
        %v327 = vcvt.s32.f32 %v319
        %v328 = vcvt.s32.f32 %v320
        %v329 = vcvt.s32.f32 %v321
        %vm330 = vcmp.lt.s32.totalorder %v298, 56
        %vm331 = vcmp.lt.s32.totalorder %v299, 56
        %vm332 = vcmp.lt.s32.totalorder %v300, 56
        %vm333 = vcmp.lt.s32.totalorder %v301, 56
        %vm334 = vcmp.lt.s32.totalorder %v302, 56
        %vm335 = vcmp.lt.s32.totalorder %v303, 56
        %vm336 = vcmp.lt.s32.totalorder %v304, 56
        %vm337 = vcmp.lt.s32.totalorder %v305, 56
        %v338 = vsel %vm330, 1, 0
        %v339 = vsel %vm331, 1, 0
        %v340 = vsel %vm332, 1, 0
        %v341 = vsel %vm333, 1, 0
        %v342 = vsel %vm334, 1, 0
        %v343 = vsel %vm335, 1, 0
        %v344 = vsel %vm336, 1, 0
        %v345 = vsel %vm337, 1, 0
        %v346 = vcvt.s32.f32 %v338
        %v347 = vcvt.s32.f32 %v339
        %v348 = vcvt.s32.f32 %v340
        %v349 = vcvt.s32.f32 %v341
        %v350 = vcvt.s32.f32 %v342
        %v351 = vcvt.s32.f32 %v343
        %v352 = vcvt.s32.f32 %v344
        %v353 = vcvt.s32.f32 %v345
        %v354 = vrot.slane %v231, 7
        %v355 = vrot.slane %v232, 7
        %v356 = vrot.slane %v233, 7
        %v357 = vrot.slane %v234, 7
        %v358 = vrot.slane %v235, 7
        %v359 = vrot.slane %v236, 7
        %v360 = vrot.slane %v237, 7
        %v361 = vrot.slane %v238, 7
        %vm362 = vcmp.lt.s32.totalorder %v298, 1
        %v363 = vsel %vm362, %v360, %v361
        %v364 = vsel %vm362, %v359, %v360
        %v365 = vsel %vm362, %v358, %v359
        %v366 = vsel %vm362, %v357, %v358
        %v367 = vsel %vm362, %v356, %v357
        %v368 = vsel %vm362, %v355, %v356
        %v369 = vsel %vm362, %v354, %v355
        %v370 = vsel %vm362, %v361, %v354
        %372 = vset.pattern.permute.xlu0 0
        %373 = vperm.xlu0 %372, %v265
        %v374 = vpop.permute.xlu0 %373
        %377 = vset.pattern.permute.xlu0 0
        %378 = vperm.xlu0 %377, %v266
        %v379 = vpop.permute.xlu0 %378
        %382 = vset.pattern.permute.xlu0 0
        %383 = vperm.xlu0 %382, %v267
        %v384 = vpop.permute.xlu0 %383
        %387 = vset.pattern.permute.xlu0 0
        %388 = vperm.xlu0 %387, %v268
        %v389 = vpop.permute.xlu0 %388
        %392 = vset.pattern.permute.xlu0 0
        %393 = vperm.xlu0 %392, %v269
        %v394 = vpop.permute.xlu0 %393
        %397 = vset.pattern.permute.xlu0 0
        %398 = vperm.xlu0 %397, %v270
        %v399 = vpop.permute.xlu0 %398
        %402 = vset.pattern.permute.xlu0 0
        %403 = vperm.xlu0 %402, %v271
        %v404 = vpop.permute.xlu0 %403
        %407 = vset.pattern.permute.xlu0 0
        %408 = vperm.xlu0 %407, %v272
        %v409 = vpop.permute.xlu0 %408
        %v411 = vmul.f32 %v370, %v374
        %v412 = vmul.f32 %v369, %v379
        %v413 = vmul.f32 %v368, %v384
        %v414 = vmul.f32 %v367, %v389
        %v415 = vmul.f32 %v366, %v394
        %v416 = vmul.f32 %v365, %v399
        %v417 = vmul.f32 %v364, %v404
        %v418 = vmul.f32 %v363, %v409
        %v419 = vrot.slane %v231, 1
        %v420 = vrot.slane %v232, 1
        %v421 = vrot.slane %v233, 1
        %v422 = vrot.slane %v234, 1
        %v423 = vrot.slane %v235, 1
        %v424 = vrot.slane %v236, 1
        %v425 = vrot.slane %v237, 1
        %v426 = vrot.slane %v238, 1
        %vm427 = vcmp.lt.s32.totalorder %v298, 7
        %v428 = vsel %vm427, %v425, %v426
        %v429 = vsel %vm427, %v424, %v425
        %v430 = vsel %vm427, %v423, %v424
        %v431 = vsel %vm427, %v422, %v423
        %v432 = vsel %vm427, %v421, %v422
        %v433 = vsel %vm427, %v420, %v421
        %v434 = vsel %vm427, %v419, %v420
        %v435 = vsel %vm427, %v426, %v419
        %437 = vset.pattern.permute.xlu0 0
        %438 = vperm.xlu0 %437, %v289
        %v439 = vpop.permute.xlu0 %438
        %442 = vset.pattern.permute.xlu0 0
        %443 = vperm.xlu0 %442, %v290
        %v444 = vpop.permute.xlu0 %443
        %447 = vset.pattern.permute.xlu0 0
        %448 = vperm.xlu0 %447, %v291
        %v449 = vpop.permute.xlu0 %448
        %452 = vset.pattern.permute.xlu0 0
        %453 = vperm.xlu0 %452, %v292
        %v454 = vpop.permute.xlu0 %453
        %457 = vset.pattern.permute.xlu0 0
        %458 = vperm.xlu0 %457, %v293
        %v459 = vpop.permute.xlu0 %458
        %462 = vset.pattern.permute.xlu0 0
        %463 = vperm.xlu0 %462, %v294
        %v464 = vpop.permute.xlu0 %463
        %467 = vset.pattern.permute.xlu0 0
        %468 = vperm.xlu0 %467, %v295
        %v469 = vpop.permute.xlu0 %468
        %472 = vset.pattern.permute.xlu0 0
        %473 = vperm.xlu0 %472, %v296
        %v474 = vpop.permute.xlu0 %473
        %v476 = vmul.f32 %v434, %v439
        %v477 = vmul.f32 %v433, %v444
        %v478 = vmul.f32 %v432, %v449
        %v479 = vmul.f32 %v431, %v454
        %v480 = vmul.f32 %v430, %v459
        %v481 = vmul.f32 %v429, %v464
        %v482 = vmul.f32 %v428, %v469
        %v483 = vmul.f32 %v435, %v474
        %v484 = vperm.slane %v239, 3
        %v485 = vmul.f32 %v411, %v484
        %v486 = vmul.f32 %v412, %v484
        %v487 = vmul.f32 %v413, %v484
        %v488 = vmul.f32 %v414, %v484
        %v489 = vmul.f32 %v415, %v484
        %v490 = vmul.f32 %v416, %v484
        %v491 = vmul.f32 %v417, %v484
        %v492 = vmul.f32 %v418, %v484
        %v493 = vperm.slane %v239, 4
        %v494 = vmul.f32 %v231, %v493
        %v495 = vmul.f32 %v232, %v493
        %v496 = vmul.f32 %v233, %v493
        %v497 = vmul.f32 %v234, %v493
        %v498 = vmul.f32 %v235, %v493
        %v499 = vmul.f32 %v236, %v493
        %v500 = vmul.f32 %v237, %v493
        %v501 = vmul.f32 %v238, %v493
        %v502 = vadd.f32 %v485, %v494
        %v503 = vadd.f32 %v486, %v495
        %v504 = vadd.f32 %v487, %v496
        %v505 = vadd.f32 %v488, %v497
        %v506 = vadd.f32 %v489, %v498
        %v507 = vadd.f32 %v490, %v499
        %v508 = vadd.f32 %v491, %v500
        %v509 = vadd.f32 %v492, %v501
        %v510 = vperm.slane %v239, 5
        %v511 = vmul.f32 %v476, %v510
        %v512 = vmul.f32 %v477, %v510
        %v513 = vmul.f32 %v478, %v510
        %v514 = vmul.f32 %v479, %v510
        %v515 = vmul.f32 %v480, %v510
        %v516 = vmul.f32 %v481, %v510
        %v517 = vmul.f32 %v482, %v510
        %v518 = vmul.f32 %v483, %v510
        %v519 = vadd.f32 %v502, %v511
        %v520 = vadd.f32 %v503, %v512
        %v521 = vadd.f32 %v504, %v513
        %v522 = vadd.f32 %v505, %v514
        %v523 = vadd.f32 %v506, %v515
        %v524 = vadd.f32 %v507, %v516
        %v525 = vadd.f32 %v508, %v517
        %v526 = vadd.f32 %v509, %v518
        %v527 = vperm.slane %v240, 1
        %v528 = vadd.f32 %v519, %v527
        %v529 = vadd.f32 %v520, %v527
        %v530 = vadd.f32 %v521, %v527
        %v531 = vadd.f32 %v522, %v527
        %v532 = vadd.f32 %v523, %v527
        %v533 = vadd.f32 %v524, %v527
        %v534 = vadd.f32 %v525, %v527
        %v535 = vadd.f32 %v526, %v527
        %v536 = vperm.slane %v239, 0
        %v537 = vmul.f32 %v411, %v536
        %v538 = vmul.f32 %v412, %v536
        %v539 = vmul.f32 %v413, %v536
        %v540 = vmul.f32 %v414, %v536
        %v541 = vmul.f32 %v415, %v536
        %v542 = vmul.f32 %v416, %v536
        %v543 = vmul.f32 %v417, %v536
        %v544 = vmul.f32 %v418, %v536
        %v545 = vperm.slane %v239, 1
        %v546 = vmul.f32 %v231, %v545
        %v547 = vmul.f32 %v232, %v545
        %v548 = vmul.f32 %v233, %v545
        %v549 = vmul.f32 %v234, %v545
        %v550 = vmul.f32 %v235, %v545
        %v551 = vmul.f32 %v236, %v545
        %v552 = vmul.f32 %v237, %v545
        %v553 = vmul.f32 %v238, %v545
        %v554 = vadd.f32 %v537, %v546
        %v555 = vadd.f32 %v538, %v547
        %v556 = vadd.f32 %v539, %v548
        %v557 = vadd.f32 %v540, %v549
        %v558 = vadd.f32 %v541, %v550
        %v559 = vadd.f32 %v542, %v551
        %v560 = vadd.f32 %v543, %v552
        %v561 = vadd.f32 %v544, %v553
        %v562 = vperm.slane %v239, 2
        %v563 = vmul.f32 %v476, %v562
        %v564 = vmul.f32 %v477, %v562
        %v565 = vmul.f32 %v478, %v562
        %v566 = vmul.f32 %v479, %v562
        %v567 = vmul.f32 %v480, %v562
        %v568 = vmul.f32 %v481, %v562
        %v569 = vmul.f32 %v482, %v562
        %v570 = vmul.f32 %v483, %v562
        %v571 = vadd.f32 %v554, %v563
        %v572 = vadd.f32 %v555, %v564
        %v573 = vadd.f32 %v556, %v565
        %v574 = vadd.f32 %v557, %v566
        %v575 = vadd.f32 %v558, %v567
        %v576 = vadd.f32 %v559, %v568
        %v577 = vadd.f32 %v560, %v569
        %v578 = vadd.f32 %v561, %v570
        %v579 = vmul.f32 %v578, %v322
        %v580 = vmul.f32 %v571, %v323
        %v581 = vmul.f32 %v572, %v324
        %v582 = vmul.f32 %v573, %v325
        %v583 = vmul.f32 %v574, %v326
        %v584 = vmul.f32 %v575, %v327
        %v585 = vmul.f32 %v576, %v328
        %v586 = vmul.f32 %v577, %v329
        %v587 = vadd.f32 %v528, %v579
        %v588 = vadd.f32 %v529, %v580
        %v589 = vadd.f32 %v530, %v581
        %v590 = vadd.f32 %v531, %v582
        %v591 = vadd.f32 %v532, %v583
        %v592 = vadd.f32 %v533, %v584
        %v593 = vadd.f32 %v534, %v585
        %v594 = vadd.f32 %v535, %v586
        %v595 = vperm.slane %v239, 6
        %v596 = vmul.f32 %v411, %v595
        %v597 = vmul.f32 %v412, %v595
        %v598 = vmul.f32 %v413, %v595
        %v599 = vmul.f32 %v414, %v595
        %v600 = vmul.f32 %v415, %v595
        %v601 = vmul.f32 %v416, %v595
        %v602 = vmul.f32 %v417, %v595
        %v603 = vmul.f32 %v418, %v595
        %v604 = vperm.slane %v239, 7
        %v605 = vmul.f32 %v231, %v604
        %v606 = vmul.f32 %v232, %v604
        %v607 = vmul.f32 %v233, %v604
        %v608 = vmul.f32 %v234, %v604
        %v609 = vmul.f32 %v235, %v604
        %v610 = vmul.f32 %v236, %v604
        %v611 = vmul.f32 %v237, %v604
        %v612 = vmul.f32 %v238, %v604
        %v613 = vadd.f32 %v596, %v605
        %v614 = vadd.f32 %v597, %v606
        %v615 = vadd.f32 %v598, %v607
        %v616 = vadd.f32 %v599, %v608
        %v617 = vadd.f32 %v600, %v609
        %v618 = vadd.f32 %v601, %v610
        %v619 = vadd.f32 %v602, %v611
        %v620 = vadd.f32 %v603, %v612
        %v621 = vperm.slane %v240, 0
        %v622 = vmul.f32 %v476, %v621
        %v623 = vmul.f32 %v477, %v621
        %v624 = vmul.f32 %v478, %v621
        %v625 = vmul.f32 %v479, %v621
        %v626 = vmul.f32 %v480, %v621
        %v627 = vmul.f32 %v481, %v621
        %v628 = vmul.f32 %v482, %v621
        %v629 = vmul.f32 %v483, %v621
        %v630 = vadd.f32 %v613, %v622
        %v631 = vadd.f32 %v614, %v623
        %v632 = vadd.f32 %v615, %v624
        %v633 = vadd.f32 %v616, %v625
        %v634 = vadd.f32 %v617, %v626
        %v635 = vadd.f32 %v618, %v627
        %v636 = vadd.f32 %v619, %v628
        %v637 = vadd.f32 %v620, %v629
        %v638 = vmul.f32 %v631, %v346
        %v639 = vmul.f32 %v632, %v347
        %v640 = vmul.f32 %v633, %v348
        %v641 = vmul.f32 %v634, %v349
        %v642 = vmul.f32 %v635, %v350
        %v643 = vmul.f32 %v636, %v351
        %v644 = vmul.f32 %v637, %v352
        %v645 = vmul.f32 %v630, %v353
        %v646 = vadd.f32 %v587, %v638
        %v647 = vadd.f32 %v588, %v639
        %v648 = vadd.f32 %v589, %v640
        %v649 = vadd.f32 %v590, %v641
        %v650 = vadd.f32 %v591, %v642
        %v651 = vadd.f32 %v592, %v643
        %v652 = vadd.f32 %v593, %v644
        %v653 = vadd.f32 %v594, %v645
        %654 = vst [vmem:[%s204] sm:$0xff] %v646
        %655 = vst [vmem:[%s204 + $0x8] sm:$0xff] %v647
        %656 = vst [vmem:[%s204 + $0x10] sm:$0xff] %v648
        %657 = vst [vmem:[%s204 + $0x18] sm:$0xff] %v649
        %658 = vst [vmem:[%s204 + $0x20] sm:$0xff] %v650
        %659 = vst [vmem:[%s204 + $0x28] sm:$0xff] %v651
        %660 = vst [vmem:[%s204 + $0x30] sm:$0xff] %v652
        %661 = vst [vmem:[%s204 + $0x38] sm:$0xff] %v653
        %s662 = sand.u32 %s111, 1
        %s663 = sand.u32 %s111, 1
        %s664 = smul.addr %s663, 64
        %s665 = scalar_lea.vmem [#allocation2], %s664
        // Predicated region
        $region33: #{dwconv_forward.4} parent=31 // pred_check
          %p666 = pneg %p121
        $region34: #{dwconv_forward.4} parent=31 // pred_check_branch
          %668 = sbr.rel (%p666) target = $region36
        $region35: #{dwconv_forward.4} parent=31 // pred_region
          %s669 = sadd.s32 %s20, 4
          %s670 = smul.u32 8, %s669
          %s671 = ssub.s32 42, %s670
          %p672 = scmp.lt.s32.totalorder %s671, 8
          %s673 = scalar_select %p672, %s671, 8
          %s674 = smul.u32 8, %s673
          %p675 = scmp.ne.s32.totalorder 0, %s674
          %s676 = smul.addr %s19, 42
          %s677 = sadd.s32 %s670, %s676
          %s678 = smul.addr %s677, 8
          %s679 = scalar_lea.vmem %s4, %s678
          // Predicated region
          $region37: #{dwconv_forward.4} parent=35 // pred_check
            %p680 = pneg %p675
          $region38: #{dwconv_forward.4} parent=35 // pred_check_branch
            %682 = sbr.rel (%p680) target = $region40
          $region39: #{dwconv_forward.4} parent=35 // pred_region
            // Predicated region
            $region41: #{dwconv_forward.4} parent=39 // pred_check
              _
            $region42: #{dwconv_forward.4} parent=39 // pred_check_branch
              %684 = sbr.rel (0) target = $region44
            $region43: #{dwconv_forward.4} parent=39 // pred_region
              // Predicated region
              $region63: #{dwconv_forward.4} parent=43 // pred_check
                _
              $region64: #{dwconv_forward.4} parent=43 // pred_check_branch
                %748 = sbr.rel (0) target = $region66
              $region65: #{dwconv_forward.4} parent=43 // pred_region
                %s749 = sshrl.u32 %s673, 3
                // While loop
                $region67: #{dwconv_forward.4} parent=65 // loop_pre_header
                  _
                $region68: #{dwconv_forward.4} parent=65 // loop_header
                  %s751 = sphi 0, %s753
                  %p752 = scmp.ge.s32.totalorder %s751, %s749
                  %s756 = sphi 0, %s777
                  %s757 = sphi %s665, %s780
                  %s758 = sphi %s679, %s781
                $region69: #{dwconv_forward.4} parent=65 // loop_header_branch
                  %755 = sbr.rel (%p752) target = $region73
                $region70: #{dwconv_forward.4} parent=65 // loop_body
                  %v759 = vld [vmem:[%s757] sm:$0xff]
                  %760 = vst [vmem:[%s758] sm:$0xff] %v759
                  %v761 = vld [vmem:[%s757 + $0x8] sm:$0xff]
                  %762 = vst [vmem:[%s758 + $0x8] sm:$0xff] %v761
                  %v763 = vld [vmem:[%s757 + $0x10] sm:$0xff]
                  %764 = vst [vmem:[%s758 + $0x10] sm:$0xff] %v763
                  %v765 = vld [vmem:[%s757 + $0x18] sm:$0xff]
                  %766 = vst [vmem:[%s758 + $0x18] sm:$0xff] %v765
                  %v767 = vld [vmem:[%s757 + $0x20] sm:$0xff]
                  %768 = vst [vmem:[%s758 + $0x20] sm:$0xff] %v767
                  %v769 = vld [vmem:[%s757 + $0x28] sm:$0xff]
                  %770 = vst [vmem:[%s758 + $0x28] sm:$0xff] %v769
                  %v771 = vld [vmem:[%s757 + $0x30] sm:$0xff]
                  %772 = vst [vmem:[%s758 + $0x30] sm:$0xff] %v771
                  %v773 = vld [vmem:[%s757 + $0x38] sm:$0xff]
                  %774 = vst [vmem:[%s758 + $0x38] sm:$0xff] %v773
                  %s775 = sadd.s32 1, %s756
                  %p776 = scmp.ge.s32.totalorder %s775, %s749
                  %s777 = scalar_select %p776, 0, %s775
                  %s778 = smul.u32 %s777, 64
                  %s779 = smul.u32 %s777, 64
                  %s780 = scalar_lea.vmem %s665, %s778 [#allocation2]
                  %s781 = scalar_lea.vmem %s679, %s779
                $region71: #{dwconv_forward.4} parent=65 // loop_footer
                  %s753 = sadd.s32 %s751, 1
                $region72: #{dwconv_forward.4} parent=65 // loop_footer_branch
                  %750 = sbr.rel target = $region68
                $region73: #{dwconv_forward.4} parent=65 // loop_exit
                  _
                %s782 = sshrl.u32 %s673, 3
                %s783 = sand.u32 %s673, 7
                %s784 = smul.u32 %s782, 8
                %s785 = smul.u32 8, %s784
                %s786 = scalar_lea.vmem %s665, %s785 [#allocation2]
                %s787 = smul.u32 8, %s784
                %s788 = scalar_lea.vmem %s679, %s787
                // While loop
                $region74: #{dwconv_forward.4} parent=65 // loop_pre_header
                  _
                $region75: #{dwconv_forward.4} parent=65 // loop_header
                  %s790 = sphi 0, %s792
                  %p791 = scmp.ge.s32.totalorder %s790, %s783
                  %s795 = sphi 0, %s802
                  %s796 = sphi %s786, %s805
                  %s797 = sphi %s788, %s806
                $region76: #{dwconv_forward.4} parent=65 // loop_header_branch
                  %794 = sbr.rel (%p791) target = $region80
                $region77: #{dwconv_forward.4} parent=65 // loop_body
                  %v798 = vld [vmem:[%s796] sm:$0xff]
                  %799 = vst [vmem:[%s797] sm:$0xff] %v798
                  %s800 = sadd.s32 1, %s795
                  %p801 = scmp.ge.s32.totalorder %s800, %s783
                  %s802 = scalar_select %p801, 0, %s800
                  %s803 = smul.u32 %s802, 8
                  %s804 = smul.u32 %s802, 8
                  %s805 = scalar_lea.vmem %s786, %s803 [#allocation2]
                  %s806 = scalar_lea.vmem %s788, %s804
                $region78: #{dwconv_forward.4} parent=65 // loop_footer
                  %s792 = sadd.s32 %s790, 1
                $region79: #{dwconv_forward.4} parent=65 // loop_footer_branch
                  %789 = sbr.rel target = $region75
                $region80: #{dwconv_forward.4} parent=65 // loop_exit
                  _
              $region66: #{dwconv_forward.4} parent=43 // pred_fallthru
                _
              // Predicated region
              $region81: #{dwconv_forward.4} parent=43 // pred_check
                _
              $region82: #{dwconv_forward.4} parent=43 // pred_check_branch
                %808 = sbr.rel target = $region84
              $region83: #{dwconv_forward.4} parent=43 // pred_region
                _
              $region84: #{dwconv_forward.4} parent=43 // pred_fallthru
                _
            $region44: #{dwconv_forward.4} parent=39 // pred_fallthru
              _
            // Predicated region
            $region45: #{dwconv_forward.4} parent=39 // pred_check
              _
            $region46: #{dwconv_forward.4} parent=39 // pred_check_branch
              %686 = sbr.rel target = $region48
            $region47: #{dwconv_forward.4} parent=39 // pred_region
              %s688 = ssub.s32 256, 1
              %s689 = sshrl.u32 %s673, 3
              // While loop
              $region49: #{dwconv_forward.4} parent=47 // loop_pre_header
                _
              $region50: #{dwconv_forward.4} parent=47 // loop_header
                %s691 = sphi 0, %s693
                %p692 = scmp.ge.s32.totalorder %s691, %s689
                %s696 = sphi 0, %s717
                %s697 = sphi %s665, %s720
                %s698 = sphi %s679, %s721
              $region51: #{dwconv_forward.4} parent=47 // loop_header_branch
                %695 = sbr.rel (%p692) target = $region55
              $region52: #{dwconv_forward.4} parent=47 // loop_body
                %v699 = vld [vmem:[%s697] sm:%s688]
                %700 = vst [vmem:[%s698] sm:%s688] %v699
                %v701 = vld [vmem:[%s697 + $0x8] sm:%s688]
                %702 = vst [vmem:[%s698 + $0x8] sm:%s688] %v701
                %v703 = vld [vmem:[%s697 + $0x10] sm:%s688]
                %704 = vst [vmem:[%s698 + $0x10] sm:%s688] %v703
                %v705 = vld [vmem:[%s697 + $0x18] sm:%s688]
                %706 = vst [vmem:[%s698 + $0x18] sm:%s688] %v705
                %v707 = vld [vmem:[%s697 + $0x20] sm:%s688]
                %708 = vst [vmem:[%s698 + $0x20] sm:%s688] %v707
                %v709 = vld [vmem:[%s697 + $0x28] sm:%s688]
                %710 = vst [vmem:[%s698 + $0x28] sm:%s688] %v709
                %v711 = vld [vmem:[%s697 + $0x30] sm:%s688]
                %712 = vst [vmem:[%s698 + $0x30] sm:%s688] %v711
                %v713 = vld [vmem:[%s697 + $0x38] sm:%s688]
                %714 = vst [vmem:[%s698 + $0x38] sm:%s688] %v713
                %s715 = sadd.s32 1, %s696
                %p716 = scmp.ge.s32.totalorder %s715, %s689
                %s717 = scalar_select %p716, 0, %s715
                %s718 = smul.u32 %s717, 64
                %s719 = smul.u32 %s717, 64
                %s720 = scalar_lea.vmem %s665, %s718 [#allocation2]
                %s721 = scalar_lea.vmem %s679, %s719
              $region53: #{dwconv_forward.4} parent=47 // loop_footer
                %s693 = sadd.s32 %s691, 1
              $region54: #{dwconv_forward.4} parent=47 // loop_footer_branch
                %690 = sbr.rel target = $region50
              $region55: #{dwconv_forward.4} parent=47 // loop_exit
                _
              %s722 = sshrl.u32 %s673, 3
              %s723 = sand.u32 %s673, 7
              %s724 = smul.u32 %s722, 8
              %s725 = smul.u32 8, %s724
              %s726 = scalar_lea.vmem %s665, %s725 [#allocation2]
              %s727 = smul.u32 8, %s724
              %s728 = scalar_lea.vmem %s679, %s727
              // While loop
              $region56: #{dwconv_forward.4} parent=47 // loop_pre_header
                _
              $region57: #{dwconv_forward.4} parent=47 // loop_header
                %s730 = sphi 0, %s732
                %p731 = scmp.ge.s32.totalorder %s730, %s723
                %s735 = sphi 0, %s742
                %s736 = sphi %s726, %s745
                %s737 = sphi %s728, %s746
              $region58: #{dwconv_forward.4} parent=47 // loop_header_branch
                %734 = sbr.rel (%p731) target = $region62
              $region59: #{dwconv_forward.4} parent=47 // loop_body
                %v738 = vld [vmem:[%s736] sm:%s688]
                %739 = vst [vmem:[%s737] sm:%s688] %v738
                %s740 = sadd.s32 1, %s735
                %p741 = scmp.ge.s32.totalorder %s740, %s723
                %s742 = scalar_select %p741, 0, %s740
                %s743 = smul.u32 %s742, 8
                %s744 = smul.u32 %s742, 8
                %s745 = scalar_lea.vmem %s726, %s743 [#allocation2]
                %s746 = scalar_lea.vmem %s728, %s744
              $region60: #{dwconv_forward.4} parent=47 // loop_footer
                %s732 = sadd.s32 %s730, 1
              $region61: #{dwconv_forward.4} parent=47 // loop_footer_branch
                %729 = sbr.rel target = $region57
              $region62: #{dwconv_forward.4} parent=47 // loop_exit
                _
            $region48: #{dwconv_forward.4} parent=39 // pred_fallthru
              _
          $region40: #{dwconv_forward.4} parent=35 // pred_fallthru
            _
          %809 = vnop
        $region36: #{dwconv_forward.4} parent=31 // pred_fallthru
          _
      $region32: #{dwconv_forward.4} parent=5 // pred_fallthru
        _
      %p810 = scmp.le.s32.totalorder 2, %s10
      // Predicated region
      $region85: #{dwconv_forward.4} parent=5 // pred_check
        %p811 = pneg %p810
      $region86: #{dwconv_forward.4} parent=5 // pred_check_branch
        %813 = sbr.rel (%p811) target = $region88
      $region87: #{dwconv_forward.4} parent=5 // pred_region
        %s814 = ssub.s32 %s10, 2
        // Predicated region
        $region89: #{dwconv_forward.4} parent=87 // pred_check
          %p815 = pneg %p127
        $region90: #{dwconv_forward.4} parent=87 // pred_check_branch
          %817 = sbr.rel (%p815) target = $region92
        $region91: #{dwconv_forward.4} parent=87 // pred_region
          %s818 = sand.u32 %s112, 1
          %s819 = sand.u32 %s112, 1
          %s820 = smul.addr %s819, 64
          %s821 = scalar_lea.vmem [#allocation2], %s820
        $region92: #{dwconv_forward.4} parent=87 // pred_fallthru
          _
      $region88: #{dwconv_forward.4} parent=5 // pred_fallthru
        _
    $region6: #{dwconv_forward.4} parent=1 // loop_footer
      %s14 = sadd.s32 1, %s10
    $region7: #{dwconv_forward.4} parent=1 // loop_footer_branch
      %9 = sbr.rel target = $region3
    $region8: #{dwconv_forward.4} parent=1 // loop_exit
      _

// kernel: dwconv_forward.3
$region0: #{dwconv_forward.3}
  #allocation0 [shape = 'u32[]', space=smem, size = 0x4, offset = 0x4, fixed_abs, tag = 'smem constant byte address 0x4 - core index']
  #allocation1 [shape = 'u32[72,128]{1,0:T(1,128)}', space=vmem, size = 0x9000, scoped, tag = 'internal scratch']
  %s0 = inlined_call_operand.hbm [shape: f32[2,336,128], index: 0, kind: input, shape index: {}]
  %s1 = inlined_call_operand.vmem [shape: f32[10,128], index: 1, kind: input, shape index: {}]
  %s2 = inlined_call_operand.vmem [shape: s32[256,1], index: 2, kind: input, shape index: {}]
  %s3 = inlined_call_operand.vmem [shape: f32[2,336,128], index: 3, kind: output, shape index: {}]
  %s4 = sld [smem:[#allocation0]]
  $region97: #{dwconv_forward.3} parent=0
    _
  %s6 = ssub.s32 1, %s4
  %s7 = scalar_select 0, %s6, %s4
  $region1: #{dwconv_forward.3} parent=0
    #allocation2 [shape = 'u8[262144]{0}', space=vmem, size = 0x40000, scoped, tag = 'input window, operand 0']
    #allocation3 [shape = 's32[2]{0}', space=sflag, size = 0x8, scoped, tag = 'scoped memory for dwconv_forward.3']
    #allocation4 [shape = 'u8[262144]{0}', space=vmem, size = 0x40000, scoped, tag = 'output window, operand 0']
    %8 = vsyncpa [#allocation3], 0
    %s9 = scalar_lea.sflag [#allocation3], 1
    %10 = vsyncpa %s9, 0
    loop: start=0, step=1, limit=4
    $region2: #{dwconv_forward.3} parent=1 // loop_pre_header
      _
    $region3: #{dwconv_forward.3} parent=1 // loop_header
      %s12 = sphi 0, %s16
      %p13 = scmp.ge.s32.totalorder %s12, 4
      %s19 = sphi 0, %s31
      %s20 = sphi 0, %s27
      %s21 = sphi 0, %s19
      %s22 = sphi 0, %s20
      %s23 = sphi 0, %s21
      %s24 = sphi 0, %s22
      %s36 = sphi 0, %s38
      %s39 = sphi 0, %s36
      %s40 = sphi 0, %s39
      %s56 = sphi 0, %s40
      %s60 = sphi 0, %s60
      %s62 = sphi 0, %s60
      %s63 = sphi 0, %s62
      %s77 = sphi 0, %s63
      %s81 = sphi 0, %s81
      %s83 = sphi 0, %s81
      %s84 = sphi 0, %s83
      %s98 = sphi 0, %s84
      %s106 = sphi 0, %s108
      %s109 = sphi 0, %s106
      %s110 = sphi 0, %s109
      %s126 = sphi 0, %s110
    $region4: #{dwconv_forward.3} parent=1 // loop_header_branch
      %15 = sbr.rel (%p13) target = $region8
    $region5: #{dwconv_forward.3} parent=1 // loop_body
      %s17 = ssub.s32 %s12, 1
      %s18 = ssub.s32 %s12, 2
      %s25 = sadd.s32 1, %s20
      %p26 = scmp.ge.s32.totalorder %s25, 1
      %s27 = scalar_select %p26, 0, %s25
      %s28 = sadd.s32 1, %s19
      %s29 = scalar_select %p26, %s28, %s19
      %p30 = scmp.ge.s32.totalorder %s29, 2
      %s31 = scalar_select %p30, 0, %s29
      %s32 = ssub.s32 %s19, %s31
      %s33 = ssub.s32 %s20, %s27
      %s34 = sor.u32 %s32, %s33
      %p35 = scmp.eq.s32.totalorder %s34, 0
      %s37 = sadd.s32 %s36, 1
      %s38 = scalar_select %p35, %s36, %s37
      %p41 = pneg %p35
      %p42 = scmp.eq.s32.totalorder %s12, 1
      %p43 = por %p41, %p42
      %p44 = scmp.ne.s32.totalorder %s36, %s39
      %p45 = scmp.eq.s32.totalorder %s12, 0
      %p46 = por %p44, %p45
      %p47 = scmp.ne.s32.totalorder %s36, %s39
      %p48 = scmp.eq.s32.totalorder %s17, 1
      %p49 = por %p47, %p48
      %p50 = scmp.ne.s32.totalorder %s39, %s40
      %p51 = scmp.eq.s32.totalorder %s17, 0
      %p52 = por %p50, %p51
      %p53 = scmp.ne.s32.totalorder %s39, %s40
      %p54 = scmp.eq.s32.totalorder %s18, 1
      %p55 = por %p53, %p54
      %p57 = scmp.ne.s32.totalorder %s40, %s56
      %p58 = scmp.eq.s32.totalorder %s18, 0
      %p59 = por %p57, %p58
      %s61 = sadd.s32 %s60, 1
      %p64 = scmp.eq.s32.totalorder %s12, 1
      %p65 = scmp.ne.s32.totalorder %s60, %s62
      %p66 = scmp.eq.s32.totalorder %s12, 0
      %p67 = por %p65, %p66
      %p68 = scmp.ne.s32.totalorder %s60, %s62
      %p69 = scmp.eq.s32.totalorder %s17, 1
      %p70 = por %p68, %p69
      %p71 = scmp.ne.s32.totalorder %s62, %s63
      %p72 = scmp.eq.s32.totalorder %s17, 0
      %p73 = por %p71, %p72
      %p74 = scmp.ne.s32.totalorder %s62, %s63
      %p75 = scmp.eq.s32.totalorder %s18, 1
      %p76 = por %p74, %p75
      %p78 = scmp.ne.s32.totalorder %s63, %s77
      %p79 = scmp.eq.s32.totalorder %s18, 0
      %p80 = por %p78, %p79
      %s82 = sadd.s32 %s81, 1
      %p85 = scmp.eq.s32.totalorder %s12, 1
      %p86 = scmp.ne.s32.totalorder %s81, %s83
      %p87 = scmp.eq.s32.totalorder %s12, 0
      %p88 = por %p86, %p87
      %p89 = scmp.ne.s32.totalorder %s81, %s83
      %p90 = scmp.eq.s32.totalorder %s17, 1
      %p91 = por %p89, %p90
      %p92 = scmp.ne.s32.totalorder %s83, %s84
      %p93 = scmp.eq.s32.totalorder %s17, 0
      %p94 = por %p92, %p93
      %p95 = scmp.ne.s32.totalorder %s83, %s84
      %p96 = scmp.eq.s32.totalorder %s18, 1
      %p97 = por %p95, %p96
      %p99 = scmp.ne.s32.totalorder %s84, %s98
      %p100 = scmp.eq.s32.totalorder %s18, 0
      %p101 = por %p99, %p100
      %s102 = ssub.s32 %s19, %s31
      %s103 = ssub.s32 %s20, %s27
      %s104 = sor.u32 %s102, %s103
      %p105 = scmp.eq.s32.totalorder %s104, 0
      %s107 = sadd.s32 %s106, 1
      %s108 = scalar_select %p105, %s106, %s107
      %p111 = pneg %p105
      %p112 = scmp.eq.s32.totalorder %s12, 1
      %p113 = por %p111, %p112
      %p114 = scmp.ne.s32.totalorder %s106, %s109
      %p115 = scmp.eq.s32.totalorder %s12, 0
      %p116 = por %p114, %p115
      %p117 = scmp.ne.s32.totalorder %s106, %s109
      %p118 = scmp.eq.s32.totalorder %s17, 1
      %p119 = por %p117, %p118
      %p120 = scmp.ne.s32.totalorder %s109, %s110
      %p121 = scmp.eq.s32.totalorder %s17, 0
      %p122 = por %p120, %p121
      %p123 = scmp.ne.s32.totalorder %s109, %s110
      %p124 = scmp.eq.s32.totalorder %s18, 1
      %p125 = por %p123, %p124
      %p127 = scmp.ne.s32.totalorder %s110, %s126
      %p128 = scmp.eq.s32.totalorder %s18, 0
      %p129 = por %p127, %p128
      %p130 = scmp.le.s32.totalorder 1, %s12
      %p131 = scmp.lt.s32.totalorder %s12, 3
      %p132 = pnand %p130, %p131
      %p133 = pneg %p132
      // Predicated region
      $region9: #{dwconv_forward.3} parent=5 // pred_check
        _
      $region10: #{dwconv_forward.3} parent=5 // pred_check_branch
        %135 = sbr.rel (%p132) target = $region12
      $region11: #{dwconv_forward.3} parent=5 // pred_region
        %s136 = ssub.s32 %s12, 1
        // Predicated region
        $region13: #{dwconv_forward.3} parent=11 // pred_check
          %p137 = pneg %p73
        $region14: #{dwconv_forward.3} parent=11 // pred_check_branch
          %139 = sbr.rel (%p137) target = $region16
        $region15: #{dwconv_forward.3} parent=11 // pred_region
          _
        $region16: #{dwconv_forward.3} parent=11 // pred_fallthru
          _
        // Predicated region
        $region17: #{dwconv_forward.3} parent=11 // pred_check
          %p140 = pneg %p94
        $region18: #{dwconv_forward.3} parent=11 // pred_check_branch
          %142 = sbr.rel (%p140) target = $region20
        $region19: #{dwconv_forward.3} parent=11 // pred_region
          _
        $region20: #{dwconv_forward.3} parent=11 // pred_fallthru
          _
      $region12: #{dwconv_forward.3} parent=5 // pred_fallthru
        _
      %p143 = scmp.lt.s32.totalorder %s12, 2
      // Predicated region
      $region21: #{dwconv_forward.3} parent=5 // pred_check
        %p144 = pneg %p143
      $region22: #{dwconv_forward.3} parent=5 // pred_check_branch
        %146 = sbr.rel (%p144) target = $region24
      $region23: #{dwconv_forward.3} parent=5 // pred_region
        // Predicated region
        $region25: #{dwconv_forward.3} parent=23 // pred_check
          %p147 = pneg %p46
        $region26: #{dwconv_forward.3} parent=23 // pred_check_branch
          %149 = sbr.rel (%p147) target = $region28
        $region27: #{dwconv_forward.3} parent=23 // pred_region
          %s150 = sand.u32 %s36, 1
          %s151 = scalar_lea.sflag [#allocation3], %s150
          %s152 = sand.u32 %s36, 1
          %s153 = smul.addr %s152, 256
          %s154 = scalar_lea.vmem [#allocation2], %s153
          %s155 = smul.u32 32, %s20
          %s156 = ssub.s32 42, %s155
          %p157 = scmp.lt.s32.totalorder %s156, 32
          %s158 = scalar_select %p157, %s156, 32
          %s159 = smul.u32 8, %s158
          %s160 = ssub.s32 256, %s159
          %s161 = sshll.u32 %s160, 4
          %162 = vsyncadd %s151, %s161
          %p163 = scmp.ne.s32.totalorder 0, %s159
          %s164 = smul.addr %s19, 42
          %s165 = sadd.s32 %s155, %s164
          %s166 = smul.addr %s165, 8
          %s167 = scalar_lea.hbm %s0, %s166
          %s168 = smul.u32 8, %s158
          %s169 = sshll.u32 %s167, 4
          %s170 = int_to_ptr.hbm [resolvable:$true] %s169
          %s171 = sshll.u32 %s154, 4
          %s172 = int_to_ptr.vmem [resolvable:$true] %s171
          %s173 = sshll.u32 %s168, 4
          %177 = dma.hbm_to_vmem [thread:$0]  (%p163), %s170, %s173, %s172, %s151, 128, 128, 8
        $region28: #{dwconv_forward.3} parent=23 // pred_fallthru
          _
      $region24: #{dwconv_forward.3} parent=5 // pred_fallthru
        _
      %p178 = scmp.le.s32.totalorder 1, %s12
      %p179 = scmp.lt.s32.totalorder %s12, 3
      %p180 = pnand %p178, %p179
      %p181 = pneg %p180
      // Predicated region
      $region29: #{dwconv_forward.3} parent=5 // pred_check
        _
      $region30: #{dwconv_forward.3} parent=5 // pred_check_branch
        %183 = sbr.rel (%p180) target = $region32
      $region31: #{dwconv_forward.3} parent=5 // pred_region
        %s184 = ssub.s32 %s12, 1
        %s185 = sand.u32 %s39, 1
        %s186 = scalar_lea.sflag [#allocation3], %s185
        %s187 = sand.u32 %s39, 1
        %s188 = smul.addr %s187, 256
        %s189 = scalar_lea.vmem [#allocation2], %s188
        // Predicated region
        $region33: #{dwconv_forward.3} parent=31 // pred_check
          %p190 = pneg %p52
        $region34: #{dwconv_forward.3} parent=31 // pred_check_branch
          %192 = sbr.rel (%p190) target = $region36
        $region35: #{dwconv_forward.3} parent=31 // pred_region
          %194 = dma.done %s186, 4096
        $region36: #{dwconv_forward.3} parent=31 // pred_fallthru
          _
        %s195 = sand.u32 %s39, 1
        %s196 = scalar_lea.sflag [#allocation3], %s195
        %s197 = sand.u32 %s39, 1
        %s198 = smul.addr %s197, 256
        %s199 = scalar_lea.vmem [#allocation2], %s198
        %p200 = pneg %p52
        %p201 = pneg %p49
        %p202 = pneg %p73
        %p203 = pneg %p70
        %p204 = pneg %p94
        %p205 = pneg %p91
        %p206 = pneg %p122
        %p207 = pneg %p119
        %s208 = sand.u32 %s109, 1
        %s209 = sand.u32 %s109, 1
        %s210 = smul.addr %s209, 256
        %s211 = scalar_lea.vmem [#allocation4], %s210
        %s212 = smul.u32 32, %s22
        %s213 = ssub.s32 42, %s212
        %p214 = scmp.lt.s32.totalorder %s213, 32
        %s215 = scalar_select %p214, %s213, 32
        %s216 = smul.u32 8, %s215
        %s217 = smul.u32 32, %s22
        %s218 = ssub.s32 42, %s217
        %p219 = scmp.lt.s32.totalorder %s218, 32
        %s220 = scalar_select %p219, %s218, 32
        %s221 = smul.u32 8, %s220
        %v222 = vld [vmem:[%s189] sm:$0xff]
        %v223 = vld [vmem:[%s189 + $0x8] sm:$0xff]
        %v224 = vld [vmem:[%s189 + $0x10] sm:$0xff]
        %v225 = vld [vmem:[%s189 + $0x18] sm:$0xff]
        %v226 = vld [vmem:[%s189 + $0x20] sm:$0xff]
        %v227 = vld [vmem:[%s189 + $0x28] sm:$0xff]
        %v228 = vld [vmem:[%s189 + $0x30] sm:$0xff]
        %v229 = vld [vmem:[%s189 + $0x38] sm:$0xff]
        %v230 = vld [vmem:[%s189 + $0x40] sm:$0xff]
        %v231 = vld [vmem:[%s189 + $0x48] sm:$0xff]
        %v232 = vld [vmem:[%s189 + $0x50] sm:$0xff]
        %v233 = vld [vmem:[%s189 + $0x58] sm:$0xff]
        %v234 = vld [vmem:[%s189 + $0x60] sm:$0xff]
        %v235 = vld [vmem:[%s189 + $0x68] sm:$0xff]
        %v236 = vld [vmem:[%s189 + $0x70] sm:$0xff]
        %v237 = vld [vmem:[%s189 + $0x78] sm:$0xff]
        %v238 = vld [vmem:[%s189 + $0x80] sm:$0xff]
        %v239 = vld [vmem:[%s189 + $0x88] sm:$0xff]
        %v240 = vld [vmem:[%s189 + $0x90] sm:$0xff]
        %v241 = vld [vmem:[%s189 + $0x98] sm:$0xff]
        %v242 = vld [vmem:[%s189 + $0xa0] sm:$0xff]
        %v243 = vld [vmem:[%s189 + $0xa8] sm:$0xff]
        %v244 = vld [vmem:[%s189 + $0xb0] sm:$0xff]
        %v245 = vld [vmem:[%s189 + $0xb8] sm:$0xff]
        %v246 = vld [vmem:[%s189 + $0xc0] sm:$0xff]
        %v247 = vld [vmem:[%s189 + $0xc8] sm:$0xff]
        %v248 = vld [vmem:[%s189 + $0xd0] sm:$0xff]
        %v249 = vld [vmem:[%s189 + $0xd8] sm:$0xff]
        %v250 = vld [vmem:[%s189 + $0xe0] sm:$0xff]
        %v251 = vld [vmem:[%s189 + $0xe8] sm:$0xff]
        %v252 = vld [vmem:[%s189 + $0xf0] sm:$0xff]
        %v253 = vld [vmem:[%s189 + $0xf8] sm:$0xff]
        %v254 = vld [vmem:[%s1] sm:$0xff]
        %v255 = vld [vmem:[%s1 + $0x8] sm:$0x3]
        %v256 = vld [vmem:[%s2] sm:$0xff]
        %v257 = vld [vmem:[%s2 + $0x8] sm:$0xff]
        %v258 = vld [vmem:[%s2 + $0x10] sm:$0xff]
        %v259 = vld [vmem:[%s2 + $0x18] sm:$0xff]
        %v260 = vld [vmem:[%s2 + $0x20] sm:$0xff]
        %v261 = vld [vmem:[%s2 + $0x28] sm:$0xff]
        %v262 = vld [vmem:[%s2 + $0x30] sm:$0xff]
        %v263 = vld [vmem:[%s2 + $0x38] sm:$0xff]
        %v264 = vld [vmem:[%s2 + $0x40] sm:$0xff]
        %v265 = vld [vmem:[%s2 + $0x48] sm:$0xff]
        %v266 = vld [vmem:[%s2 + $0x50] sm:$0xff]
        %v267 = vld [vmem:[%s2 + $0x58] sm:$0xff]
        %v268 = vld [vmem:[%s2 + $0x60] sm:$0xff]
        %v269 = vld [vmem:[%s2 + $0x68] sm:$0xff]
        %v270 = vld [vmem:[%s2 + $0x70] sm:$0xff]
        %v271 = vld [vmem:[%s2 + $0x78] sm:$0xff]
        %v272 = vld [vmem:[%s2 + $0x80] sm:$0xff]
        %v273 = vld [vmem:[%s2 + $0x88] sm:$0xff]
        %v274 = vld [vmem:[%s2 + $0x90] sm:$0xff]
        %v275 = vld [vmem:[%s2 + $0x98] sm:$0xff]
        %v276 = vld [vmem:[%s2 + $0xa0] sm:$0xff]
        %v277 = vld [vmem:[%s2 + $0xa8] sm:$0xff]
        %v278 = vld [vmem:[%s2 + $0xb0] sm:$0xff]
        %v279 = vld [vmem:[%s2 + $0xb8] sm:$0xff]
        %v280 = vld [vmem:[%s2 + $0xc0] sm:$0xff]
        %v281 = vld [vmem:[%s2 + $0xc8] sm:$0xff]
        %v282 = vld [vmem:[%s2 + $0xd0] sm:$0xff]
        %v283 = vld [vmem:[%s2 + $0xd8] sm:$0xff]
        %v284 = vld [vmem:[%s2 + $0xe0] sm:$0xff]
        %v285 = vld [vmem:[%s2 + $0xe8] sm:$0xff]
        %v286 = vld [vmem:[%s2 + $0xf0] sm:$0xff]
        %v287 = vld [vmem:[%s2 + $0xf8] sm:$0xff]
        %vm288 = vcmp.gt.s32.totalorder %v256, 0
        %vm289 = vcmp.gt.s32.totalorder %v257, 0
        %vm290 = vcmp.gt.s32.totalorder %v258, 0
        %vm291 = vcmp.gt.s32.totalorder %v259, 0
        %vm292 = vcmp.gt.s32.totalorder %v260, 0
        %vm293 = vcmp.gt.s32.totalorder %v261, 0
        %vm294 = vcmp.gt.s32.totalorder %v262, 0
        %vm295 = vcmp.gt.s32.totalorder %v263, 0
        %vm296 = vcmp.gt.s32.totalorder %v264, 0
        %vm297 = vcmp.gt.s32.totalorder %v265, 0
        %vm298 = vcmp.gt.s32.totalorder %v266, 0
        %vm299 = vcmp.gt.s32.totalorder %v267, 0
        %vm300 = vcmp.gt.s32.totalorder %v268, 0
        %vm301 = vcmp.gt.s32.totalorder %v269, 0
        %vm302 = vcmp.gt.s32.totalorder %v270, 0
        %vm303 = vcmp.gt.s32.totalorder %v271, 0
        %vm304 = vcmp.gt.s32.totalorder %v272, 0
        %vm305 = vcmp.gt.s32.totalorder %v273, 0
        %vm306 = vcmp.gt.s32.totalorder %v274, 0
        %vm307 = vcmp.gt.s32.totalorder %v275, 0
        %vm308 = vcmp.gt.s32.totalorder %v276, 0
        %vm309 = vcmp.gt.s32.totalorder %v277, 0
        %vm310 = vcmp.gt.s32.totalorder %v278, 0
        %vm311 = vcmp.gt.s32.totalorder %v279, 0
        %vm312 = vcmp.gt.s32.totalorder %v280, 0
        %vm313 = vcmp.gt.s32.totalorder %v281, 0
        %vm314 = vcmp.gt.s32.totalorder %v282, 0
        %vm315 = vcmp.gt.s32.totalorder %v283, 0
        %vm316 = vcmp.gt.s32.totalorder %v284, 0
        %vm317 = vcmp.gt.s32.totalorder %v285, 0
        %vm318 = vcmp.gt.s32.totalorder %v286, 0
        %vm319 = vcmp.gt.s32.totalorder %v287, 0
        %v320 = vsel %vm288, 1, 0
        %v321 = vsel %vm289, 1, 0
        %v322 = vsel %vm290, 1, 0
        %v323 = vsel %vm291, 1, 0
        %v324 = vsel %vm292, 1, 0
        %v325 = vsel %vm293, 1, 0
        %v326 = vsel %vm294, 1, 0
        %v327 = vsel %vm295, 1, 0
        %v328 = vsel %vm296, 1, 0
        %v329 = vsel %vm297, 1, 0
        %v330 = vsel %vm298, 1, 0
        %v331 = vsel %vm299, 1, 0
        %v332 = vsel %vm300, 1, 0
        %v333 = vsel %vm301, 1, 0
        %v334 = vsel %vm302, 1, 0
        %v335 = vsel %vm303, 1, 0
        %v336 = vsel %vm304, 1, 0
        %v337 = vsel %vm305, 1, 0
        %v338 = vsel %vm306, 1, 0
        %v339 = vsel %vm307, 1, 0
        %v340 = vsel %vm308, 1, 0
        %v341 = vsel %vm309, 1, 0
        %v342 = vsel %vm310, 1, 0
        %v343 = vsel %vm311, 1, 0
        %v344 = vsel %vm312, 1, 0
        %v345 = vsel %vm313, 1, 0
        %v346 = vsel %vm314, 1, 0
        %v347 = vsel %vm315, 1, 0
        %v348 = vsel %vm316, 1, 0
        %v349 = vsel %vm317, 1, 0
        %v350 = vsel %vm318, 1, 0
        %v351 = vsel %vm319, 1, 0
        %v352 = vcvt.s32.f32 %v320
        %v353 = vcvt.s32.f32 %v321
        %v354 = vcvt.s32.f32 %v322
        %v355 = vcvt.s32.f32 %v323
        %v356 = vcvt.s32.f32 %v324
        %v357 = vcvt.s32.f32 %v325
        %v358 = vcvt.s32.f32 %v326
        %v359 = vcvt.s32.f32 %v327
        %v360 = vcvt.s32.f32 %v328
        %v361 = vcvt.s32.f32 %v329
        %v362 = vcvt.s32.f32 %v330
        %v363 = vcvt.s32.f32 %v331
        %v364 = vcvt.s32.f32 %v332
        %v365 = vcvt.s32.f32 %v333
        %v366 = vcvt.s32.f32 %v334
        %v367 = vcvt.s32.f32 %v335
        %v368 = vcvt.s32.f32 %v336
        %v369 = vcvt.s32.f32 %v337
        %v370 = vcvt.s32.f32 %v338
        %v371 = vcvt.s32.f32 %v339
        %v372 = vcvt.s32.f32 %v340
        %v373 = vcvt.s32.f32 %v341
        %v374 = vcvt.s32.f32 %v342
        %v375 = vcvt.s32.f32 %v343
        %v376 = vcvt.s32.f32 %v344
        %v377 = vcvt.s32.f32 %v345
        %v378 = vcvt.s32.f32 %v346
        %v379 = vcvt.s32.f32 %v347
        %v380 = vcvt.s32.f32 %v348
        %v381 = vcvt.s32.f32 %v349
        %v382 = vcvt.s32.f32 %v350
        %v383 = vcvt.s32.f32 %v351
        %vm384 = vcmp.lt.s32.totalorder %v256, 15
        %vm385 = vcmp.lt.s32.totalorder %v257, 15
        %vm386 = vcmp.lt.s32.totalorder %v258, 15
        %vm387 = vcmp.lt.s32.totalorder %v259, 15
        %vm388 = vcmp.lt.s32.totalorder %v260, 15
        %vm389 = vcmp.lt.s32.totalorder %v261, 15
        %vm390 = vcmp.lt.s32.totalorder %v262, 15
        %vm391 = vcmp.lt.s32.totalorder %v263, 15
        %vm392 = vcmp.lt.s32.totalorder %v264, 15
        %vm393 = vcmp.lt.s32.totalorder %v265, 15
        %vm394 = vcmp.lt.s32.totalorder %v266, 15
        %vm395 = vcmp.lt.s32.totalorder %v267, 15
        %vm396 = vcmp.lt.s32.totalorder %v268, 15
        %vm397 = vcmp.lt.s32.totalorder %v269, 15
        %vm398 = vcmp.lt.s32.totalorder %v270, 15
        %vm399 = vcmp.lt.s32.totalorder %v271, 15
        %vm400 = vcmp.lt.s32.totalorder %v272, 15
        %vm401 = vcmp.lt.s32.totalorder %v273, 15
        %vm402 = vcmp.lt.s32.totalorder %v274, 15
        %vm403 = vcmp.lt.s32.totalorder %v275, 15
        %vm404 = vcmp.lt.s32.totalorder %v276, 15
        %vm405 = vcmp.lt.s32.totalorder %v277, 15
        %vm406 = vcmp.lt.s32.totalorder %v278, 15
        %vm407 = vcmp.lt.s32.totalorder %v279, 15
        %vm408 = vcmp.lt.s32.totalorder %v280, 15
        %vm409 = vcmp.lt.s32.totalorder %v281, 15
        %vm410 = vcmp.lt.s32.totalorder %v282, 15
        %vm411 = vcmp.lt.s32.totalorder %v283, 15
        %vm412 = vcmp.lt.s32.totalorder %v284, 15
        %vm413 = vcmp.lt.s32.totalorder %v285, 15
        %vm414 = vcmp.lt.s32.totalorder %v286, 15
        %vm415 = vcmp.lt.s32.totalorder %v287, 15
        %v416 = vsel %vm384, 1, 0
        %v417 = vsel %vm385, 1, 0
        %v418 = vsel %vm386, 1, 0
        %v419 = vsel %vm387, 1, 0
        %v420 = vsel %vm388, 1, 0
        %v421 = vsel %vm389, 1, 0
        %v422 = vsel %vm390, 1, 0
        %v423 = vsel %vm391, 1, 0
        %v424 = vsel %vm392, 1, 0
        %v425 = vsel %vm393, 1, 0
        %v426 = vsel %vm394, 1, 0
        %v427 = vsel %vm395, 1, 0
        %v428 = vsel %vm396, 1, 0
        %v429 = vsel %vm397, 1, 0
        %v430 = vsel %vm398, 1, 0
        %v431 = vsel %vm399, 1, 0
        %v432 = vsel %vm400, 1, 0
        %v433 = vsel %vm401, 1, 0
        %v434 = vsel %vm402, 1, 0
        %v435 = vsel %vm403, 1, 0
        %v436 = vsel %vm404, 1, 0
        %v437 = vsel %vm405, 1, 0
        %v438 = vsel %vm406, 1, 0
        %v439 = vsel %vm407, 1, 0
        %v440 = vsel %vm408, 1, 0
        %v441 = vsel %vm409, 1, 0
        %v442 = vsel %vm410, 1, 0
        %v443 = vsel %vm411, 1, 0
        %v444 = vsel %vm412, 1, 0
        %v445 = vsel %vm413, 1, 0
        %v446 = vsel %vm414, 1, 0
        %v447 = vsel %vm415, 1, 0
        %v448 = vcvt.s32.f32 %v416
        %v449 = vcvt.s32.f32 %v417
        %v450 = vcvt.s32.f32 %v418
        %v451 = vcvt.s32.f32 %v419
        %v452 = vcvt.s32.f32 %v420
        %v453 = vcvt.s32.f32 %v421
        %v454 = vcvt.s32.f32 %v422
        %v455 = vcvt.s32.f32 %v423
        %v456 = vcvt.s32.f32 %v424
        %v457 = vcvt.s32.f32 %v425
        %v458 = vcvt.s32.f32 %v426
        %v459 = vcvt.s32.f32 %v427
        %v460 = vcvt.s32.f32 %v428
        %v461 = vcvt.s32.f32 %v429
        %v462 = vcvt.s32.f32 %v430
        %v463 = vcvt.s32.f32 %v431
        %v464 = vcvt.s32.f32 %v432
        %v465 = vcvt.s32.f32 %v433
        %v466 = vcvt.s32.f32 %v434
        %v467 = vcvt.s32.f32 %v435
        %v468 = vcvt.s32.f32 %v436
        %v469 = vcvt.s32.f32 %v437
        %v470 = vcvt.s32.f32 %v438
        %v471 = vcvt.s32.f32 %v439
        %v472 = vcvt.s32.f32 %v440
        %v473 = vcvt.s32.f32 %v441
        %v474 = vcvt.s32.f32 %v442
        %v475 = vcvt.s32.f32 %v443
        %v476 = vcvt.s32.f32 %v444
        %v477 = vcvt.s32.f32 %v445
        %v478 = vcvt.s32.f32 %v446
        %v479 = vcvt.s32.f32 %v447
        %v480 = vlaneseq
        %v481 = vshrl.u32 %v480, 7
        %v482 = vadd.s32 %v481, 8
        %v483 = vadd.s32 %v481, 16
        %v484 = vadd.s32 %v481, 24
        %v485 = vadd.s32 %v481, 32
        %v486 = vadd.s32 %v481, 40
        %v487 = vadd.s32 %v481, 48
        %v488 = vadd.s32 %v481, 56
        %v489 = vadd.s32 %v481, 64
        %v490 = vadd.s32 %v481, 72
        %v491 = vadd.s32 %v481, 80
        %v492 = vadd.s32 %v481, 88
        %v493 = vadd.s32 %v481, 96
        %v494 = vadd.s32 %v481, 104
        %v495 = vadd.s32 %v481, 112
        %v496 = vadd.s32 %v481, 120
        %v497 = vadd.s32 %v481, 128
        %v498 = vadd.s32 %v481, 136
        %v499 = vadd.s32 %v481, 144
        %v500 = vadd.s32 %v481, 152
        %v501 = vadd.s32 %v481, 160
        %v502 = vadd.s32 %v481, 168
        %v503 = vadd.s32 %v481, 176
        %v504 = vadd.s32 %v481, 184
        %v505 = vadd.s32 %v481, 192
        %v506 = vadd.s32 %v481, 200
        %v507 = vadd.s32 %v481, 208
        %v508 = vadd.s32 %v481, 216
        %v509 = vadd.s32 %v481, 224
        %v510 = vadd.s32 %v481, 232
        %v511 = vadd.s32 %v481, 240
        %v512 = vadd.s32 %v481, 248
        %vm513 = vcmp.ge.s32.totalorder %v481, 16
        %vm514 = vcmp.ge.s32.totalorder %v482, 16
        %vm515 = vcmp.ge.s32.totalorder %v483, 16
        %vm516 = vcmp.ge.s32.totalorder %v484, 16
        %vm517 = vcmp.ge.s32.totalorder %v485, 16
        %vm518 = vcmp.ge.s32.totalorder %v486, 16
        %vm519 = vcmp.ge.s32.totalorder %v487, 16
        %vm520 = vcmp.ge.s32.totalorder %v488, 16
        %vm521 = vcmp.ge.s32.totalorder %v489, 16
        %vm522 = vcmp.ge.s32.totalorder %v490, 16
        %vm523 = vcmp.ge.s32.totalorder %v491, 16
        %vm524 = vcmp.ge.s32.totalorder %v492, 16
        %vm525 = vcmp.ge.s32.totalorder %v493, 16
        %vm526 = vcmp.ge.s32.totalorder %v494, 16
        %vm527 = vcmp.ge.s32.totalorder %v495, 16
        %vm528 = vcmp.ge.s32.totalorder %v496, 16
        %vm529 = vcmp.ge.s32.totalorder %v497, 16
        %vm530 = vcmp.ge.s32.totalorder %v498, 16
        %vm531 = vcmp.ge.s32.totalorder %v499, 16
        %vm532 = vcmp.ge.s32.totalorder %v500, 16
        %vm533 = vcmp.ge.s32.totalorder %v501, 16
        %vm534 = vcmp.ge.s32.totalorder %v502, 16
        %vm535 = vcmp.ge.s32.totalorder %v503, 16
        %vm536 = vcmp.ge.s32.totalorder %v504, 16
        %vm537 = vcmp.ge.s32.totalorder %v505, 16
        %vm538 = vcmp.ge.s32.totalorder %v506, 16
        %vm539 = vcmp.ge.s32.totalorder %v507, 16
        %vm540 = vcmp.ge.s32.totalorder %v508, 16
        %vm541 = vcmp.ge.s32.totalorder %v509, 16
        %vm542 = vcmp.ge.s32.totalorder %v510, 16
        %vm543 = vcmp.ge.s32.totalorder %v511, 16
        %vm544 = vcmp.ge.s32.totalorder %v512, 16
        %v545 = vsel %vm513, 1, 0
        %v546 = vsel %vm514, 1, 0
        %v547 = vsel %vm515, 1, 0
        %v548 = vsel %vm516, 1, 0
        %v549 = vsel %vm517, 1, 0
        %v550 = vsel %vm518, 1, 0
        %v551 = vsel %vm519, 1, 0
        %v552 = vsel %vm520, 1, 0
        %v553 = vsel %vm521, 1, 0
        %v554 = vsel %vm522, 1, 0
        %v555 = vsel %vm523, 1, 0
        %v556 = vsel %vm524, 1, 0
        %v557 = vsel %vm525, 1, 0
        %v558 = vsel %vm526, 1, 0
        %v559 = vsel %vm527, 1, 0
        %v560 = vsel %vm528, 1, 0
        %v561 = vsel %vm529, 1, 0
        %v562 = vsel %vm530, 1, 0
        %v563 = vsel %vm531, 1, 0
        %v564 = vsel %vm532, 1, 0
        %v565 = vsel %vm533, 1, 0
        %v566 = vsel %vm534, 1, 0
        %v567 = vsel %vm535, 1, 0
        %v568 = vsel %vm536, 1, 0
        %v569 = vsel %vm537, 1, 0
        %v570 = vsel %vm538, 1, 0
        %v571 = vsel %vm539, 1, 0
        %v572 = vsel %vm540, 1, 0
        %v573 = vsel %vm541, 1, 0
        %v574 = vsel %vm542, 1, 0
        %v575 = vsel %vm543, 1, 0
        %v576 = vsel %vm544, 1, 0
        %v577 = vcvt.s32.f32 %v545
        %v578 = vcvt.s32.f32 %v546
        %v579 = vcvt.s32.f32 %v547
        %v580 = vcvt.s32.f32 %v548
        %v581 = vcvt.s32.f32 %v549
        %v582 = vcvt.s32.f32 %v550
        %v583 = vcvt.s32.f32 %v551
        %v584 = vcvt.s32.f32 %v552
        %v585 = vcvt.s32.f32 %v553
        %v586 = vcvt.s32.f32 %v554
        %v587 = vcvt.s32.f32 %v555
        %v588 = vcvt.s32.f32 %v556
        %v589 = vcvt.s32.f32 %v557
        %v590 = vcvt.s32.f32 %v558
        %v591 = vcvt.s32.f32 %v559
        %v592 = vcvt.s32.f32 %v560
        %v593 = vcvt.s32.f32 %v561
        %v594 = vcvt.s32.f32 %v562
        %v595 = vcvt.s32.f32 %v563
        %v596 = vcvt.s32.f32 %v564
        %v597 = vcvt.s32.f32 %v565
        %v598 = vcvt.s32.f32 %v566
        %v599 = vcvt.s32.f32 %v567
        %v600 = vcvt.s32.f32 %v568
        %v601 = vcvt.s32.f32 %v569
        %v602 = vcvt.s32.f32 %v570
        %v603 = vcvt.s32.f32 %v571
        %v604 = vcvt.s32.f32 %v572
        %v605 = vcvt.s32.f32 %v573
        %v606 = vcvt.s32.f32 %v574
        %v607 = vcvt.s32.f32 %v575
        %v608 = vcvt.s32.f32 %v576
        %vm609 = vcmp.lt.s32.totalorder %v481, 240
        %vm610 = vcmp.lt.s32.totalorder %v482, 240
        %vm611 = vcmp.lt.s32.totalorder %v483, 240
        %vm612 = vcmp.lt.s32.totalorder %v484, 240
        %vm613 = vcmp.lt.s32.totalorder %v485, 240
        %vm614 = vcmp.lt.s32.totalorder %v486, 240
        %vm615 = vcmp.lt.s32.totalorder %v487, 240
        %vm616 = vcmp.lt.s32.totalorder %v488, 240
        %vm617 = vcmp.lt.s32.totalorder %v489, 240
        %vm618 = vcmp.lt.s32.totalorder %v490, 240
        %vm619 = vcmp.lt.s32.totalorder %v491, 240
        %vm620 = vcmp.lt.s32.totalorder %v492, 240
        %vm621 = vcmp.lt.s32.totalorder %v493, 240
        %vm622 = vcmp.lt.s32.totalorder %v494, 240
        %vm623 = vcmp.lt.s32.totalorder %v495, 240
        %vm624 = vcmp.lt.s32.totalorder %v496, 240
        %vm625 = vcmp.lt.s32.totalorder %v497, 240
        %vm626 = vcmp.lt.s32.totalorder %v498, 240
        %vm627 = vcmp.lt.s32.totalorder %v499, 240
        %vm628 = vcmp.lt.s32.totalorder %v500, 240
        %vm629 = vcmp.lt.s32.totalorder %v501, 240
        %vm630 = vcmp.lt.s32.totalorder %v502, 240
        %vm631 = vcmp.lt.s32.totalorder %v503, 240
        %vm632 = vcmp.lt.s32.totalorder %v504, 240
        %vm633 = vcmp.lt.s32.totalorder %v505, 240
        %vm634 = vcmp.lt.s32.totalorder %v506, 240
        %vm635 = vcmp.lt.s32.totalorder %v507, 240
        %vm636 = vcmp.lt.s32.totalorder %v508, 240
        %vm637 = vcmp.lt.s32.totalorder %v509, 240
        %vm638 = vcmp.lt.s32.totalorder %v510, 240
        %vm639 = vcmp.lt.s32.totalorder %v511, 240
        %vm640 = vcmp.lt.s32.totalorder %v512, 240
        %v641 = vsel %vm609, 1, 0
        %v642 = vsel %vm610, 1, 0
        %v643 = vsel %vm611, 1, 0
        %v644 = vsel %vm612, 1, 0
        %v645 = vsel %vm613, 1, 0
        %v646 = vsel %vm614, 1, 0
        %v647 = vsel %vm615, 1, 0
        %v648 = vsel %vm616, 1, 0
        %v649 = vsel %vm617, 1, 0
        %v650 = vsel %vm618, 1, 0
        %v651 = vsel %vm619, 1, 0
        %v652 = vsel %vm620, 1, 0
        %v653 = vsel %vm621, 1, 0
        %v654 = vsel %vm622, 1, 0
        %v655 = vsel %vm623, 1, 0
        %v656 = vsel %vm624, 1, 0
        %v657 = vsel %vm625, 1, 0
        %v658 = vsel %vm626, 1, 0
        %v659 = vsel %vm627, 1, 0
        %v660 = vsel %vm628, 1, 0
        %v661 = vsel %vm629, 1, 0
        %v662 = vsel %vm630, 1, 0
        %v663 = vsel %vm631, 1, 0
        %v664 = vsel %vm632, 1, 0
        %v665 = vsel %vm633, 1, 0
        %v666 = vsel %vm634, 1, 0
        %v667 = vsel %vm635, 1, 0
        %v668 = vsel %vm636, 1, 0
        %v669 = vsel %vm637, 1, 0
        %v670 = vsel %vm638, 1, 0
        %v671 = vsel %vm639, 1, 0
        %v672 = vsel %vm640, 1, 0
        %v673 = vcvt.s32.f32 %v641
        %v674 = vcvt.s32.f32 %v642
        %v675 = vcvt.s32.f32 %v643
        %v676 = vcvt.s32.f32 %v644
        %v677 = vcvt.s32.f32 %v645
        %v678 = vcvt.s32.f32 %v646
        %v679 = vcvt.s32.f32 %v647
        %v680 = vcvt.s32.f32 %v648
        %v681 = vcvt.s32.f32 %v649
        %v682 = vcvt.s32.f32 %v650
        %v683 = vcvt.s32.f32 %v651
        %v684 = vcvt.s32.f32 %v652
        %v685 = vcvt.s32.f32 %v653
        %v686 = vcvt.s32.f32 %v654
        %v687 = vcvt.s32.f32 %v655
        %v688 = vcvt.s32.f32 %v656
        %v689 = vcvt.s32.f32 %v657
        %v690 = vcvt.s32.f32 %v658
        %v691 = vcvt.s32.f32 %v659
        %v692 = vcvt.s32.f32 %v660
        %v693 = vcvt.s32.f32 %v661
        %v694 = vcvt.s32.f32 %v662
        %v695 = vcvt.s32.f32 %v663
        %v696 = vcvt.s32.f32 %v664
        %v697 = vcvt.s32.f32 %v665
        %v698 = vcvt.s32.f32 %v666
        %v699 = vcvt.s32.f32 %v667
        %v700 = vcvt.s32.f32 %v668
        %v701 = vcvt.s32.f32 %v669
        %v702 = vcvt.s32.f32 %v670
        %v703 = vcvt.s32.f32 %v671
        %v704 = vcvt.s32.f32 %v672
        %v705 = vrot.slane %v222, 7
        %v706 = vrot.slane %v223, 7
        %v707 = vrot.slane %v224, 7
        %v708 = vrot.slane %v225, 7
        %v709 = vrot.slane %v226, 7
        %v710 = vrot.slane %v227, 7
        %v711 = vrot.slane %v228, 7
        %v712 = vrot.slane %v229, 7
        %v713 = vrot.slane %v230, 7
        %v714 = vrot.slane %v231, 7
        %v715 = vrot.slane %v232, 7
        %v716 = vrot.slane %v233, 7
        %v717 = vrot.slane %v234, 7
        %v718 = vrot.slane %v235, 7
        %v719 = vrot.slane %v236, 7
        %v720 = vrot.slane %v237, 7
        %v721 = vrot.slane %v238, 7
        %v722 = vrot.slane %v239, 7
        %v723 = vrot.slane %v240, 7
        %v724 = vrot.slane %v241, 7
        %v725 = vrot.slane %v242, 7
        %v726 = vrot.slane %v243, 7
        %v727 = vrot.slane %v244, 7
        %v728 = vrot.slane %v245, 7
        %v729 = vrot.slane %v246, 7
        %v730 = vrot.slane %v247, 7
        %v731 = vrot.slane %v248, 7
        %v732 = vrot.slane %v249, 7
        %v733 = vrot.slane %v250, 7
        %v734 = vrot.slane %v251, 7
        %v735 = vrot.slane %v252, 7
        %v736 = vrot.slane %v253, 7
        %vm737 = vcmp.lt.s32.totalorder %v481, 1
        %v738 = vsel %vm737, %v735, %v736
        %v739 = vsel %vm737, %v734, %v735
        %v740 = vsel %vm737, %v733, %v734
        %v741 = vsel %vm737, %v732, %v733
        %v742 = vsel %vm737, %v731, %v732
        %v743 = vsel %vm737, %v730, %v731
        %v744 = vsel %vm737, %v729, %v730
        %v745 = vsel %vm737, %v728, %v729
        %v746 = vsel %vm737, %v727, %v728
        %v747 = vsel %vm737, %v726, %v727
        %v748 = vsel %vm737, %v725, %v726
        %v749 = vsel %vm737, %v724, %v725
        %v750 = vsel %vm737, %v723, %v724
        %v751 = vsel %vm737, %v722, %v723
        %v752 = vsel %vm737, %v721, %v722
        %v753 = vsel %vm737, %v720, %v721
        %v754 = vsel %vm737, %v719, %v720
        %v755 = vsel %vm737, %v718, %v719
        %v756 = vsel %vm737, %v717, %v718
        %v757 = vsel %vm737, %v716, %v717
        %v758 = vsel %vm737, %v715, %v716
        %v759 = vsel %vm737, %v714, %v715
        %v760 = vsel %vm737, %v713, %v714
        %v761 = vsel %vm737, %v712, %v713
        %v762 = vsel %vm737, %v711, %v712
        %v763 = vsel %vm737, %v710, %v711
        %v764 = vsel %vm737, %v709, %v710
        %v765 = vsel %vm737, %v708, %v709
        %v766 = vsel %vm737, %v707, %v708
        %v767 = vsel %vm737, %v706, %v707
        %v768 = vsel %vm737, %v705, %v706
        %v769 = vsel %vm737, %v736, %v705
        %771 = vset.pattern.permute.xlu0 0
        %772 = vperm.xlu0 %771, %v352
        %v773 = vpop.permute.xlu0 %772
        %776 = vset.pattern.permute.xlu0 0
        %777 = vperm.xlu0 %776, %v353
        %v778 = vpop.permute.xlu0 %777
        %781 = vset.pattern.permute.xlu0 0
        %782 = vperm.xlu0 %781, %v354
        %v783 = vpop.permute.xlu0 %782
        %786 = vset.pattern.permute.xlu0 0
        %787 = vperm.xlu0 %786, %v355
        %v788 = vpop.permute.xlu0 %787
        %791 = vset.pattern.permute.xlu0 0
        %792 = vperm.xlu0 %791, %v356
        %v793 = vpop.permute.xlu0 %792
        %796 = vset.pattern.permute.xlu0 0
        %797 = vperm.xlu0 %796, %v357
        %v798 = vpop.permute.xlu0 %797
        %801 = vset.pattern.permute.xlu0 0
        %802 = vperm.xlu0 %801, %v358
        %v803 = vpop.permute.xlu0 %802
        %806 = vset.pattern.permute.xlu0 0
        %807 = vperm.xlu0 %806, %v359
        %v808 = vpop.permute.xlu0 %807
        %811 = vset.pattern.permute.xlu0 0
        %812 = vperm.xlu0 %811, %v360
        %v813 = vpop.permute.xlu0 %812
        %816 = vset.pattern.permute.xlu0 0
        %817 = vperm.xlu0 %816, %v361
        %v818 = vpop.permute.xlu0 %817
        %821 = vset.pattern.permute.xlu0 0
        %822 = vperm.xlu0 %821, %v362
        %v823 = vpop.permute.xlu0 %822
        %826 = vset.pattern.permute.xlu0 0
        %827 = vperm.xlu0 %826, %v363
        %v828 = vpop.permute.xlu0 %827
        %831 = vset.pattern.permute.xlu0 0
        %832 = vperm.xlu0 %831, %v364
        %v833 = vpop.permute.xlu0 %832
        %836 = vset.pattern.permute.xlu0 0
        %837 = vperm.xlu0 %836, %v365
        %v838 = vpop.permute.xlu0 %837
        %841 = vset.pattern.permute.xlu0 0
        %842 = vperm.xlu0 %841, %v366
        %v843 = vpop.permute.xlu0 %842
        %846 = vset.pattern.permute.xlu0 0
        %847 = vperm.xlu0 %846, %v367
        %v848 = vpop.permute.xlu0 %847
        %851 = vset.pattern.permute.xlu0 0
        %852 = vperm.xlu0 %851, %v368
        %v853 = vpop.permute.xlu0 %852
        %856 = vset.pattern.permute.xlu0 0
        %857 = vperm.xlu0 %856, %v369
        %v858 = vpop.permute.xlu0 %857
        %861 = vset.pattern.permute.xlu0 0
        %862 = vperm.xlu0 %861, %v370
        %v863 = vpop.permute.xlu0 %862
        %866 = vset.pattern.permute.xlu0 0
        %867 = vperm.xlu0 %866, %v371
        %v868 = vpop.permute.xlu0 %867
        %871 = vset.pattern.permute.xlu0 0
        %872 = vperm.xlu0 %871, %v372
        %v873 = vpop.permute.xlu0 %872
        %876 = vset.pattern.permute.xlu0 0
        %877 = vperm.xlu0 %876, %v373
        %v878 = vpop.permute.xlu0 %877
        %881 = vset.pattern.permute.xlu0 0
        %882 = vperm.xlu0 %881, %v374
        %v883 = vpop.permute.xlu0 %882
        %886 = vset.pattern.permute.xlu0 0
        %887 = vperm.xlu0 %886, %v375
        %v888 = vpop.permute.xlu0 %887
        %891 = vset.pattern.permute.xlu0 0
        %892 = vperm.xlu0 %891, %v376
        %v893 = vpop.permute.xlu0 %892
        %896 = vset.pattern.permute.xlu0 0
        %897 = vperm.xlu0 %896, %v377
        %v898 = vpop.permute.xlu0 %897
        %901 = vset.pattern.permute.xlu0 0
        %902 = vperm.xlu0 %901, %v378
        %v903 = vpop.permute.xlu0 %902
        %906 = vset.pattern.permute.xlu0 0
        %907 = vperm.xlu0 %906, %v379
        %v908 = vpop.permute.xlu0 %907
        %911 = vset.pattern.permute.xlu0 0
        %912 = vperm.xlu0 %911, %v380
        %v913 = vpop.permute.xlu0 %912
        %916 = vset.pattern.permute.xlu0 0
        %917 = vperm.xlu0 %916, %v381
        %v918 = vpop.permute.xlu0 %917
        %921 = vset.pattern.permute.xlu0 0
        %922 = vperm.xlu0 %921, %v382
        %v923 = vpop.permute.xlu0 %922
        %926 = vset.pattern.permute.xlu0 0
        %927 = vperm.xlu0 %926, %v383
        %v928 = vpop.permute.xlu0 %927
        %v930 = vmul.f32 %v769, %v773
        %v931 = vmul.f32 %v768, %v778
        %v932 = vmul.f32 %v767, %v783
        %v933 = vmul.f32 %v766, %v788
        %v934 = vmul.f32 %v765, %v793
        %v935 = vmul.f32 %v764, %v798
        %v936 = vmul.f32 %v763, %v803
        %v937 = vmul.f32 %v762, %v808
        %v938 = vmul.f32 %v761, %v813
        %v939 = vmul.f32 %v760, %v818
        %v940 = vmul.f32 %v759, %v823
        %v941 = vmul.f32 %v758, %v828
        %v942 = vmul.f32 %v757, %v833
        %v943 = vmul.f32 %v756, %v838
        %v944 = vmul.f32 %v755, %v843
        %v945 = vmul.f32 %v754, %v848
        %v946 = vmul.f32 %v753, %v853
        %v947 = vmul.f32 %v752, %v858
        %v948 = vmul.f32 %v751, %v863
        %v949 = vmul.f32 %v750, %v868
        %v950 = vmul.f32 %v749, %v873
        %v951 = vmul.f32 %v748, %v878
        %v952 = vmul.f32 %v747, %v883
        %v953 = vmul.f32 %v746, %v888
        %v954 = vmul.f32 %v745, %v893
        %v955 = vmul.f32 %v744, %v898
        %v956 = vmul.f32 %v743, %v903
        %v957 = vmul.f32 %v742, %v908
        %v958 = vmul.f32 %v741, %v913
        %v959 = vmul.f32 %v740, %v918
        %v960 = vmul.f32 %v739, %v923
        %v961 = vmul.f32 %v738, %v928
        %v962 = vrot.slane %v222, 1
        %v963 = vrot.slane %v223, 1
        %v964 = vrot.slane %v224, 1
        %v965 = vrot.slane %v225, 1
        %v966 = vrot.slane %v226, 1
        %v967 = vrot.slane %v227, 1
        %v968 = vrot.slane %v228, 1
        %v969 = vrot.slane %v229, 1
        %v970 = vrot.slane %v230, 1
        %v971 = vrot.slane %v231, 1
        %v972 = vrot.slane %v232, 1
        %v973 = vrot.slane %v233, 1
        %v974 = vrot.slane %v234, 1
        %v975 = vrot.slane %v235, 1
        %v976 = vrot.slane %v236, 1
        %v977 = vrot.slane %v237, 1
        %v978 = vrot.slane %v238, 1
        %v979 = vrot.slane %v239, 1
        %v980 = vrot.slane %v240, 1
        %v981 = vrot.slane %v241, 1
        %v982 = vrot.slane %v242, 1
        %v983 = vrot.slane %v243, 1
        %v984 = vrot.slane %v244, 1
        %v985 = vrot.slane %v245, 1
        %v986 = vrot.slane %v246, 1
        %v987 = vrot.slane %v247, 1
        %v988 = vrot.slane %v248, 1
        %v989 = vrot.slane %v249, 1
        %v990 = vrot.slane %v250, 1
        %v991 = vrot.slane %v251, 1
        %v992 = vrot.slane %v252, 1
        %v993 = vrot.slane %v253, 1
        %vm994 = vcmp.lt.s32.totalorder %v481, 7
        %v995 = vsel %vm994, %v992, %v993
        %v996 = vsel %vm994, %v991, %v992
        %v997 = vsel %vm994, %v990, %v991
        %v998 = vsel %vm994, %v989, %v990
        %v999 = vsel %vm994, %v988, %v989
        %v1000 = vsel %vm994, %v987, %v988
        %v1001 = vsel %vm994, %v986, %v987
        %v1002 = vsel %vm994, %v985, %v986
        %v1003 = vsel %vm994, %v984, %v985
        %v1004 = vsel %vm994, %v983, %v984
        %v1005 = vsel %vm994, %v982, %v983
        %v1006 = vsel %vm994, %v981, %v982
        %v1007 = vsel %vm994, %v980, %v981
        %v1008 = vsel %vm994, %v979, %v980
        %v1009 = vsel %vm994, %v978, %v979
        %v1010 = vsel %vm994, %v977, %v978
        %v1011 = vsel %vm994, %v976, %v977
        %v1012 = vsel %vm994, %v975, %v976
        %v1013 = vsel %vm994, %v974, %v975
        %v1014 = vsel %vm994, %v973, %v974
        %v1015 = vsel %vm994, %v972, %v973
        %v1016 = vsel %vm994, %v971, %v972
        %v1017 = vsel %vm994, %v970, %v971
        %v1018 = vsel %vm994, %v969, %v970
        %v1019 = vsel %vm994, %v968, %v969
        %v1020 = vsel %vm994, %v967, %v968
        %v1021 = vsel %vm994, %v966, %v967
        %v1022 = vsel %vm994, %v965, %v966
        %v1023 = vsel %vm994, %v964, %v965
        %v1024 = vsel %vm994, %v963, %v964
        %v1025 = vsel %vm994, %v962, %v963
        %v1026 = vsel %vm994, %v993, %v962
        %1028 = vset.pattern.permute.xlu0 0
        %1029 = vperm.xlu0 %1028, %v448
        %v1030 = vpop.permute.xlu0 %1029
        %1033 = vset.pattern.permute.xlu0 0
        %1034 = vperm.xlu0 %1033, %v449
        %v1035 = vpop.permute.xlu0 %1034
        %1038 = vset.pattern.permute.xlu0 0
        %1039 = vperm.xlu0 %1038, %v450
        %v1040 = vpop.permute.xlu0 %1039
        %1043 = vset.pattern.permute.xlu0 0
        %1044 = vperm.xlu0 %1043, %v451
        %v1045 = vpop.permute.xlu0 %1044
        %1048 = vset.pattern.permute.xlu0 0
        %1049 = vperm.xlu0 %1048, %v452
        %v1050 = vpop.permute.xlu0 %1049
        %1053 = vset.pattern.permute.xlu0 0
        %1054 = vperm.xlu0 %1053, %v453
        %v1055 = vpop.permute.xlu0 %1054
        %1058 = vset.pattern.permute.xlu0 0
        %1059 = vperm.xlu0 %1058, %v454
        %v1060 = vpop.permute.xlu0 %1059
        %1063 = vset.pattern.permute.xlu0 0
        %1064 = vperm.xlu0 %1063, %v455
        %v1065 = vpop.permute.xlu0 %1064
        %1068 = vset.pattern.permute.xlu0 0
        %1069 = vperm.xlu0 %1068, %v456
        %v1070 = vpop.permute.xlu0 %1069
        %1073 = vset.pattern.permute.xlu0 0
        %1074 = vperm.xlu0 %1073, %v457
        %v1075 = vpop.permute.xlu0 %1074
        %1078 = vset.pattern.permute.xlu0 0
        %1079 = vperm.xlu0 %1078, %v458
        %v1080 = vpop.permute.xlu0 %1079
        %1083 = vset.pattern.permute.xlu0 0
        %1084 = vperm.xlu0 %1083, %v459
        %v1085 = vpop.permute.xlu0 %1084
        %1088 = vset.pattern.permute.xlu0 0
        %1089 = vperm.xlu0 %1088, %v460
        %v1090 = vpop.permute.xlu0 %1089
        %1093 = vset.pattern.permute.xlu0 0
        %1094 = vperm.xlu0 %1093, %v461
        %v1095 = vpop.permute.xlu0 %1094
        %1098 = vset.pattern.permute.xlu0 0
        %1099 = vperm.xlu0 %1098, %v462
        %v1100 = vpop.permute.xlu0 %1099
        %1103 = vset.pattern.permute.xlu0 0
        %1104 = vperm.xlu0 %1103, %v463
        %v1105 = vpop.permute.xlu0 %1104
        %1108 = vset.pattern.permute.xlu0 0
        %1109 = vperm.xlu0 %1108, %v464
        %v1110 = vpop.permute.xlu0 %1109
        %1113 = vset.pattern.permute.xlu0 0
        %1114 = vperm.xlu0 %1113, %v465
        %v1115 = vpop.permute.xlu0 %1114
        %1118 = vset.pattern.permute.xlu0 0
        %1119 = vperm.xlu0 %1118, %v466
        %v1120 = vpop.permute.xlu0 %1119
        %1123 = vset.pattern.permute.xlu0 0
        %1124 = vperm.xlu0 %1123, %v467
        %v1125 = vpop.permute.xlu0 %1124
        %1128 = vset.pattern.permute.xlu0 0
        %1129 = vperm.xlu0 %1128, %v468
        %v1130 = vpop.permute.xlu0 %1129
        %1133 = vset.pattern.permute.xlu0 0
        %1134 = vperm.xlu0 %1133, %v469
        %v1135 = vpop.permute.xlu0 %1134
        %1138 = vset.pattern.permute.xlu0 0
        %1139 = vperm.xlu0 %1138, %v470
        %v1140 = vpop.permute.xlu0 %1139
        %1143 = vset.pattern.permute.xlu0 0
        %1144 = vperm.xlu0 %1143, %v471
        %v1145 = vpop.permute.xlu0 %1144
        %1148 = vset.pattern.permute.xlu0 0
        %1149 = vperm.xlu0 %1148, %v472
        %v1150 = vpop.permute.xlu0 %1149
        %1153 = vset.pattern.permute.xlu0 0
        %1154 = vperm.xlu0 %1153, %v473
        %v1155 = vpop.permute.xlu0 %1154
        %1158 = vset.pattern.permute.xlu0 0
        %1159 = vperm.xlu0 %1158, %v474
        %v1160 = vpop.permute.xlu0 %1159
        %1163 = vset.pattern.permute.xlu0 0
        %1164 = vperm.xlu0 %1163, %v475
        %v1165 = vpop.permute.xlu0 %1164
        %1168 = vset.pattern.permute.xlu0 0
        %1169 = vperm.xlu0 %1168, %v476
        %v1170 = vpop.permute.xlu0 %1169
        %1173 = vset.pattern.permute.xlu0 0
        %1174 = vperm.xlu0 %1173, %v477
        %v1175 = vpop.permute.xlu0 %1174
        %1178 = vset.pattern.permute.xlu0 0
        %1179 = vperm.xlu0 %1178, %v478
        %v1180 = vpop.permute.xlu0 %1179
        %1183 = vset.pattern.permute.xlu0 0
        %1184 = vperm.xlu0 %1183, %v479
        %v1185 = vpop.permute.xlu0 %1184
        %v1187 = vmul.f32 %v1025, %v1030
        %v1188 = vmul.f32 %v1024, %v1035
        %v1189 = vmul.f32 %v1023, %v1040
        %v1190 = vmul.f32 %v1022, %v1045
        %v1191 = vmul.f32 %v1021, %v1050
        %v1192 = vmul.f32 %v1020, %v1055
        %v1193 = vmul.f32 %v1019, %v1060
        %v1194 = vmul.f32 %v1018, %v1065
        %v1195 = vmul.f32 %v1017, %v1070
        %v1196 = vmul.f32 %v1016, %v1075
        %v1197 = vmul.f32 %v1015, %v1080
        %v1198 = vmul.f32 %v1014, %v1085
        %v1199 = vmul.f32 %v1013, %v1090
        %v1200 = vmul.f32 %v1012, %v1095
        %v1201 = vmul.f32 %v1011, %v1100
        %v1202 = vmul.f32 %v1010, %v1105
        %v1203 = vmul.f32 %v1009, %v1110
        %v1204 = vmul.f32 %v1008, %v1115
        %v1205 = vmul.f32 %v1007, %v1120
        %v1206 = vmul.f32 %v1006, %v1125
        %v1207 = vmul.f32 %v1005, %v1130
        %v1208 = vmul.f32 %v1004, %v1135
        %v1209 = vmul.f32 %v1003, %v1140
        %v1210 = vmul.f32 %v1002, %v1145
        %v1211 = vmul.f32 %v1001, %v1150
        %v1212 = vmul.f32 %v1000, %v1155
        %v1213 = vmul.f32 %v999, %v1160
        %v1214 = vmul.f32 %v998, %v1165
        %v1215 = vmul.f32 %v997, %v1170
        %v1216 = vmul.f32 %v996, %v1175
        %v1217 = vmul.f32 %v995, %v1180
        %v1218 = vmul.f32 %v1026, %v1185
        %v1219 = vperm.slane %v254, 3
        %v1220 = vmul.f32 %v930, %v1219
        %v1221 = vmul.f32 %v931, %v1219
        %v1222 = vmul.f32 %v932, %v1219
        %v1223 = vmul.f32 %v933, %v1219
        %v1224 = vmul.f32 %v934, %v1219
        %v1225 = vmul.f32 %v935, %v1219
        %v1226 = vmul.f32 %v936, %v1219
        %v1227 = vmul.f32 %v937, %v1219
        %v1228 = vmul.f32 %v938, %v1219
        %v1229 = vmul.f32 %v939, %v1219
        %v1230 = vmul.f32 %v940, %v1219
        %v1231 = vmul.f32 %v941, %v1219
        %v1232 = vmul.f32 %v942, %v1219
        %v1233 = vmul.f32 %v943, %v1219
        %v1234 = vmul.f32 %v944, %v1219
        %v1235 = vmul.f32 %v945, %v1219
        %v1236 = vmul.f32 %v946, %v1219
        %v1237 = vmul.f32 %v947, %v1219
        %v1238 = vmul.f32 %v948, %v1219
        %v1239 = vmul.f32 %v949, %v1219
        %v1240 = vmul.f32 %v950, %v1219
        %v1241 = vmul.f32 %v951, %v1219
        %v1242 = vmul.f32 %v952, %v1219
        %v1243 = vmul.f32 %v953, %v1219
        %v1244 = vmul.f32 %v954, %v1219
        %v1245 = vmul.f32 %v955, %v1219
        %v1246 = vmul.f32 %v956, %v1219
        %v1247 = vmul.f32 %v957, %v1219
        %v1248 = vmul.f32 %v958, %v1219
        %v1249 = vmul.f32 %v959, %v1219
        %v1250 = vmul.f32 %v960, %v1219
        %v1251 = vmul.f32 %v961, %v1219
        %v1252 = vperm.slane %v254, 4
        %v1253 = vmul.f32 %v222, %v1252
        %v1254 = vmul.f32 %v223, %v1252
        %v1255 = vmul.f32 %v224, %v1252
        %v1256 = vmul.f32 %v225, %v1252
        %v1257 = vmul.f32 %v226, %v1252
        %v1258 = vmul.f32 %v227, %v1252
        %v1259 = vmul.f32 %v228, %v1252
        %v1260 = vmul.f32 %v229, %v1252
        %v1261 = vmul.f32 %v230, %v1252
        %v1262 = vmul.f32 %v231, %v1252
        %v1263 = vmul.f32 %v232, %v1252
        %v1264 = vmul.f32 %v233, %v1252
        %v1265 = vmul.f32 %v234, %v1252
        %v1266 = vmul.f32 %v235, %v1252
        %v1267 = vmul.f32 %v236, %v1252
        %v1268 = vmul.f32 %v237, %v1252
        %v1269 = vmul.f32 %v238, %v1252
        %v1270 = vmul.f32 %v239, %v1252
        %v1271 = vmul.f32 %v240, %v1252
        %v1272 = vmul.f32 %v241, %v1252
        %v1273 = vmul.f32 %v242, %v1252
        %v1274 = vmul.f32 %v243, %v1252
        %v1275 = vmul.f32 %v244, %v1252
        %v1276 = vmul.f32 %v245, %v1252
        %v1277 = vmul.f32 %v246, %v1252
        %v1278 = vmul.f32 %v247, %v1252
        %v1279 = vmul.f32 %v248, %v1252
        %v1280 = vmul.f32 %v249, %v1252
        %v1281 = vmul.f32 %v250, %v1252
        %v1282 = vmul.f32 %v251, %v1252
        %v1283 = vmul.f32 %v252, %v1252
        %v1284 = vmul.f32 %v253, %v1252
        %v1285 = vadd.f32 %v1220, %v1253
        %v1286 = vadd.f32 %v1221, %v1254
        %v1287 = vadd.f32 %v1222, %v1255
        %v1288 = vadd.f32 %v1223, %v1256
        %v1289 = vadd.f32 %v1224, %v1257
        %v1290 = vadd.f32 %v1225, %v1258
        %v1291 = vadd.f32 %v1226, %v1259
        %v1292 = vadd.f32 %v1227, %v1260
        %v1293 = vadd.f32 %v1228, %v1261
        %v1294 = vadd.f32 %v1229, %v1262
        %v1295 = vadd.f32 %v1230, %v1263
        %v1296 = vadd.f32 %v1231, %v1264
        %v1297 = vadd.f32 %v1232, %v1265
        %v1298 = vadd.f32 %v1233, %v1266
        %v1299 = vadd.f32 %v1234, %v1267
        %v1300 = vadd.f32 %v1235, %v1268
        %v1301 = vadd.f32 %v1236, %v1269
        %v1302 = vadd.f32 %v1237, %v1270
        %v1303 = vadd.f32 %v1238, %v1271
        %v1304 = vadd.f32 %v1239, %v1272
        %v1305 = vadd.f32 %v1240, %v1273
        %v1306 = vadd.f32 %v1241, %v1274
        %v1307 = vadd.f32 %v1242, %v1275
        %v1308 = vadd.f32 %v1243, %v1276
        %v1309 = vadd.f32 %v1244, %v1277
        %v1310 = vadd.f32 %v1245, %v1278
        %v1311 = vadd.f32 %v1246, %v1279
        %v1312 = vadd.f32 %v1247, %v1280
        %v1313 = vadd.f32 %v1248, %v1281
        %v1314 = vadd.f32 %v1249, %v1282
        %v1315 = vadd.f32 %v1250, %v1283
        %v1316 = vadd.f32 %v1251, %v1284
        %v1317 = vperm.slane %v254, 5
        %v1318 = vmul.f32 %v1187, %v1317
        %v1319 = vmul.f32 %v1188, %v1317
        %v1320 = vmul.f32 %v1189, %v1317
        %v1321 = vmul.f32 %v1190, %v1317
        %v1322 = vmul.f32 %v1191, %v1317
        %v1323 = vmul.f32 %v1192, %v1317
        %v1324 = vmul.f32 %v1193, %v1317
        %v1325 = vmul.f32 %v1194, %v1317
        %v1326 = vmul.f32 %v1195, %v1317
        %v1327 = vmul.f32 %v1196, %v1317
        %v1328 = vmul.f32 %v1197, %v1317
        %v1329 = vmul.f32 %v1198, %v1317
        %v1330 = vmul.f32 %v1199, %v1317
        %v1331 = vmul.f32 %v1200, %v1317
        %v1332 = vmul.f32 %v1201, %v1317
        %v1333 = vmul.f32 %v1202, %v1317
        %v1334 = vmul.f32 %v1203, %v1317
        %v1335 = vmul.f32 %v1204, %v1317
        %v1336 = vmul.f32 %v1205, %v1317
        %v1337 = vmul.f32 %v1206, %v1317
        %v1338 = vmul.f32 %v1207, %v1317
        %v1339 = vmul.f32 %v1208, %v1317
        %v1340 = vmul.f32 %v1209, %v1317
        %v1341 = vmul.f32 %v1210, %v1317
        %v1342 = vmul.f32 %v1211, %v1317
        %v1343 = vmul.f32 %v1212, %v1317
        %v1344 = vmul.f32 %v1213, %v1317
        %v1345 = vmul.f32 %v1214, %v1317
        %v1346 = vmul.f32 %v1215, %v1317
        %v1347 = vmul.f32 %v1216, %v1317
        %v1348 = vmul.f32 %v1217, %v1317
        %v1349 = vmul.f32 %v1218, %v1317
        %v1350 = vadd.f32 %v1285, %v1318
        %v1351 = vadd.f32 %v1286, %v1319
        %v1352 = vadd.f32 %v1287, %v1320
        %v1353 = vadd.f32 %v1288, %v1321
        %v1354 = vadd.f32 %v1289, %v1322
        %v1355 = vadd.f32 %v1290, %v1323
        %v1356 = vadd.f32 %v1291, %v1324
        %v1357 = vadd.f32 %v1292, %v1325
        %v1358 = vadd.f32 %v1293, %v1326
        %v1359 = vadd.f32 %v1294, %v1327
        %v1360 = vadd.f32 %v1295, %v1328
        %v1361 = vadd.f32 %v1296, %v1329
        %v1362 = vadd.f32 %v1297, %v1330
        %v1363 = vadd.f32 %v1298, %v1331
        %v1364 = vadd.f32 %v1299, %v1332
        %v1365 = vadd.f32 %v1300, %v1333
        %v1366 = vadd.f32 %v1301, %v1334
        %v1367 = vadd.f32 %v1302, %v1335
        %v1368 = vadd.f32 %v1303, %v1336
        %v1369 = vadd.f32 %v1304, %v1337
        %v1370 = vadd.f32 %v1305, %v1338
        %v1371 = vadd.f32 %v1306, %v1339
        %v1372 = vadd.f32 %v1307, %v1340
        %v1373 = vadd.f32 %v1308, %v1341
        %v1374 = vadd.f32 %v1309, %v1342
        %v1375 = vadd.f32 %v1310, %v1343
        %v1376 = vadd.f32 %v1311, %v1344
        %v1377 = vadd.f32 %v1312, %v1345
        %v1378 = vadd.f32 %v1313, %v1346
        %v1379 = vadd.f32 %v1314, %v1347
        %v1380 = vadd.f32 %v1315, %v1348
        %v1381 = vadd.f32 %v1316, %v1349
        %v1382 = vperm.slane %v255, 1
        %v1383 = vadd.f32 %v1350, %v1382
        %v1384 = vadd.f32 %v1351, %v1382
        %v1385 = vadd.f32 %v1352, %v1382
        %v1386 = vadd.f32 %v1353, %v1382
        %v1387 = vadd.f32 %v1354, %v1382
        %v1388 = vadd.f32 %v1355, %v1382
        %v1389 = vadd.f32 %v1356, %v1382
        %v1390 = vadd.f32 %v1357, %v1382
        %v1391 = vadd.f32 %v1358, %v1382
        %v1392 = vadd.f32 %v1359, %v1382
        %v1393 = vadd.f32 %v1360, %v1382
        %v1394 = vadd.f32 %v1361, %v1382
        %v1395 = vadd.f32 %v1362, %v1382
        %v1396 = vadd.f32 %v1363, %v1382
        %v1397 = vadd.f32 %v1364, %v1382
        %v1398 = vadd.f32 %v1365, %v1382
        %v1399 = vadd.f32 %v1366, %v1382
        %v1400 = vadd.f32 %v1367, %v1382
        %v1401 = vadd.f32 %v1368, %v1382
        %v1402 = vadd.f32 %v1369, %v1382
        %v1403 = vadd.f32 %v1370, %v1382
        %v1404 = vadd.f32 %v1371, %v1382
        %v1405 = vadd.f32 %v1372, %v1382
        %v1406 = vadd.f32 %v1373, %v1382
        %v1407 = vadd.f32 %v1374, %v1382
        %v1408 = vadd.f32 %v1375, %v1382
        %v1409 = vadd.f32 %v1376, %v1382
        %v1410 = vadd.f32 %v1377, %v1382
        %v1411 = vadd.f32 %v1378, %v1382
        %v1412 = vadd.f32 %v1379, %v1382
        %v1413 = vadd.f32 %v1380, %v1382
        %v1414 = vadd.f32 %v1381, %v1382
        %v1415 = vperm.slane %v254, 0
        %v1416 = vmul.f32 %v930, %v1415
        %v1417 = vmul.f32 %v931, %v1415
        %v1418 = vmul.f32 %v932, %v1415
        %v1419 = vmul.f32 %v933, %v1415
        %v1420 = vmul.f32 %v934, %v1415
        %v1421 = vmul.f32 %v935, %v1415
        %v1422 = vmul.f32 %v936, %v1415
        %v1423 = vmul.f32 %v937, %v1415
        %v1424 = vmul.f32 %v938, %v1415
        %v1425 = vmul.f32 %v939, %v1415
        %v1426 = vmul.f32 %v940, %v1415
        %v1427 = vmul.f32 %v941, %v1415
        %v1428 = vmul.f32 %v942, %v1415
        %v1429 = vmul.f32 %v943, %v1415
        %v1430 = vmul.f32 %v944, %v1415
        %v1431 = vmul.f32 %v945, %v1415
        %v1432 = vmul.f32 %v946, %v1415
        %v1433 = vmul.f32 %v947, %v1415
        %v1434 = vmul.f32 %v948, %v1415
        %v1435 = vmul.f32 %v949, %v1415
        %v1436 = vmul.f32 %v950, %v1415
        %v1437 = vmul.f32 %v951, %v1415
        %v1438 = vmul.f32 %v952, %v1415
        %v1439 = vmul.f32 %v953, %v1415
        %v1440 = vmul.f32 %v954, %v1415
        %v1441 = vmul.f32 %v955, %v1415
        %v1442 = vmul.f32 %v956, %v1415
        %v1443 = vmul.f32 %v957, %v1415
        %v1444 = vmul.f32 %v958, %v1415
        %v1445 = vmul.f32 %v959, %v1415
        %v1446 = vmul.f32 %v960, %v1415
        %v1447 = vmul.f32 %v961, %v1415
        %v1448 = vperm.slane %v254, 1
        %v1449 = vmul.f32 %v222, %v1448
        %v1450 = vmul.f32 %v223, %v1448
        %v1451 = vmul.f32 %v224, %v1448
        %v1452 = vmul.f32 %v225, %v1448
        %v1453 = vmul.f32 %v226, %v1448
        %v1454 = vmul.f32 %v227, %v1448
        %v1455 = vmul.f32 %v228, %v1448
        %v1456 = vmul.f32 %v229, %v1448
        %v1457 = vmul.f32 %v230, %v1448
        %v1458 = vmul.f32 %v231, %v1448
        %v1459 = vmul.f32 %v232, %v1448
        %v1460 = vmul.f32 %v233, %v1448
        %v1461 = vmul.f32 %v234, %v1448
        %v1462 = vmul.f32 %v235, %v1448
        %v1463 = vmul.f32 %v236, %v1448
        %v1464 = vmul.f32 %v237, %v1448
        %v1465 = vmul.f32 %v238, %v1448
        %v1466 = vmul.f32 %v239, %v1448
        %v1467 = vmul.f32 %v240, %v1448
        %v1468 = vmul.f32 %v241, %v1448
        %v1469 = vmul.f32 %v242, %v1448
        %v1470 = vmul.f32 %v243, %v1448
        %v1471 = vmul.f32 %v244, %v1448
        %v1472 = vmul.f32 %v245, %v1448
        %v1473 = vmul.f32 %v246, %v1448
        %v1474 = vmul.f32 %v247, %v1448
        %v1475 = vmul.f32 %v248, %v1448
        %v1476 = vmul.f32 %v249, %v1448
        %v1477 = vmul.f32 %v250, %v1448
        %v1478 = vmul.f32 %v251, %v1448
        %v1479 = vmul.f32 %v252, %v1448
        %v1480 = vmul.f32 %v253, %v1448
        %v1481 = vadd.f32 %v1416, %v1449
        %v1482 = vadd.f32 %v1417, %v1450
        %v1483 = vadd.f32 %v1418, %v1451
        %v1484 = vadd.f32 %v1419, %v1452
        %v1485 = vadd.f32 %v1420, %v1453
        %v1486 = vadd.f32 %v1421, %v1454
        %v1487 = vadd.f32 %v1422, %v1455
        %v1488 = vadd.f32 %v1423, %v1456
        %v1489 = vadd.f32 %v1424, %v1457
        %v1490 = vadd.f32 %v1425, %v1458
        %v1491 = vadd.f32 %v1426, %v1459
        %v1492 = vadd.f32 %v1427, %v1460
        %v1493 = vadd.f32 %v1428, %v1461
        %v1494 = vadd.f32 %v1429, %v1462
        %v1495 = vadd.f32 %v1430, %v1463
        %v1496 = vadd.f32 %v1431, %v1464
        %v1497 = vadd.f32 %v1432, %v1465
        %v1498 = vadd.f32 %v1433, %v1466
        %v1499 = vadd.f32 %v1434, %v1467
        %v1500 = vadd.f32 %v1435, %v1468
        %v1501 = vadd.f32 %v1436, %v1469
        %v1502 = vadd.f32 %v1437, %v1470
        %v1503 = vadd.f32 %v1438, %v1471
        %v1504 = vadd.f32 %v1439, %v1472
        %v1505 = vadd.f32 %v1440, %v1473
        %v1506 = vadd.f32 %v1441, %v1474
        %v1507 = vadd.f32 %v1442, %v1475
        %v1508 = vadd.f32 %v1443, %v1476
        %v1509 = vadd.f32 %v1444, %v1477
        %v1510 = vadd.f32 %v1445, %v1478
        %v1511 = vadd.f32 %v1446, %v1479
        %v1512 = vadd.f32 %v1447, %v1480
        %v1513 = vperm.slane %v254, 2
        %v1514 = vmul.f32 %v1187, %v1513
        %v1515 = vmul.f32 %v1188, %v1513
        %v1516 = vmul.f32 %v1189, %v1513
        %v1517 = vmul.f32 %v1190, %v1513
        %v1518 = vmul.f32 %v1191, %v1513
        %v1519 = vmul.f32 %v1192, %v1513
        %v1520 = vmul.f32 %v1193, %v1513
        %v1521 = vmul.f32 %v1194, %v1513
        %v1522 = vmul.f32 %v1195, %v1513
        %v1523 = vmul.f32 %v1196, %v1513
        %v1524 = vmul.f32 %v1197, %v1513
        %v1525 = vmul.f32 %v1198, %v1513
        %v1526 = vmul.f32 %v1199, %v1513
        %v1527 = vmul.f32 %v1200, %v1513
        %v1528 = vmul.f32 %v1201, %v1513
        %v1529 = vmul.f32 %v1202, %v1513
        %v1530 = vmul.f32 %v1203, %v1513
        %v1531 = vmul.f32 %v1204, %v1513
        %v1532 = vmul.f32 %v1205, %v1513
        %v1533 = vmul.f32 %v1206, %v1513
        %v1534 = vmul.f32 %v1207, %v1513
        %v1535 = vmul.f32 %v1208, %v1513
        %v1536 = vmul.f32 %v1209, %v1513
        %v1537 = vmul.f32 %v1210, %v1513
        %v1538 = vmul.f32 %v1211, %v1513
        %v1539 = vmul.f32 %v1212, %v1513
        %v1540 = vmul.f32 %v1213, %v1513
        %v1541 = vmul.f32 %v1214, %v1513
        %v1542 = vmul.f32 %v1215, %v1513
        %v1543 = vmul.f32 %v1216, %v1513
        %v1544 = vmul.f32 %v1217, %v1513
        %v1545 = vmul.f32 %v1218, %v1513
        %v1546 = vadd.f32 %v1481, %v1514
        %v1547 = vadd.f32 %v1482, %v1515
        %v1548 = vadd.f32 %v1483, %v1516
        %v1549 = vadd.f32 %v1484, %v1517
        %v1550 = vadd.f32 %v1485, %v1518
        %v1551 = vadd.f32 %v1486, %v1519
        %v1552 = vadd.f32 %v1487, %v1520
        %v1553 = vadd.f32 %v1488, %v1521
        %v1554 = vadd.f32 %v1489, %v1522
        %v1555 = vadd.f32 %v1490, %v1523
        %v1556 = vadd.f32 %v1491, %v1524
        %v1557 = vadd.f32 %v1492, %v1525
        %v1558 = vadd.f32 %v1493, %v1526
        %v1559 = vadd.f32 %v1494, %v1527
        %v1560 = vadd.f32 %v1495, %v1528
        %v1561 = vadd.f32 %v1496, %v1529
        %v1562 = vadd.f32 %v1497, %v1530
        %v1563 = vadd.f32 %v1498, %v1531
        %v1564 = vadd.f32 %v1499, %v1532
        %v1565 = vadd.f32 %v1500, %v1533
        %v1566 = vadd.f32 %v1501, %v1534
        %v1567 = vadd.f32 %v1502, %v1535
        %v1568 = vadd.f32 %v1503, %v1536
        %v1569 = vadd.f32 %v1504, %v1537
        %v1570 = vadd.f32 %v1505, %v1538
        %v1571 = vadd.f32 %v1506, %v1539
        %v1572 = vadd.f32 %v1507, %v1540
        %v1573 = vadd.f32 %v1508, %v1541
        %v1574 = vadd.f32 %v1509, %v1542
        %v1575 = vadd.f32 %v1510, %v1543
        %v1576 = vadd.f32 %v1511, %v1544
        %v1577 = vadd.f32 %v1512, %v1545
        %v1578 = vmul.f32 %v1576, %v577
        %v1579 = vmul.f32 %v1577, %v578
        %v1580 = vmul.f32 %v1546, %v579
        %v1581 = vmul.f32 %v1547, %v580
        %v1582 = vmul.f32 %v1548, %v581
        %v1583 = vmul.f32 %v1549, %v582
        %v1584 = vmul.f32 %v1550, %v583
        %v1585 = vmul.f32 %v1551, %v584
        %v1586 = vmul.f32 %v1552, %v585
        %v1587 = vmul.f32 %v1553, %v586
        %v1588 = vmul.f32 %v1554, %v587
        %v1589 = vmul.f32 %v1555, %v588
        %v1590 = vmul.f32 %v1556, %v589
        %v1591 = vmul.f32 %v1557, %v590
        %v1592 = vmul.f32 %v1558, %v591
        %v1593 = vmul.f32 %v1559, %v592
        %v1594 = vmul.f32 %v1560, %v593
        %v1595 = vmul.f32 %v1561, %v594
        %v1596 = vmul.f32 %v1562, %v595
        %v1597 = vmul.f32 %v1563, %v596
        %v1598 = vmul.f32 %v1564, %v597
        %v1599 = vmul.f32 %v1565, %v598
        %v1600 = vmul.f32 %v1566, %v599
        %v1601 = vmul.f32 %v1567, %v600
        %v1602 = vmul.f32 %v1568, %v601
        %v1603 = vmul.f32 %v1569, %v602
        %v1604 = vmul.f32 %v1570, %v603
        %v1605 = vmul.f32 %v1571, %v604
        %v1606 = vmul.f32 %v1572, %v605
        %v1607 = vmul.f32 %v1573, %v606
        %v1608 = vmul.f32 %v1574, %v607
        %v1609 = vmul.f32 %v1575, %v608
        %v1610 = vadd.f32 %v1383, %v1578
        %v1611 = vadd.f32 %v1384, %v1579
        %v1612 = vadd.f32 %v1385, %v1580
        %v1613 = vadd.f32 %v1386, %v1581
        %v1614 = vadd.f32 %v1387, %v1582
        %v1615 = vadd.f32 %v1388, %v1583
        %v1616 = vadd.f32 %v1389, %v1584
        %v1617 = vadd.f32 %v1390, %v1585
        %v1618 = vadd.f32 %v1391, %v1586
        %v1619 = vadd.f32 %v1392, %v1587
        %v1620 = vadd.f32 %v1393, %v1588
        %v1621 = vadd.f32 %v1394, %v1589
        %v1622 = vadd.f32 %v1395, %v1590
        %v1623 = vadd.f32 %v1396, %v1591
        %v1624 = vadd.f32 %v1397, %v1592
        %v1625 = vadd.f32 %v1398, %v1593
        %v1626 = vadd.f32 %v1399, %v1594
        %v1627 = vadd.f32 %v1400, %v1595
        %v1628 = vadd.f32 %v1401, %v1596
        %v1629 = vadd.f32 %v1402, %v1597
        %v1630 = vadd.f32 %v1403, %v1598
        %v1631 = vadd.f32 %v1404, %v1599
        %v1632 = vadd.f32 %v1405, %v1600
        %v1633 = vadd.f32 %v1406, %v1601
        %v1634 = vadd.f32 %v1407, %v1602
        %v1635 = vadd.f32 %v1408, %v1603
        %v1636 = vadd.f32 %v1409, %v1604
        %v1637 = vadd.f32 %v1410, %v1605
        %v1638 = vadd.f32 %v1411, %v1606
        %v1639 = vadd.f32 %v1412, %v1607
        %v1640 = vadd.f32 %v1413, %v1608
        %v1641 = vadd.f32 %v1414, %v1609
        %v1642 = vperm.slane %v254, 6
        %v1643 = vmul.f32 %v930, %v1642
        %v1644 = vmul.f32 %v931, %v1642
        %v1645 = vmul.f32 %v932, %v1642
        %v1646 = vmul.f32 %v933, %v1642
        %v1647 = vmul.f32 %v934, %v1642
        %v1648 = vmul.f32 %v935, %v1642
        %v1649 = vmul.f32 %v936, %v1642
        %v1650 = vmul.f32 %v937, %v1642
        %v1651 = vmul.f32 %v938, %v1642
        %v1652 = vmul.f32 %v939, %v1642
        %v1653 = vmul.f32 %v940, %v1642
        %v1654 = vmul.f32 %v941, %v1642
        %v1655 = vmul.f32 %v942, %v1642
        %v1656 = vmul.f32 %v943, %v1642
        %v1657 = vmul.f32 %v944, %v1642
        %v1658 = vmul.f32 %v945, %v1642
        %v1659 = vmul.f32 %v946, %v1642
        %v1660 = vmul.f32 %v947, %v1642
        %v1661 = vmul.f32 %v948, %v1642
        %v1662 = vmul.f32 %v949, %v1642
        %v1663 = vmul.f32 %v950, %v1642
        %v1664 = vmul.f32 %v951, %v1642
        %v1665 = vmul.f32 %v952, %v1642
        %v1666 = vmul.f32 %v953, %v1642
        %v1667 = vmul.f32 %v954, %v1642
        %v1668 = vmul.f32 %v955, %v1642
        %v1669 = vmul.f32 %v956, %v1642
        %v1670 = vmul.f32 %v957, %v1642
        %v1671 = vmul.f32 %v958, %v1642
        %v1672 = vmul.f32 %v959, %v1642
        %v1673 = vmul.f32 %v960, %v1642
        %v1674 = vmul.f32 %v961, %v1642
        %v1675 = vperm.slane %v254, 7
        %v1676 = vmul.f32 %v222, %v1675
        %v1677 = vmul.f32 %v223, %v1675
        %v1678 = vmul.f32 %v224, %v1675
        %v1679 = vmul.f32 %v225, %v1675
        %v1680 = vmul.f32 %v226, %v1675
        %v1681 = vmul.f32 %v227, %v1675
        %v1682 = vmul.f32 %v228, %v1675
        %v1683 = vmul.f32 %v229, %v1675
        %v1684 = vmul.f32 %v230, %v1675
        %v1685 = vmul.f32 %v231, %v1675
        %v1686 = vmul.f32 %v232, %v1675
        %v1687 = vmul.f32 %v233, %v1675
        %v1688 = vmul.f32 %v234, %v1675
        %v1689 = vmul.f32 %v235, %v1675
        %v1690 = vmul.f32 %v236, %v1675
        %v1691 = vmul.f32 %v237, %v1675
        %v1692 = vmul.f32 %v238, %v1675
        %v1693 = vmul.f32 %v239, %v1675
        %v1694 = vmul.f32 %v240, %v1675
        %v1695 = vmul.f32 %v241, %v1675
        %v1696 = vmul.f32 %v242, %v1675
        %v1697 = vmul.f32 %v243, %v1675
        %v1698 = vmul.f32 %v244, %v1675
        %v1699 = vmul.f32 %v245, %v1675
        %v1700 = vmul.f32 %v246, %v1675
        %v1701 = vmul.f32 %v247, %v1675
        %v1702 = vmul.f32 %v248, %v1675
        %v1703 = vmul.f32 %v249, %v1675
        %v1704 = vmul.f32 %v250, %v1675
        %v1705 = vmul.f32 %v251, %v1675
        %v1706 = vmul.f32 %v252, %v1675
        %v1707 = vmul.f32 %v253, %v1675
        %v1708 = vadd.f32 %v1643, %v1676
        %v1709 = vadd.f32 %v1644, %v1677
        %v1710 = vadd.f32 %v1645, %v1678
        %v1711 = vadd.f32 %v1646, %v1679
        %v1712 = vadd.f32 %v1647, %v1680
        %v1713 = vadd.f32 %v1648, %v1681
        %v1714 = vadd.f32 %v1649, %v1682
        %v1715 = vadd.f32 %v1650, %v1683
        %v1716 = vadd.f32 %v1651, %v1684
        %v1717 = vadd.f32 %v1652, %v1685
        %v1718 = vadd.f32 %v1653, %v1686
        %v1719 = vadd.f32 %v1654, %v1687
        %v1720 = vadd.f32 %v1655, %v1688
        %v1721 = vadd.f32 %v1656, %v1689
        %v1722 = vadd.f32 %v1657, %v1690
        %v1723 = vadd.f32 %v1658, %v1691
        %v1724 = vadd.f32 %v1659, %v1692
        %v1725 = vadd.f32 %v1660, %v1693
        %v1726 = vadd.f32 %v1661, %v1694
        %v1727 = vadd.f32 %v1662, %v1695
        %v1728 = vadd.f32 %v1663, %v1696
        %v1729 = vadd.f32 %v1664, %v1697
        %v1730 = vadd.f32 %v1665, %v1698
        %v1731 = vadd.f32 %v1666, %v1699
        %v1732 = vadd.f32 %v1667, %v1700
        %v1733 = vadd.f32 %v1668, %v1701
        %v1734 = vadd.f32 %v1669, %v1702
        %v1735 = vadd.f32 %v1670, %v1703
        %v1736 = vadd.f32 %v1671, %v1704
        %v1737 = vadd.f32 %v1672, %v1705
        %v1738 = vadd.f32 %v1673, %v1706
        %v1739 = vadd.f32 %v1674, %v1707
        %v1740 = vperm.slane %v255, 0
        %v1741 = vmul.f32 %v1187, %v1740
        %v1742 = vmul.f32 %v1188, %v1740
        %v1743 = vmul.f32 %v1189, %v1740
        %v1744 = vmul.f32 %v1190, %v1740
        %v1745 = vmul.f32 %v1191, %v1740
        %v1746 = vmul.f32 %v1192, %v1740
        %v1747 = vmul.f32 %v1193, %v1740
        %v1748 = vmul.f32 %v1194, %v1740
        %v1749 = vmul.f32 %v1195, %v1740
        %v1750 = vmul.f32 %v1196, %v1740
        %v1751 = vmul.f32 %v1197, %v1740
        %v1752 = vmul.f32 %v1198, %v1740
        %v1753 = vmul.f32 %v1199, %v1740
        %v1754 = vmul.f32 %v1200, %v1740
        %v1755 = vmul.f32 %v1201, %v1740
        %v1756 = vmul.f32 %v1202, %v1740
        %v1757 = vmul.f32 %v1203, %v1740
        %v1758 = vmul.f32 %v1204, %v1740
        %v1759 = vmul.f32 %v1205, %v1740
        %v1760 = vmul.f32 %v1206, %v1740
        %v1761 = vmul.f32 %v1207, %v1740
        %v1762 = vmul.f32 %v1208, %v1740
        %v1763 = vmul.f32 %v1209, %v1740
        %v1764 = vmul.f32 %v1210, %v1740
        %v1765 = vmul.f32 %v1211, %v1740
        %v1766 = vmul.f32 %v1212, %v1740
        %v1767 = vmul.f32 %v1213, %v1740
        %v1768 = vmul.f32 %v1214, %v1740
        %v1769 = vmul.f32 %v1215, %v1740
        %v1770 = vmul.f32 %v1216, %v1740
        %v1771 = vmul.f32 %v1217, %v1740
        %v1772 = vmul.f32 %v1218, %v1740
        %v1773 = vadd.f32 %v1708, %v1741
        %v1774 = vadd.f32 %v1709, %v1742
        %v1775 = vadd.f32 %v1710, %v1743
        %v1776 = vadd.f32 %v1711, %v1744
        %v1777 = vadd.f32 %v1712, %v1745
        %v1778 = vadd.f32 %v1713, %v1746
        %v1779 = vadd.f32 %v1714, %v1747
        %v1780 = vadd.f32 %v1715, %v1748
        %v1781 = vadd.f32 %v1716, %v1749
        %v1782 = vadd.f32 %v1717, %v1750
        %v1783 = vadd.f32 %v1718, %v1751
        %v1784 = vadd.f32 %v1719, %v1752
        %v1785 = vadd.f32 %v1720, %v1753
        %v1786 = vadd.f32 %v1721, %v1754
        %v1787 = vadd.f32 %v1722, %v1755
        %v1788 = vadd.f32 %v1723, %v1756
        %v1789 = vadd.f32 %v1724, %v1757
        %v1790 = vadd.f32 %v1725, %v1758
        %v1791 = vadd.f32 %v1726, %v1759
        %v1792 = vadd.f32 %v1727, %v1760
        %v1793 = vadd.f32 %v1728, %v1761
        %v1794 = vadd.f32 %v1729, %v1762
        %v1795 = vadd.f32 %v1730, %v1763
        %v1796 = vadd.f32 %v1731, %v1764
        %v1797 = vadd.f32 %v1732, %v1765
        %v1798 = vadd.f32 %v1733, %v1766
        %v1799 = vadd.f32 %v1734, %v1767
        %v1800 = vadd.f32 %v1735, %v1768
        %v1801 = vadd.f32 %v1736, %v1769
        %v1802 = vadd.f32 %v1737, %v1770
        %v1803 = vadd.f32 %v1738, %v1771
        %v1804 = vadd.f32 %v1739, %v1772
        %v1805 = vmul.f32 %v1775, %v673
        %v1806 = vmul.f32 %v1776, %v674
        %v1807 = vmul.f32 %v1777, %v675
        %v1808 = vmul.f32 %v1778, %v676
        %v1809 = vmul.f32 %v1779, %v677
        %v1810 = vmul.f32 %v1780, %v678
        %v1811 = vmul.f32 %v1781, %v679
        %v1812 = vmul.f32 %v1782, %v680
        %v1813 = vmul.f32 %v1783, %v681
        %v1814 = vmul.f32 %v1784, %v682
        %v1815 = vmul.f32 %v1785, %v683
        %v1816 = vmul.f32 %v1786, %v684
        %v1817 = vmul.f32 %v1787, %v685
        %v1818 = vmul.f32 %v1788, %v686
        %v1819 = vmul.f32 %v1789, %v687
        %v1820 = vmul.f32 %v1790, %v688
        %v1821 = vmul.f32 %v1791, %v689
        %v1822 = vmul.f32 %v1792, %v690
        %v1823 = vmul.f32 %v1793, %v691
        %v1824 = vmul.f32 %v1794, %v692
        %v1825 = vmul.f32 %v1795, %v693
        %v1826 = vmul.f32 %v1796, %v694
        %v1827 = vmul.f32 %v1797, %v695
        %v1828 = vmul.f32 %v1798, %v696
        %v1829 = vmul.f32 %v1799, %v697
        %v1830 = vmul.f32 %v1800, %v698
        %v1831 = vmul.f32 %v1801, %v699
        %v1832 = vmul.f32 %v1802, %v700
        %v1833 = vmul.f32 %v1803, %v701
        %v1834 = vmul.f32 %v1804, %v702
        %v1835 = vmul.f32 %v1773, %v703
        %v1836 = vmul.f32 %v1774, %v704
        %v1837 = vadd.f32 %v1610, %v1805
        %v1838 = vadd.f32 %v1611, %v1806
        %v1839 = vadd.f32 %v1612, %v1807
        %v1840 = vadd.f32 %v1613, %v1808
        %v1841 = vadd.f32 %v1614, %v1809
        %v1842 = vadd.f32 %v1615, %v1810
        %v1843 = vadd.f32 %v1616, %v1811
        %v1844 = vadd.f32 %v1617, %v1812
        %v1845 = vadd.f32 %v1618, %v1813
        %v1846 = vadd.f32 %v1619, %v1814
        %v1847 = vadd.f32 %v1620, %v1815
        %v1848 = vadd.f32 %v1621, %v1816
        %v1849 = vadd.f32 %v1622, %v1817
        %v1850 = vadd.f32 %v1623, %v1818
        %v1851 = vadd.f32 %v1624, %v1819
        %v1852 = vadd.f32 %v1625, %v1820
        %v1853 = vadd.f32 %v1626, %v1821
        %v1854 = vadd.f32 %v1627, %v1822
        %v1855 = vadd.f32 %v1628, %v1823
        %v1856 = vadd.f32 %v1629, %v1824
        %v1857 = vadd.f32 %v1630, %v1825
        %v1858 = vadd.f32 %v1631, %v1826
        %v1859 = vadd.f32 %v1632, %v1827
        %v1860 = vadd.f32 %v1633, %v1828
        %v1861 = vadd.f32 %v1634, %v1829
        %v1862 = vadd.f32 %v1635, %v1830
        %v1863 = vadd.f32 %v1636, %v1831
        %v1864 = vadd.f32 %v1637, %v1832
        %v1865 = vadd.f32 %v1638, %v1833
        %v1866 = vadd.f32 %v1639, %v1834
        %v1867 = vadd.f32 %v1640, %v1835
        %v1868 = vadd.f32 %v1641, %v1836
        %1869 = vst [vmem:[%s211] sm:$0xff] %v1837
        %1870 = vst [vmem:[%s211 + $0x8] sm:$0xff] %v1838
        %1871 = vst [vmem:[%s211 + $0x10] sm:$0xff] %v1839
        %1872 = vst [vmem:[%s211 + $0x18] sm:$0xff] %v1840
        %1873 = vst [vmem:[%s211 + $0x20] sm:$0xff] %v1841
        %1874 = vst [vmem:[%s211 + $0x28] sm:$0xff] %v1842
        %1875 = vst [vmem:[%s211 + $0x30] sm:$0xff] %v1843
        %1876 = vst [vmem:[%s211 + $0x38] sm:$0xff] %v1844
        %1877 = vst [vmem:[%s211 + $0x40] sm:$0xff] %v1845
        %1878 = vst [vmem:[%s211 + $0x48] sm:$0xff] %v1846
        %1879 = vst [vmem:[%s211 + $0x50] sm:$0xff] %v1847
        %1880 = vst [vmem:[%s211 + $0x58] sm:$0xff] %v1848
        %1881 = vst [vmem:[%s211 + $0x60] sm:$0xff] %v1849
        %1882 = vst [vmem:[%s211 + $0x68] sm:$0xff] %v1850
        %1883 = vst [vmem:[%s211 + $0x70] sm:$0xff] %v1851
        %1884 = vst [vmem:[%s211 + $0x78] sm:$0xff] %v1852
        %1885 = vst [vmem:[%s211 + $0x80] sm:$0xff] %v1853
        %1886 = vst [vmem:[%s211 + $0x88] sm:$0xff] %v1854
        %1887 = vst [vmem:[%s211 + $0x90] sm:$0xff] %v1855
        %1888 = vst [vmem:[%s211 + $0x98] sm:$0xff] %v1856
        %1889 = vst [vmem:[%s211 + $0xa0] sm:$0xff] %v1857
        %1890 = vst [vmem:[%s211 + $0xa8] sm:$0xff] %v1858
        %1891 = vst [vmem:[%s211 + $0xb0] sm:$0xff] %v1859
        %1892 = vst [vmem:[%s211 + $0xb8] sm:$0xff] %v1860
        %1893 = vst [vmem:[%s211 + $0xc0] sm:$0xff] %v1861
        %1894 = vst [vmem:[%s211 + $0xc8] sm:$0xff] %v1862
        %1895 = vst [vmem:[%s211 + $0xd0] sm:$0xff] %v1863
        %1896 = vst [vmem:[%s211 + $0xd8] sm:$0xff] %v1864
        %1897 = vst [vmem:[%s211 + $0xe0] sm:$0xff] %v1865
        %1898 = vst [vmem:[%s211 + $0xe8] sm:$0xff] %v1866
        %1899 = vst [vmem:[%s211 + $0xf0] sm:$0xff] %v1867
        %1900 = vst [vmem:[%s211 + $0xf8] sm:$0xff] %v1868
        %s1901 = sand.u32 %s109, 1
        %s1902 = sand.u32 %s109, 1
        %s1903 = smul.addr %s1902, 256
        %s1904 = scalar_lea.vmem [#allocation4], %s1903
        // Predicated region
        $region37: #{dwconv_forward.3} parent=31 // pred_check
          %p1905 = pneg %p119
        $region38: #{dwconv_forward.3} parent=31 // pred_check_branch
          %1907 = sbr.rel (%p1905) target = $region40
        $region39: #{dwconv_forward.3} parent=31 // pred_region
          %s1908 = smul.u32 32, %s22
          %s1909 = ssub.s32 42, %s1908
          %p1910 = scmp.lt.s32.totalorder %s1909, 32
          %s1911 = scalar_select %p1910, %s1909, 32
          %s1912 = smul.u32 8, %s1911
          %p1913 = scmp.ne.s32.totalorder 0, %s1912
          %s1914 = smul.addr %s21, 42
          %s1915 = sadd.s32 %s1908, %s1914
          %s1916 = smul.addr %s1915, 8
          %s1917 = scalar_lea.vmem %s3, %s1916
          // Predicated region
          $region41: #{dwconv_forward.3} parent=39 // pred_check
            %p1918 = pneg %p1913
          $region42: #{dwconv_forward.3} parent=39 // pred_check_branch
            %1920 = sbr.rel (%p1918) target = $region44
          $region43: #{dwconv_forward.3} parent=39 // pred_region
            // Predicated region
            $region45: #{dwconv_forward.3} parent=43 // pred_check
              _
            $region46: #{dwconv_forward.3} parent=43 // pred_check_branch
              %1922 = sbr.rel (0) target = $region48
            $region47: #{dwconv_forward.3} parent=43 // pred_region
              // Predicated region
              $region67: #{dwconv_forward.3} parent=47 // pred_check
                _
              $region68: #{dwconv_forward.3} parent=47 // pred_check_branch
                %2034 = sbr.rel (0) target = $region70
              $region69: #{dwconv_forward.3} parent=47 // pred_region
                %s2035 = sshrl.u32 %s1911, 5
                // While loop
                $region71: #{dwconv_forward.3} parent=69 // loop_pre_header
                  _
                $region72: #{dwconv_forward.3} parent=69 // loop_header
                  %s2037 = sphi 0, %s2039
                  %p2038 = scmp.ge.s32.totalorder %s2037, %s2035
                  %s2042 = sphi 0, %s2111
                  %s2043 = sphi %s1904, %s2114
                  %s2044 = sphi %s1917, %s2115
                $region73: #{dwconv_forward.3} parent=69 // loop_header_branch
                  %2041 = sbr.rel (%p2038) target = $region77
                $region74: #{dwconv_forward.3} parent=69 // loop_body
                  %v2045 = vld [vmem:[%s2043] sm:$0xff]
                  %2046 = vst [vmem:[%s2044] sm:$0xff] %v2045
                  %v2047 = vld [vmem:[%s2043 + $0x8] sm:$0xff]
                  %2048 = vst [vmem:[%s2044 + $0x8] sm:$0xff] %v2047
                  %v2049 = vld [vmem:[%s2043 + $0x10] sm:$0xff]
                  %2050 = vst [vmem:[%s2044 + $0x10] sm:$0xff] %v2049
                  %v2051 = vld [vmem:[%s2043 + $0x18] sm:$0xff]
                  %2052 = vst [vmem:[%s2044 + $0x18] sm:$0xff] %v2051
                  %v2053 = vld [vmem:[%s2043 + $0x20] sm:$0xff]
                  %2054 = vst [vmem:[%s2044 + $0x20] sm:$0xff] %v2053
                  %v2055 = vld [vmem:[%s2043 + $0x28] sm:$0xff]
                  %2056 = vst [vmem:[%s2044 + $0x28] sm:$0xff] %v2055
                  %v2057 = vld [vmem:[%s2043 + $0x30] sm:$0xff]
                  %2058 = vst [vmem:[%s2044 + $0x30] sm:$0xff] %v2057
                  %v2059 = vld [vmem:[%s2043 + $0x38] sm:$0xff]
                  %2060 = vst [vmem:[%s2044 + $0x38] sm:$0xff] %v2059
                  %v2061 = vld [vmem:[%s2043 + $0x40] sm:$0xff]
                  %2062 = vst [vmem:[%s2044 + $0x40] sm:$0xff] %v2061
                  %v2063 = vld [vmem:[%s2043 + $0x48] sm:$0xff]
                  %2064 = vst [vmem:[%s2044 + $0x48] sm:$0xff] %v2063
                  %v2065 = vld [vmem:[%s2043 + $0x50] sm:$0xff]
                  %2066 = vst [vmem:[%s2044 + $0x50] sm:$0xff] %v2065
                  %v2067 = vld [vmem:[%s2043 + $0x58] sm:$0xff]
                  %2068 = vst [vmem:[%s2044 + $0x58] sm:$0xff] %v2067
                  %v2069 = vld [vmem:[%s2043 + $0x60] sm:$0xff]
                  %2070 = vst [vmem:[%s2044 + $0x60] sm:$0xff] %v2069
                  %v2071 = vld [vmem:[%s2043 + $0x68] sm:$0xff]
                  %2072 = vst [vmem:[%s2044 + $0x68] sm:$0xff] %v2071
                  %v2073 = vld [vmem:[%s2043 + $0x70] sm:$0xff]
                  %2074 = vst [vmem:[%s2044 + $0x70] sm:$0xff] %v2073
                  %v2075 = vld [vmem:[%s2043 + $0x78] sm:$0xff]
                  %2076 = vst [vmem:[%s2044 + $0x78] sm:$0xff] %v2075
                  %v2077 = vld [vmem:[%s2043 + $0x80] sm:$0xff]
                  %2078 = vst [vmem:[%s2044 + $0x80] sm:$0xff] %v2077
                  %v2079 = vld [vmem:[%s2043 + $0x88] sm:$0xff]
                  %2080 = vst [vmem:[%s2044 + $0x88] sm:$0xff] %v2079
                  %v2081 = vld [vmem:[%s2043 + $0x90] sm:$0xff]
                  %2082 = vst [vmem:[%s2044 + $0x90] sm:$0xff] %v2081
                  %v2083 = vld [vmem:[%s2043 + $0x98] sm:$0xff]
                  %2084 = vst [vmem:[%s2044 + $0x98] sm:$0xff] %v2083
                  %v2085 = vld [vmem:[%s2043 + $0xa0] sm:$0xff]
                  %2086 = vst [vmem:[%s2044 + $0xa0] sm:$0xff] %v2085
                  %v2087 = vld [vmem:[%s2043 + $0xa8] sm:$0xff]
                  %2088 = vst [vmem:[%s2044 + $0xa8] sm:$0xff] %v2087
                  %v2089 = vld [vmem:[%s2043 + $0xb0] sm:$0xff]
                  %2090 = vst [vmem:[%s2044 + $0xb0] sm:$0xff] %v2089
                  %v2091 = vld [vmem:[%s2043 + $0xb8] sm:$0xff]
                  %2092 = vst [vmem:[%s2044 + $0xb8] sm:$0xff] %v2091
                  %v2093 = vld [vmem:[%s2043 + $0xc0] sm:$0xff]
                  %2094 = vst [vmem:[%s2044 + $0xc0] sm:$0xff] %v2093
                  %v2095 = vld [vmem:[%s2043 + $0xc8] sm:$0xff]
                  %2096 = vst [vmem:[%s2044 + $0xc8] sm:$0xff] %v2095
                  %v2097 = vld [vmem:[%s2043 + $0xd0] sm:$0xff]
                  %2098 = vst [vmem:[%s2044 + $0xd0] sm:$0xff] %v2097
                  %v2099 = vld [vmem:[%s2043 + $0xd8] sm:$0xff]
                  %2100 = vst [vmem:[%s2044 + $0xd8] sm:$0xff] %v2099
                  %v2101 = vld [vmem:[%s2043 + $0xe0] sm:$0xff]
                  %2102 = vst [vmem:[%s2044 + $0xe0] sm:$0xff] %v2101
                  %v2103 = vld [vmem:[%s2043 + $0xe8] sm:$0xff]
                  %2104 = vst [vmem:[%s2044 + $0xe8] sm:$0xff] %v2103
                  %v2105 = vld [vmem:[%s2043 + $0xf0] sm:$0xff]
                  %2106 = vst [vmem:[%s2044 + $0xf0] sm:$0xff] %v2105
                  %v2107 = vld [vmem:[%s2043 + $0xf8] sm:$0xff]
                  %2108 = vst [vmem:[%s2044 + $0xf8] sm:$0xff] %v2107
                  %s2109 = sadd.s32 1, %s2042
                  %p2110 = scmp.ge.s32.totalorder %s2109, %s2035
                  %s2111 = scalar_select %p2110, 0, %s2109
                  %s2112 = smul.u32 %s2111, 256
                  %s2113 = smul.u32 %s2111, 256
                  %s2114 = scalar_lea.vmem %s1904, %s2112 [#allocation4]
                  %s2115 = scalar_lea.vmem %s1917, %s2113
                $region75: #{dwconv_forward.3} parent=69 // loop_footer
                  %s2039 = sadd.s32 %s2037, 1
                $region76: #{dwconv_forward.3} parent=69 // loop_footer_branch
                  %2036 = sbr.rel target = $region72
                $region77: #{dwconv_forward.3} parent=69 // loop_exit
                  _
                %s2116 = sshrl.u32 %s1911, 5
                %s2117 = sand.u32 %s1911, 31
                %s2118 = smul.u32 %s2116, 32
                %s2119 = smul.u32 8, %s2118
                %s2120 = scalar_lea.vmem %s1904, %s2119 [#allocation4]
                %s2121 = smul.u32 8, %s2118
                %s2122 = scalar_lea.vmem %s1917, %s2121
                // While loop
                $region78: #{dwconv_forward.3} parent=69 // loop_pre_header
                  _
                $region79: #{dwconv_forward.3} parent=69 // loop_header
                  %s2124 = sphi 0, %s2126
                  %p2125 = scmp.ge.s32.totalorder %s2124, %s2117
                  %s2129 = sphi 0, %s2136
                  %s2130 = sphi %s2120, %s2139
                  %s2131 = sphi %s2122, %s2140
                $region80: #{dwconv_forward.3} parent=69 // loop_header_branch
                  %2128 = sbr.rel (%p2125) target = $region84
                $region81: #{dwconv_forward.3} parent=69 // loop_body
                  %v2132 = vld [vmem:[%s2130] sm:$0xff]
                  %2133 = vst [vmem:[%s2131] sm:$0xff] %v2132
                  %s2134 = sadd.s32 1, %s2129
                  %p2135 = scmp.ge.s32.totalorder %s2134, %s2117
                  %s2136 = scalar_select %p2135, 0, %s2134
                  %s2137 = smul.u32 %s2136, 8
                  %s2138 = smul.u32 %s2136, 8
                  %s2139 = scalar_lea.vmem %s2120, %s2137 [#allocation4]
                  %s2140 = scalar_lea.vmem %s2122, %s2138
                $region82: #{dwconv_forward.3} parent=69 // loop_footer
                  %s2126 = sadd.s32 %s2124, 1
                $region83: #{dwconv_forward.3} parent=69 // loop_footer_branch
                  %2123 = sbr.rel target = $region79
                $region84: #{dwconv_forward.3} parent=69 // loop_exit
                  _
              $region70: #{dwconv_forward.3} parent=47 // pred_fallthru
                _
              // Predicated region
              $region85: #{dwconv_forward.3} parent=47 // pred_check
                _
              $region86: #{dwconv_forward.3} parent=47 // pred_check_branch
                %2142 = sbr.rel target = $region88
              $region87: #{dwconv_forward.3} parent=47 // pred_region
                _
              $region88: #{dwconv_forward.3} parent=47 // pred_fallthru
                _
            $region48: #{dwconv_forward.3} parent=43 // pred_fallthru
              _
            // Predicated region
            $region49: #{dwconv_forward.3} parent=43 // pred_check
              _
            $region50: #{dwconv_forward.3} parent=43 // pred_check_branch
              %1924 = sbr.rel target = $region52
            $region51: #{dwconv_forward.3} parent=43 // pred_region
              %s1926 = ssub.s32 256, 1
              %s1927 = sshrl.u32 %s1911, 5
              // While loop
              $region53: #{dwconv_forward.3} parent=51 // loop_pre_header
                _
              $region54: #{dwconv_forward.3} parent=51 // loop_header
                %s1929 = sphi 0, %s1931
                %p1930 = scmp.ge.s32.totalorder %s1929, %s1927
                %s1934 = sphi 0, %s2003
                %s1935 = sphi %s1904, %s2006
                %s1936 = sphi %s1917, %s2007
              $region55: #{dwconv_forward.3} parent=51 // loop_header_branch
                %1933 = sbr.rel (%p1930) target = $region59
              $region56: #{dwconv_forward.3} parent=51 // loop_body
                %v1937 = vld [vmem:[%s1935] sm:%s1926]
                %1938 = vst [vmem:[%s1936] sm:%s1926] %v1937
                %v1939 = vld [vmem:[%s1935 + $0x8] sm:%s1926]
                %1940 = vst [vmem:[%s1936 + $0x8] sm:%s1926] %v1939
                %v1941 = vld [vmem:[%s1935 + $0x10] sm:%s1926]
                %1942 = vst [vmem:[%s1936 + $0x10] sm:%s1926] %v1941
                %v1943 = vld [vmem:[%s1935 + $0x18] sm:%s1926]
                %1944 = vst [vmem:[%s1936 + $0x18] sm:%s1926] %v1943
                %v1945 = vld [vmem:[%s1935 + $0x20] sm:%s1926]
                %1946 = vst [vmem:[%s1936 + $0x20] sm:%s1926] %v1945
                %v1947 = vld [vmem:[%s1935 + $0x28] sm:%s1926]
                %1948 = vst [vmem:[%s1936 + $0x28] sm:%s1926] %v1947
                %v1949 = vld [vmem:[%s1935 + $0x30] sm:%s1926]
                %1950 = vst [vmem:[%s1936 + $0x30] sm:%s1926] %v1949
                %v1951 = vld [vmem:[%s1935 + $0x38] sm:%s1926]
                %1952 = vst [vmem:[%s1936 + $0x38] sm:%s1926] %v1951
                %v1953 = vld [vmem:[%s1935 + $0x40] sm:%s1926]
                %1954 = vst [vmem:[%s1936 + $0x40] sm:%s1926] %v1953
                %v1955 = vld [vmem:[%s1935 + $0x48] sm:%s1926]
                %1956 = vst [vmem:[%s1936 + $0x48] sm:%s1926] %v1955
                %v1957 = vld [vmem:[%s1935 + $0x50] sm:%s1926]
                %1958 = vst [vmem:[%s1936 + $0x50] sm:%s1926] %v1957
                %v1959 = vld [vmem:[%s1935 + $0x58] sm:%s1926]
                %1960 = vst [vmem:[%s1936 + $0x58] sm:%s1926] %v1959
                %v1961 = vld [vmem:[%s1935 + $0x60] sm:%s1926]
                %1962 = vst [vmem:[%s1936 + $0x60] sm:%s1926] %v1961
                %v1963 = vld [vmem:[%s1935 + $0x68] sm:%s1926]
                %1964 = vst [vmem:[%s1936 + $0x68] sm:%s1926] %v1963
                %v1965 = vld [vmem:[%s1935 + $0x70] sm:%s1926]
                %1966 = vst [vmem:[%s1936 + $0x70] sm:%s1926] %v1965
                %v1967 = vld [vmem:[%s1935 + $0x78] sm:%s1926]
                %1968 = vst [vmem:[%s1936 + $0x78] sm:%s1926] %v1967
                %v1969 = vld [vmem:[%s1935 + $0x80] sm:%s1926]
                %1970 = vst [vmem:[%s1936 + $0x80] sm:%s1926] %v1969
                %v1971 = vld [vmem:[%s1935 + $0x88] sm:%s1926]
                %1972 = vst [vmem:[%s1936 + $0x88] sm:%s1926] %v1971
                %v1973 = vld [vmem:[%s1935 + $0x90] sm:%s1926]
                %1974 = vst [vmem:[%s1936 + $0x90] sm:%s1926] %v1973
                %v1975 = vld [vmem:[%s1935 + $0x98] sm:%s1926]
                %1976 = vst [vmem:[%s1936 + $0x98] sm:%s1926] %v1975
                %v1977 = vld [vmem:[%s1935 + $0xa0] sm:%s1926]
                %1978 = vst [vmem:[%s1936 + $0xa0] sm:%s1926] %v1977
                %v1979 = vld [vmem:[%s1935 + $0xa8] sm:%s1926]
                %1980 = vst [vmem:[%s1936 + $0xa8] sm:%s1926] %v1979
                %v1981 = vld [vmem:[%s1935 + $0xb0] sm:%s1926]
                %1982 = vst [vmem:[%s1936 + $0xb0] sm:%s1926] %v1981
                %v1983 = vld [vmem:[%s1935 + $0xb8] sm:%s1926]
                %1984 = vst [vmem:[%s1936 + $0xb8] sm:%s1926] %v1983
                %v1985 = vld [vmem:[%s1935 + $0xc0] sm:%s1926]
                %1986 = vst [vmem:[%s1936 + $0xc0] sm:%s1926] %v1985
                %v1987 = vld [vmem:[%s1935 + $0xc8] sm:%s1926]
                %1988 = vst [vmem:[%s1936 + $0xc8] sm:%s1926] %v1987
                %v1989 = vld [vmem:[%s1935 + $0xd0] sm:%s1926]
                %1990 = vst [vmem:[%s1936 + $0xd0] sm:%s1926] %v1989
                %v1991 = vld [vmem:[%s1935 + $0xd8] sm:%s1926]
                %1992 = vst [vmem:[%s1936 + $0xd8] sm:%s1926] %v1991
                %v1993 = vld [vmem:[%s1935 + $0xe0] sm:%s1926]
                %1994 = vst [vmem:[%s1936 + $0xe0] sm:%s1926] %v1993
                %v1995 = vld [vmem:[%s1935 + $0xe8] sm:%s1926]
                %1996 = vst [vmem:[%s1936 + $0xe8] sm:%s1926] %v1995
                %v1997 = vld [vmem:[%s1935 + $0xf0] sm:%s1926]
                %1998 = vst [vmem:[%s1936 + $0xf0] sm:%s1926] %v1997
                %v1999 = vld [vmem:[%s1935 + $0xf8] sm:%s1926]
                %2000 = vst [vmem:[%s1936 + $0xf8] sm:%s1926] %v1999
                %s2001 = sadd.s32 1, %s1934
                %p2002 = scmp.ge.s32.totalorder %s2001, %s1927
                %s2003 = scalar_select %p2002, 0, %s2001
                %s2004 = smul.u32 %s2003, 256
                %s2005 = smul.u32 %s2003, 256
                %s2006 = scalar_lea.vmem %s1904, %s2004 [#allocation4]
                %s2007 = scalar_lea.vmem %s1917, %s2005
              $region57: #{dwconv_forward.3} parent=51 // loop_footer
                %s1931 = sadd.s32 %s1929, 1
              $region58: #{dwconv_forward.3} parent=51 // loop_footer_branch
                %1928 = sbr.rel target = $region54
              $region59: #{dwconv_forward.3} parent=51 // loop_exit
                _
              %s2008 = sshrl.u32 %s1911, 5
              %s2009 = sand.u32 %s1911, 31
              %s2010 = smul.u32 %s2008, 32
              %s2011 = smul.u32 8, %s2010
              %s2012 = scalar_lea.vmem %s1904, %s2011 [#allocation4]
              %s2013 = smul.u32 8, %s2010
              %s2014 = scalar_lea.vmem %s1917, %s2013
              // While loop
              $region60: #{dwconv_forward.3} parent=51 // loop_pre_header
                _
              $region61: #{dwconv_forward.3} parent=51 // loop_header
                %s2016 = sphi 0, %s2018
                %p2017 = scmp.ge.s32.totalorder %s2016, %s2009
                %s2021 = sphi 0, %s2028
                %s2022 = sphi %s2012, %s2031
                %s2023 = sphi %s2014, %s2032
              $region62: #{dwconv_forward.3} parent=51 // loop_header_branch
                %2020 = sbr.rel (%p2017) target = $region66
              $region63: #{dwconv_forward.3} parent=51 // loop_body
                %v2024 = vld [vmem:[%s2022] sm:%s1926]
                %2025 = vst [vmem:[%s2023] sm:%s1926] %v2024
                %s2026 = sadd.s32 1, %s2021
                %p2027 = scmp.ge.s32.totalorder %s2026, %s2009
                %s2028 = scalar_select %p2027, 0, %s2026
                %s2029 = smul.u32 %s2028, 8
                %s2030 = smul.u32 %s2028, 8
                %s2031 = scalar_lea.vmem %s2012, %s2029 [#allocation4]
                %s2032 = scalar_lea.vmem %s2014, %s2030
              $region64: #{dwconv_forward.3} parent=51 // loop_footer
                %s2018 = sadd.s32 %s2016, 1
              $region65: #{dwconv_forward.3} parent=51 // loop_footer_branch
                %2015 = sbr.rel target = $region61
              $region66: #{dwconv_forward.3} parent=51 // loop_exit
                _
            $region52: #{dwconv_forward.3} parent=43 // pred_fallthru
              _
          $region44: #{dwconv_forward.3} parent=39 // pred_fallthru
            _
          %2143 = vnop
        $region40: #{dwconv_forward.3} parent=31 // pred_fallthru
          _
      $region32: #{dwconv_forward.3} parent=5 // pred_fallthru
        _
      %p2144 = scmp.le.s32.totalorder 2, %s12
      // Predicated region
      $region89: #{dwconv_forward.3} parent=5 // pred_check
        %p2145 = pneg %p2144
      $region90: #{dwconv_forward.3} parent=5 // pred_check_branch
        %2147 = sbr.rel (%p2145) target = $region92
      $region91: #{dwconv_forward.3} parent=5 // pred_region
        %s2148 = ssub.s32 %s12, 2
        // Predicated region
        $region93: #{dwconv_forward.3} parent=91 // pred_check
          %p2149 = pneg %p125
        $region94: #{dwconv_forward.3} parent=91 // pred_check_branch
          %2151 = sbr.rel (%p2149) target = $region96
        $region95: #{dwconv_forward.3} parent=91 // pred_region
          %s2152 = sand.u32 %s110, 1
          %s2153 = sand.u32 %s110, 1
          %s2154 = smul.addr %s2153, 256
          %s2155 = scalar_lea.vmem [#allocation4], %s2154
        $region96: #{dwconv_forward.3} parent=91 // pred_fallthru
          _
      $region92: #{dwconv_forward.3} parent=5 // pred_fallthru
        _
    $region6: #{dwconv_forward.3} parent=1 // loop_footer
      %s16 = sadd.s32 1, %s12
    $region7: #{dwconv_forward.3} parent=1 // loop_footer_branch
      %11 = sbr.rel target = $region3
    $region8: #{dwconv_forward.3} parent=1 // loop_exit
      _
    %2156 = vsyncpa [#allocation3], 1
    %s2157 = scalar_lea.sflag [#allocation3], 1
    %2158 = vsyncpa %s2157, 1

</llo_original>
